<compile_context>
chip_gen: v6e
topology: v6e:2x2x1
jax: 0.10.0
libtpu: 0.0.40
codegen_flags: <defaults>
</compile_context>

<pallas_src>
import math

import jax
import jax.numpy as jnp
from jax.experimental import pallas as pl
from jax.experimental.pallas import tpu as pltpu


# =============================================================================
# Kernel 1: PixelNorm (over code dim) + Linear(code_dim -> 8192), one step.
# =============================================================================
def _pn_linear_kernel(x_ref, w_ref, b_ref, o_ref):
    x = x_ref[...].astype(jnp.float32)                                 # (B, D)
    inv = jax.lax.rsqrt(jnp.mean(x * x, axis=1, keepdims=True) + 1e-8)
    xn = (x * inv).astype(jnp.bfloat16)
    o_ref[...] = (jnp.dot(xn, w_ref[...], preferred_element_type=jnp.float32)
                  + b_ref[...])


def pixelnorm_linear(x, w_t_bf16, b):
    B, D = x.shape
    N = w_t_bf16.shape[1]
    return pl.pallas_call(
        _pn_linear_kernel,
        out_shape=jax.ShapeDtypeStruct((B, N), jnp.float32),
        grid=(1,),
        in_specs=[pl.BlockSpec((B, D), lambda i: (0, 0)),
                  pl.BlockSpec((D, N), lambda i: (0, 0)),
                  pl.BlockSpec((1, N), lambda i: (0, 0))],
        out_specs=pl.BlockSpec((B, N), lambda i: (0, 0)),
    )(x, w_t_bf16, b.reshape(1, N))


# =============================================================================
# Kernel 2: tiny 1x1 conv + tanh (only for the expand==0 init ToGrayConv path)
# TODO(synk): this tiny RGB store is lane-sparse (3 of 128 lanes) - negligible
# at (B*16, 3) so it was left simple.
# =============================================================================
def _conv1x1_tanh_kernel(x_ref, w_ref, b_ref, o_ref):
    y = (jnp.dot(x_ref[...], w_ref[...], preferred_element_type=jnp.float32)
         + b_ref[...])
    o_ref[...] = jnp.tanh(y)


def conv1x1_tanh_small(x2d_bf16, w_bf16, b):
    N, Cin = x2d_bf16.shape
    Cout = w_bf16.shape[1]
    return pl.pallas_call(
        _conv1x1_tanh_kernel,
        out_shape=jax.ShapeDtypeStruct((N, Cout), jnp.float32),
        grid=(1,),
        in_specs=[pl.BlockSpec((N, Cin), lambda i: (0, 0)),
                  pl.BlockSpec((Cin, Cout), lambda i: (0, 0)),
                  pl.BlockSpec((1, Cout), lambda i: (0, 0))],
        out_specs=pl.BlockSpec((N, Cout), lambda i: (0, 0)),
    )(x2d_bf16, w_bf16, b.reshape(1, Cout))


# =============================================================================
# Kernel 3: fused progressive stage
#   nearest-2x upsample + pad(1) + EqualConv3x3 + PixelNorm + LeakyReLU(0.2)
#   [+ ToGrayConv(1x1)+tanh  [+ alpha blend with prev ToGray of the upsample]]
#
# Output pixel (2i+pr, 2j+pc) only touches padded-source pixels
# (i+pr+a, j+pc+b), a,b in {0,1}, with parity-combined 3x3 weights, so each
# parity is one im2col matmul with K = 4*Cin over a (chunk_rows*W) tile.
# Results for the two column parities are interleaved and stored lane-dense
# as (rows, 2*W*C); the 2x upsampled NHWC map is a free reshape outside.
# =============================================================================
def _make_stage_kernel(H, W, Cin, Cout, Hc, fuse_tg, fuse_blend, alpha,
                       c_final, out_dtype):
    n_chunks = H // Hc

    def kernel(x_ref, w_ref, b_ref, *rest):
        o_ref = rest[-1]
        if fuse_tg:
            wtg_ref, btg_ref = rest[0], rest[1]
            if fuse_blend:
                wsk_ref, bsk_ref = rest[2], rest[3]

        for ck in range(n_chunks):
            r0 = ck * Hc

            if fuse_blend:
                # skip branch = to_gray[i-1](upsample): parity-independent,
                # equals the (un-padded) source pixel -> compute once / chunk.
                src = x_ref[0, 1 + r0:1 + r0 + Hc, 1:1 + W, :]
                src2d = src.reshape(Hc * W, Cin)
                skip = jnp.tanh(
                    jnp.dot(src2d, wsk_ref[...],
                            preferred_element_type=jnp.float32) + bsk_ref[...])

            for pr in range(2):                       # output row parity
                slabs = []
                for pc in range(2):                   # output column parity
                    # im2col over the 2x2 folded taps: K = 4*Cin
                    parts = []
                    for a in range(2):
                        for bb in range(2):
                            sl = x_ref[0,
                                       r0 + pr + a:r0 + pr + a + Hc,
                                       pc + bb:pc + bb + W, :]
                            parts.append(sl.reshape(Hc * W, Cin))
                    patch = jnp.concatenate(parts, axis=-1)   # (Mc, 4*Cin)
                    y = jnp.dot(patch, w_ref[pr, pc],
                                preferred_element_type=jnp.float32)
                    y = y + b_ref[...]
                    # PixelNorm over channels (torch dim=1 in NCHW)
                    y = y * jax.lax.rsqrt(
                        jnp.mean(y * y, axis=-1, keepdims=True) + 1e-8)
                    # LeakyReLU(0.2)
                    y = jnp.where(y >= 0.0, y, 0.2 * y)

                    if fuse_tg:
                        y = jnp.tanh(
                            jnp.dot(y.astype(jnp.bfloat16), wtg_ref[...],
                                    preferred_element_type=jnp.float32)
                            + btg_ref[...])
                        if fuse_blend:
                            y = (1.0 - alpha) * skip + alpha * y

                    slabs.append(y.astype(out_dtype))

                # interleave column parities and store lane-dense:
                # column index = j*2*c + pc*c + ch
                row = jnp.concatenate(slabs, axis=-1)          # (Mc, 2*c)
                row = row.reshape(Hc, 2 * W * c_final)         # lane-dense
                o_ref[0, r0:r0 + Hc, pr, :] = row

    return kernel


def fused_upconv_stage(src, wf, bias, *, to_gray=None, skip_to_gray=None,
                       alpha=-1.0):
    """One progressive stage.  src: (B, H, W, Cin) NHWC.
    Returns (B, 2H, 2W, Cout) bf16 feature, or (B, 2H, 2W, out_ch) f32 rgb."""
    B, H, W, Cin = src.shape
    Cout = wf.shape[-1]
    fuse_tg = to_gray is not None
    fuse_blend = fuse_tg and (skip_to_gray is not None)
    c_final = to_gray[0].shape[1] if fuse_tg else Cout
    out_dtype = jnp.float32 if fuse_tg else jnp.bfloat16

    # Row chunk size for the static in-kernel loop (keeps im2col tiles ~4K rows)
    Hc = min(H, max(1, 4096 // W))

    # zero-pad(1) the source once in XLA (bf16); no upsample / halo tensors.
    xpad = jnp.pad(src.astype(jnp.bfloat16), ((0, 0), (1, 1), (1, 1), (0, 0)))

    kernel = _make_stage_kernel(H, W, Cin, Cout, Hc, fuse_tg, fuse_blend,
                                float(alpha) if fuse_blend else 0.0,
                                c_final, out_dtype)

    lane = 2 * W * c_final
    in_arrays = [xpad, wf, bias.reshape(1, Cout).astype(jnp.float32)]
    in_specs = [
        pl.BlockSpec((1, H + 2, W + 2, Cin), lambda b: (b, 0, 0, 0)),
        pl.BlockSpec((2, 2, 4 * Cin, Cout), lambda b: (0, 0, 0, 0)),  # resident
        pl.BlockSpec((1, Cout), lambda b: (0, 0)),
    ]
    if fuse_tg:
        wtg, btg = to_gray
        in_arrays += [wtg, btg.reshape(1, -1).astype(jnp.float32)]
        in_specs += [pl.BlockSpec((Cout, c_final), lambda b: (0, 0)),
                     pl.BlockSpec((1, c_final), lambda b: (0, 0))]
        if fuse_blend:
            wsk, bsk = skip_to_gray
            in_arrays += [wsk, bsk.reshape(1, -1).astype(jnp.float32)]
            in_specs += [pl.BlockSpec((Cin, c_final), lambda b: (0, 0)),
                         pl.BlockSpec((1, c_final), lambda b: (0, 0))]

    out = pl.pallas_call(
        kernel,
        out_shape=jax.ShapeDtypeStruct((B, H, 2, lane), out_dtype),
        grid=(B,),
        in_specs=in_specs,
        out_specs=pl.BlockSpec((1, H, 2, lane), lambda b: (b, 0, 0, 0)),
        compiler_params=pltpu.CompilerParams(
            dimension_semantics=("parallel",),
            vmem_limit_bytes=32 * 1024 * 1024),
    )(*in_arrays)
    # (B, H, 2, 2W*c): element [b, i, pr, j*2c + pc*c + ch] -> (B, 2H, 2W, c)
    # via contiguous (free) reshapes only.
    return out.reshape(B, 2 * H, 2 * W, c_final)


# =============================================================================
# Parameter construction (deterministic, synthetic)
# =============================================================================
def init_decoder_params(key, out_ch=3, code_dim=128):
    prog_in = [512, 256, 128, 64, 32, 16]
    prog_out = [256, 128, 64, 32, 16, 8]
    keys = jax.random.split(key, 4 + 2 * len(prog_in))

    # nn.Linear(code_dim, 8192): columns permuted so h.reshape(B,4,4,512) is
    # already NHWC (PyTorch's .view(-1,512,4,4) is channel-major).
    w_lin = 0.05 * jax.random.normal(keys[0], (code_dim, 8192), jnp.float32)
    b_lin = 0.01 * jax.random.normal(keys[1], (8192,), jnp.float32)
    n = jnp.arange(8192)
    perm = (n % 512) * 16 + (n // 512)      # new col (s,ch) <- old col (ch,s)
    w_lin = w_lin[:, perm]
    b_lin = b_lin[perm]

    params = {
        "linear_w_t": w_lin.astype(jnp.bfloat16),
        "linear_b": b_lin,
        "init_togray_w": (0.05 * jax.random.normal(keys[2], (512, out_ch))
                          ).astype(jnp.bfloat16),
        "init_togray_b": 0.01 * jax.random.normal(keys[3], (out_ch,),
                                                  jnp.float32),
        "prog": [],
        "to_gray": [],
    }
    for i, (cin, cout) in enumerate(zip(prog_in, prog_out)):
        kw = keys[4 + 2 * i]
        kg = keys[5 + 2 * i]
        # EqualConv2d: raw weight ~ N(0,1), bias 0, runtime scale sqrt(2/fan_in)
        w = jax.random.normal(kw, (3, 3, cin, cout), jnp.float32)  # (kh,kw,Ci,Co)
        w = w * math.sqrt(2.0 / (cin * 3 * 3))
        # Fold the nearest-2x upsample (rows AND columns) into 2x2-tap weights,
        # one (4*Cin, Cout) matrix per output parity (pr, pc).
        r = [jnp.stack([w[0], w[1] + w[2]], axis=0),          # pr = 0
             jnp.stack([w[0] + w[1], w[2]], axis=0)]          # pr = 1
        wf_pr = []
        for pr in range(2):
            c0 = jnp.stack([r[pr][:, 0], r[pr][:, 1] + r[pr][:, 2]], axis=1)
            c1 = jnp.stack([r[pr][:, 0] + r[pr][:, 1], r[pr][:, 2]], axis=1)
            wf_pr.append(jnp.stack([c0, c1], axis=0))   # (pc, a, b, Ci, Co)
        wf = jnp.stack(wf_pr, axis=0)                   # (pr, pc, a, b, Ci, Co)
        wf = wf.reshape(2, 2, 4 * cin, cout).astype(jnp.bfloat16)
        params["prog"].append({"wf": wf, "b": jnp.zeros((cout,), jnp.float32)})
        params["to_gray"].append({
            "w": (0.05 * jax.random.normal(kg, (cout, out_ch))
                  ).astype(jnp.bfloat16),
            "b": jnp.zeros((out_ch,), jnp.float32),
        })
    return params


# =============================================================================
# Decoder forward (matches Decoder.forward semantics)
# =============================================================================
def decoder_forward(params, x, expand=0, alpha=-1.0):
    B = x.shape[0]
    h = pixelnorm_linear(x, params["linear_w_t"], params["linear_b"])  # (B,8192)
    feat = h.reshape(B, 4, 4, 512)       # already NHWC (weights pre-permuted)

    if expand == 0:
        xf = feat.reshape(B * 16, 512).astype(jnp.bfloat16)
        rgb = conv1x1_tanh_small(xf, params["init_togray_w"],
                                 params["init_togray_b"])
        return jnp.transpose(rgb.reshape(B, 4, 4, -1), (0, 3, 1, 2))   # NCHW

    out = feat
    for i in range(len(params["prog"])):
        p = params["prog"][i]
        is_last = (i + 1 == expand)
        to_gray = None
        skip_tg = None
        if is_last:
            tg = params["to_gray"][i]
            to_gray = (tg["w"], tg["b"])
            if i > 0 and 0 <= alpha < 1:
                tgp = params["to_gray"][i - 1]
                skip_tg = (tgp["w"], tgp["b"])
        out = fused_upconv_stage(out, p["wf"], p["b"],
                                 to_gray=to_gray, skip_to_gray=skip_tg,
                                 alpha=alpha)
        if is_last:
            break
    return jnp.transpose(out, (0, 3, 1, 2)).astype(jnp.float32)        # NCHW


# =============================================================================
if __name__ == "__main__":
    key = jax.random.PRNGKey(0)
    pkey, xkey = jax.random.split(key)

    out_ch = 3
    code_dim = 128
    batch = 2

    params = init_decoder_params(pkey, out_ch=out_ch, code_dim=code_dim)
    x = jax.random.normal(xkey, (batch, code_dim), jnp.float32)

    fwd = jax.jit(decoder_forward, static_argnames=("expand", "alpha"))

    # Path 1: default forward (expand=0) -> (B, out_ch, 4, 4)
    y0 = jax.block_until_ready(fwd(params, x, expand=0))
    assert y0.shape == (batch, out_ch, 4, 4), y0.shape

    # Path 2: progressive growth with blending (expand=3, alpha=0.5) -> 32x32
    y3 = jax.block_until_ready(fwd(params, x, expand=3, alpha=0.5))
    assert y3.shape == (batch, out_ch, 32, 32), y3.shape

    # Path 3: full depth (expand=6, alpha=0.5) -> 256x256 (in-kernel row chunks)
    y6 = jax.block_until_ready(fwd(params, x, expand=6, alpha=0.5))
    assert y6.shape == (batch, out_ch, 256, 256), y6.shape

    assert (bool(jnp.all(jnp.isfinite(y0))) and bool(jnp.all(jnp.isfinite(y3)))
            and bool(jnp.all(jnp.isfinite(y6))))
    print("KERNEL_OK")
</pallas_src>

<mosaic_0001>
module attributes {stable_mosaic.version = 11 : i64} {
  func.func @_pn_linear_kernel(%arg0: i32, %arg1: memref<2x128xf32, #tpu.memory_space<vmem>>, %arg2: memref<128x8192xbf16, #tpu.memory_space<vmem>>, %arg3: memref<1x8192xf32, #tpu.memory_space<vmem>>, %arg4: memref<2x8192xf32, #tpu.memory_space<vmem>>) attributes {dimension_semantics = [#tpu.dimension_semantics<arbitrary>], iteration_bounds = array<i64: 1>, scalar_prefetch = 0 : i64, scratch_operands = 0 : i64, tpu.core_type = #tpu.core_type<tc>, window_params = [{pipeline_mode = #tpu.pipeline_mode<synchronous>, transform_indices = @transform_0, window_bounds = array<i64: 2, 128>}, {pipeline_mode = #tpu.pipeline_mode<synchronous>, transform_indices = @transform_1, window_bounds = array<i64: 128, 8192>}, {pipeline_mode = #tpu.pipeline_mode<synchronous>, transform_indices = @transform_2, window_bounds = array<i64: 1, 8192>}, {pipeline_mode = #tpu.pipeline_mode<synchronous>, transform_indices = @transform_3, window_bounds = array<i64: 2, 8192>}]} {
    %c0 = arith.constant 0 : index
    %c0_0 = arith.constant 0 : index
    %0 = vector.load %arg1[%c0, %c0_0] : memref<2x128xf32, #tpu.memory_space<vmem>>, vector<2x128xf32>
    %1 = arith.mulf %0, %0 : vector<2x128xf32>
    %cst = arith.constant dense<0.000000e+00> : vector<2xf32>
    %2 = vector.multi_reduction <add>, %1, %cst [1] : vector<2x128xf32> to vector<2xf32>
    %3 = vector.shape_cast %2 : vector<2xf32> to vector<2x1xf32>
    %cst_1 = arith.constant 1.280000e+02 : f32
    %4 = vector.broadcast %cst_1 : f32 to vector<2x1xf32>
    %5 = arith.divf %3, %4 : vector<2x1xf32>
    %cst_2 = arith.constant 9.99999993E-9 : f32
    %6 = vector.broadcast %cst_2 : f32 to vector<2x1xf32>
    %7 = arith.addf %5, %6 : vector<2x1xf32>
    %8 = math.rsqrt %7 : vector<2x1xf32>
    %9 = vector.broadcast %8 : vector<2x1xf32> to vector<2x128xf32>
    %10 = arith.mulf %0, %9 : vector<2x128xf32>
    %11 = arith.truncf %10 : vector<2x128xf32> to vector<2x128xbf16>
    %c0_3 = arith.constant 0 : index
    %c0_4 = arith.constant 0 : index
    %12 = vector.load %arg2[%c0_3, %c0_4] : memref<128x8192xbf16, #tpu.memory_space<vmem>>, vector<128x8192xbf16>
    %cst_5 = arith.constant dense<0.000000e+00> : vector<2x8192xf32>
    %13 = tpu.matmul %11, %12, %cst_5 {dimension_numbers = #tpu.dot_dimension_numbers<[1], [0], [0], [1], [0, 0, 1, 1], [], []>} : vector<2x128xbf16>, vector<128x8192xbf16>, vector<2x8192xf32> -> vector<2x8192xf32>
    %c0_6 = arith.constant 0 : index
    %c0_7 = arith.constant 0 : index
    %14 = vector.load %arg3[%c0_6, %c0_7] : memref<1x8192xf32, #tpu.memory_space<vmem>>, vector<1x8192xf32>
    %15 = vector.broadcast %14 : vector<1x8192xf32> to vector<2x8192xf32>
    %16 = arith.addf %13, %15 : vector<2x8192xf32>
    %c0_8 = arith.constant 0 : index
    %c0_9 = arith.constant 0 : index
    %17 = vector.load %arg4[%c0_8, %c0_9] : memref<2x8192xf32, #tpu.memory_space<vmem>>, vector<2x8192xf32>
    tpu.vector_store %arg4[%c0_8, %c0_9], %16 {strides = array<i32>} : memref<2x8192xf32, #tpu.memory_space<vmem>>, vector<2x8192xf32>,
    return
  }
  func.func @transform_0(%arg0: i32) -> (i32, i32) {
    %c0_i32 = arith.constant 0 : i32
    %c0_i32_0 = arith.constant 0 : i32
    %c0_i32_1 = arith.constant 0 : i32
    return %c0_i32, %c0_i32_0 : i32, i32
  }
  func.func @transform_1(%arg0: i32) -> (i32, i32) {
    %c0_i32 = arith.constant 0 : i32
    %c0_i32_0 = arith.constant 0 : i32
    %c0_i32_1 = arith.constant 0 : i32
    return %c0_i32, %c0_i32_0 : i32, i32
  }
  func.func @transform_2(%arg0: i32) -> (i32, i32) {
    %c0_i32 = arith.constant 0 : i32
    %c0_i32_0 = arith.constant 0 : i32
    %c0_i32_1 = arith.constant 0 : i32
    return %c0_i32, %c0_i32_0 : i32, i32
  }
  func.func @transform_3(%arg0: i32) -> (i32, i32) {
    %c0_i32 = arith.constant 0 : i32
    %c0_i32_0 = arith.constant 0 : i32
    %c0_i32_1 = arith.constant 0 : i32
    return %c0_i32, %c0_i32_0 : i32, i32
  }
}

module attributes {stable_mosaic.version = 11 : i64} {
  func.func @_conv1x1_tanh_kernel(%arg0: i32, %arg1: memref<32x512xbf16, #tpu.memory_space<vmem>>, %arg2: memref<512x3xbf16, #tpu.memory_space<vmem>>, %arg3: memref<1x3xf32, #tpu.memory_space<vmem>>, %arg4: memref<32x3xf32, #tpu.memory_space<vmem>>) attributes {dimension_semantics = [#tpu.dimension_semantics<arbitrary>], iteration_bounds = array<i64: 1>, scalar_prefetch = 0 : i64, scratch_operands = 0 : i64, tpu.core_type = #tpu.core_type<tc>, window_params = [{pipeline_mode = #tpu.pipeline_mode<synchronous>, transform_indices = @transform_0, window_bounds = array<i64: 32, 512>}, {pipeline_mode = #tpu.pipeline_mode<synchronous>, transform_indices = @transform_1, window_bounds = array<i64: 512, 3>}, {pipeline_mode = #tpu.pipeline_mode<synchronous>, transform_indices = @transform_2, window_bounds = array<i64: 1, 3>}, {pipeline_mode = #tpu.pipeline_mode<synchronous>, transform_indices = @transform_3, window_bounds = array<i64: 32, 3>}]} {
    %c0 = arith.constant 0 : index
    %c0_0 = arith.constant 0 : index
    %0 = vector.load %arg1[%c0, %c0_0] : memref<32x512xbf16, #tpu.memory_space<vmem>>, vector<32x512xbf16>
    %c0_1 = arith.constant 0 : index
    %c0_2 = arith.constant 0 : index
    %1 = vector.load %arg2[%c0_1, %c0_2] : memref<512x3xbf16, #tpu.memory_space<vmem>>, vector<512x3xbf16>
    %cst = arith.constant dense<0.000000e+00> : vector<32x3xf32>
    %2 = tpu.matmul %0, %1, %cst {dimension_numbers = #tpu.dot_dimension_numbers<[1], [0], [0], [1], [0, 0, 1, 1], [], []>} : vector<32x512xbf16>, vector<512x3xbf16>, vector<32x3xf32> -> vector<32x3xf32>
    %c0_3 = arith.constant 0 : index
    %c0_4 = arith.constant 0 : index
    %3 = vector.load %arg3[%c0_3, %c0_4] : memref<1x3xf32, #tpu.memory_space<vmem>>, vector<1x3xf32>
    %4 = vector.broadcast %3 : vector<1x3xf32> to vector<32x3xf32>
    %5 = arith.addf %2, %4 : vector<32x3xf32>
    %6 = math.tanh %5 : vector<32x3xf32>
    %c0_5 = arith.constant 0 : index
    %c0_6 = arith.constant 0 : index
    %7 = vector.load %arg4[%c0_5, %c0_6] : memref<32x3xf32, #tpu.memory_space<vmem>>, vector<32x3xf32>
    tpu.vector_store %arg4[%c0_5, %c0_6], %6 {strides = array<i32>} : memref<32x3xf32, #tpu.memory_space<vmem>>, vector<32x3xf32>,
    return
  }
  func.func @transform_0(%arg0: i32) -> (i32, i32) {
    %c0_i32 = arith.constant 0 : i32
    %c0_i32_0 = arith.constant 0 : i32
    %c0_i32_1 = arith.constant 0 : i32
    return %c0_i32, %c0_i32_0 : i32, i32
  }
  func.func @transform_1(%arg0: i32) -> (i32, i32) {
    %c0_i32 = arith.constant 0 : i32
    %c0_i32_0 = arith.constant 0 : i32
    %c0_i32_1 = arith.constant 0 : i32
    return %c0_i32, %c0_i32_0 : i32, i32
  }
  func.func @transform_2(%arg0: i32) -> (i32, i32) {
    %c0_i32 = arith.constant 0 : i32
    %c0_i32_0 = arith.constant 0 : i32
    %c0_i32_1 = arith.constant 0 : i32
    return %c0_i32, %c0_i32_0 : i32, i32
  }
  func.func @transform_3(%arg0: i32) -> (i32, i32) {
    %c0_i32 = arith.constant 0 : i32
    %c0_i32_0 = arith.constant 0 : i32
    %c0_i32_1 = arith.constant 0 : i32
    return %c0_i32, %c0_i32_0 : i32, i32
  }
}

</mosaic_0001>

<llo_original>
// kernel: decoder_forward.3
$region0: #{decoder_forward.3}
  #allocation0 [shape = 'u32[]', space=smem, size = 0x4, offset = 0x4, fixed_abs, tag = 'smem constant byte address 0x4 - core index']
  #allocation1 [shape = 'u32[144,128]{1,0:T(1,128)}', space=vmem, size = 0x12000, scoped, tag = 'internal scratch']
  %s0 = inlined_call_operand.vmem [shape: bf16[32,512], index: 0, kind: input, shape index: {}]
  %s1 = inlined_call_operand.vmem [shape: bf16[512,3], index: 1, kind: input, shape index: {}]
  %s2 = inlined_call_operand.vmem [shape: f32[1,3], index: 2, kind: input, shape index: {}]
  %s3 = inlined_call_operand.vmem [shape: f32[32,3], index: 3, kind: output, shape index: {}]
  %s4 = sld [smem:[#allocation0]]
  $region22: #{decoder_forward.3} parent=0
    _
  %s6 = ssub.s32 1, %s4
  %s7 = scalar_select 0, %s6, %s4
  // Predicated region
  $region2: #{decoder_forward.3} parent=0 // pred_check
    _
  $region3: #{decoder_forward.3} parent=0 // pred_check_branch
    %9 = sbr.rel (0) target = $region5
  $region4: #{decoder_forward.3} parent=0 // pred_region
    _
  $region5: #{decoder_forward.3} parent=0 // pred_fallthru
    _
  // Predicated region
  $region6: #{decoder_forward.3} parent=0 // pred_check
    _
  $region7: #{decoder_forward.3} parent=0 // pred_check_branch
    %11 = sbr.rel (0) target = $region9
  $region8: #{decoder_forward.3} parent=0 // pred_region
    _
  $region9: #{decoder_forward.3} parent=0 // pred_fallthru
    _
  // Predicated region
  $region10: #{decoder_forward.3} parent=0 // pred_check
    _
  $region11: #{decoder_forward.3} parent=0 // pred_check_branch
    %13 = sbr.rel (0) target = $region13
  $region12: #{decoder_forward.3} parent=0 // pred_region
    _
  $region13: #{decoder_forward.3} parent=0 // pred_fallthru
    _
  %v15 = vld [vmem:[%s0] sm:$0xff]
  %v16 = vld [vmem:[%s0 + $0x8] sm:$0xff]
  %v17 = vld [vmem:[%s0 + $0x10] sm:$0xff]
  %v18 = vld [vmem:[%s0 + $0x18] sm:$0xff]
  %v19 = vld [vmem:[%s0 + $0x20] sm:$0xff]
  %v20 = vld [vmem:[%s0 + $0x28] sm:$0xff]
  %v21 = vld [vmem:[%s0 + $0x30] sm:$0xff]
  %v22 = vld [vmem:[%s0 + $0x38] sm:$0xff]
  %v23 = vld [vmem:[%s1] sm:$0xf]
  %v24 = vld [vmem:[%s1 + $0x4] sm:$0xf]
  %v25 = vld [vmem:[%s1 + $0x8] sm:$0xf]
  %v26 = vld [vmem:[%s1 + $0xc] sm:$0xf]
  %v27 = vld [vmem:[%s1 + $0x10] sm:$0xf]
  %v28 = vld [vmem:[%s1 + $0x14] sm:$0xf]
  %v29 = vld [vmem:[%s1 + $0x18] sm:$0xf]
  %v30 = vld [vmem:[%s1 + $0x1c] sm:$0xf]
  %v31 = vld [vmem:[%s1 + $0x20] sm:$0xf]
  %v32 = vld [vmem:[%s1 + $0x24] sm:$0xf]
  %v33 = vld [vmem:[%s1 + $0x28] sm:$0xf]
  %v34 = vld [vmem:[%s1 + $0x2c] sm:$0xf]
  %v35 = vld [vmem:[%s1 + $0x30] sm:$0xf]
  %v36 = vld [vmem:[%s1 + $0x34] sm:$0xf]
  %v37 = vld [vmem:[%s1 + $0x38] sm:$0xf]
  %v38 = vld [vmem:[%s1 + $0x3c] sm:$0xf]
  %v39 = vld [vmem:[%s1 + $0x40] sm:$0xf]
  %v40 = vld [vmem:[%s1 + $0x44] sm:$0xf]
  %v41 = vld [vmem:[%s1 + $0x48] sm:$0xf]
  %v42 = vld [vmem:[%s1 + $0x4c] sm:$0xf]
  %v43 = vld [vmem:[%s1 + $0x50] sm:$0xf]
  %v44 = vld [vmem:[%s1 + $0x54] sm:$0xf]
  %v45 = vld [vmem:[%s1 + $0x58] sm:$0xf]
  %v46 = vld [vmem:[%s1 + $0x5c] sm:$0xf]
  %v47 = vld [vmem:[%s1 + $0x60] sm:$0xf]
  %v48 = vld [vmem:[%s1 + $0x64] sm:$0xf]
  %v49 = vld [vmem:[%s1 + $0x68] sm:$0xf]
  %v50 = vld [vmem:[%s1 + $0x6c] sm:$0xf]
  %v51 = vld [vmem:[%s1 + $0x70] sm:$0xf]
  %v52 = vld [vmem:[%s1 + $0x74] sm:$0xf]
  %v53 = vld [vmem:[%s1 + $0x78] sm:$0xf]
  %v54 = vld [vmem:[%s1 + $0x7c] sm:$0xf]
  %v55 = vld [vmem:[%s1 + $0x80] sm:$0xf]
  %v56 = vld [vmem:[%s1 + $0x84] sm:$0xf]
  %v57 = vld [vmem:[%s1 + $0x88] sm:$0xf]
  %v58 = vld [vmem:[%s1 + $0x8c] sm:$0xf]
  %v59 = vld [vmem:[%s1 + $0x90] sm:$0xf]
  %v60 = vld [vmem:[%s1 + $0x94] sm:$0xf]
  %v61 = vld [vmem:[%s1 + $0x98] sm:$0xf]
  %v62 = vld [vmem:[%s1 + $0x9c] sm:$0xf]
  %v63 = vld [vmem:[%s1 + $0xa0] sm:$0xf]
  %v64 = vld [vmem:[%s1 + $0xa4] sm:$0xf]
  %v65 = vld [vmem:[%s1 + $0xa8] sm:$0xf]
  %v66 = vld [vmem:[%s1 + $0xac] sm:$0xf]
  %v67 = vld [vmem:[%s1 + $0xb0] sm:$0xf]
  %v68 = vld [vmem:[%s1 + $0xb4] sm:$0xf]
  %v69 = vld [vmem:[%s1 + $0xb8] sm:$0xf]
  %v70 = vld [vmem:[%s1 + $0xbc] sm:$0xf]
  %v71 = vld [vmem:[%s1 + $0xc0] sm:$0xf]
  %v72 = vld [vmem:[%s1 + $0xc4] sm:$0xf]
  %v73 = vld [vmem:[%s1 + $0xc8] sm:$0xf]
  %v74 = vld [vmem:[%s1 + $0xcc] sm:$0xf]
  %v75 = vld [vmem:[%s1 + $0xd0] sm:$0xf]
  %v76 = vld [vmem:[%s1 + $0xd4] sm:$0xf]
  %v77 = vld [vmem:[%s1 + $0xd8] sm:$0xf]
  %v78 = vld [vmem:[%s1 + $0xdc] sm:$0xf]
  %v79 = vld [vmem:[%s1 + $0xe0] sm:$0xf]
  %v80 = vld [vmem:[%s1 + $0xe4] sm:$0xf]
  %v81 = vld [vmem:[%s1 + $0xe8] sm:$0xf]
  %v82 = vld [vmem:[%s1 + $0xec] sm:$0xf]
  %v83 = vld [vmem:[%s1 + $0xf0] sm:$0xf]
  %v84 = vld [vmem:[%s1 + $0xf4] sm:$0xf]
  %v85 = vld [vmem:[%s1 + $0xf8] sm:$0xf]
  %v86 = vld [vmem:[%s1 + $0xfc] sm:$0xf]
  %v87 = vld [vmem:[%s2] sm:$0x1]
  %v89 = vlaneseq
  %v90 = vshrl.u32 %v89, 7
  %v91 = vsub.s32 0, %v90
  %v92 = vrot.slane %v87, %v91
  %v102 = vunpack.c.l.b16 %v15
  %v103 = vunpack.c.h.b16 %v15
  %v104 = vunpack.c.l.b16 %v16
  %v105 = vunpack.c.h.b16 %v16
  %v106 = vunpack.c.l.b16 %v17
  %v107 = vunpack.c.h.b16 %v17
  %v108 = vunpack.c.l.b16 %v18
  %v109 = vunpack.c.h.b16 %v18
  %v110 = vunpack.c.l.b16 %v19
  %v111 = vunpack.c.h.b16 %v19
  %v112 = vunpack.c.l.b16 %v20
  %v113 = vunpack.c.h.b16 %v20
  %v114 = vunpack.c.l.b16 %v21
  %v115 = vunpack.c.h.b16 %v21
  %v116 = vunpack.c.l.b16 %v22
  %v117 = vunpack.c.h.b16 %v22
  %v118 = vpack.c.b16 %v106, %v102
  %v119 = vpack.c.b16 %v107, %v103
  %v120 = vpack.c.b16 %v108, %v104
  %v121 = vpack.c.b16 %v109, %v105
  %v122 = vpack.c.b16 %v114, %v110
  %v123 = vpack.c.b16 %v115, %v111
  %v124 = vpack.c.b16 %v116, %v112
  %v125 = vpack.c.b16 %v117, %v113
  %v198 = vunpack.c.l.b16 %v23
  %v199 = vunpack.c.l.b16 %v24
  %v200 = vunpack.c.l.b16 %v25
  %v201 = vunpack.c.l.b16 %v26
  %v202 = vunpack.c.l.b16 %v27
  %v203 = vunpack.c.l.b16 %v28
  %v204 = vunpack.c.l.b16 %v29
  %v205 = vunpack.c.l.b16 %v30
  %v206 = vunpack.c.l.b16 %v31
  %v207 = vunpack.c.l.b16 %v32
  %v208 = vunpack.c.l.b16 %v33
  %v209 = vunpack.c.l.b16 %v34
  %v210 = vunpack.c.l.b16 %v35
  %v211 = vunpack.c.l.b16 %v36
  %v212 = vunpack.c.l.b16 %v37
  %v213 = vunpack.c.l.b16 %v38
  %v214 = vunpack.c.l.b16 %v39
  %v215 = vunpack.c.l.b16 %v40
  %v216 = vunpack.c.l.b16 %v41
  %v217 = vunpack.c.l.b16 %v42
  %v218 = vunpack.c.l.b16 %v43
  %v219 = vunpack.c.l.b16 %v44
  %v220 = vunpack.c.l.b16 %v45
  %v221 = vunpack.c.l.b16 %v46
  %v222 = vunpack.c.l.b16 %v47
  %v223 = vunpack.c.l.b16 %v48
  %v224 = vunpack.c.l.b16 %v49
  %v225 = vunpack.c.l.b16 %v50
  %v226 = vunpack.c.l.b16 %v51
  %v227 = vunpack.c.l.b16 %v52
  %v228 = vunpack.c.l.b16 %v53
  %v229 = vunpack.c.l.b16 %v54
  %v230 = vunpack.c.l.b16 %v55
  %v231 = vunpack.c.l.b16 %v56
  %v232 = vunpack.c.l.b16 %v57
  %v233 = vunpack.c.l.b16 %v58
  %v234 = vunpack.c.l.b16 %v59
  %v235 = vunpack.c.l.b16 %v60
  %v236 = vunpack.c.l.b16 %v61
  %v237 = vunpack.c.l.b16 %v62
  %v238 = vunpack.c.l.b16 %v63
  %v239 = vunpack.c.l.b16 %v64
  %v240 = vunpack.c.l.b16 %v65
  %v241 = vunpack.c.l.b16 %v66
  %v242 = vunpack.c.l.b16 %v67
  %v243 = vunpack.c.l.b16 %v68
  %v244 = vunpack.c.l.b16 %v69
  %v245 = vunpack.c.l.b16 %v70
  %v246 = vunpack.c.l.b16 %v71
  %v247 = vunpack.c.l.b16 %v72
  %v248 = vunpack.c.l.b16 %v73
  %v249 = vunpack.c.l.b16 %v74
  %v250 = vunpack.c.l.b16 %v75
  %v251 = vunpack.c.l.b16 %v76
  %v252 = vunpack.c.l.b16 %v77
  %v253 = vunpack.c.l.b16 %v78
  %v254 = vunpack.c.l.b16 %v79
  %v255 = vunpack.c.l.b16 %v80
  %v256 = vunpack.c.l.b16 %v81
  %v257 = vunpack.c.l.b16 %v82
  %v258 = vunpack.c.l.b16 %v83
  %v259 = vunpack.c.l.b16 %v84
  %v260 = vunpack.c.l.b16 %v85
  %v261 = vunpack.c.l.b16 %v86
  %v262 = vpack.c.b16 %v199, %v198
  %v263 = vpack.c.b16 %v201, %v200
  %v264 = vpack.c.b16 %v203, %v202
  %v265 = vpack.c.b16 %v205, %v204
  %v266 = vpack.c.b16 %v207, %v206
  %v267 = vpack.c.b16 %v209, %v208
  %v268 = vpack.c.b16 %v211, %v210
  %v269 = vpack.c.b16 %v213, %v212
  %v270 = vpack.c.b16 %v215, %v214
  %v271 = vpack.c.b16 %v217, %v216
  %v272 = vpack.c.b16 %v219, %v218
  %v273 = vpack.c.b16 %v221, %v220
  %v274 = vpack.c.b16 %v223, %v222
  %v275 = vpack.c.b16 %v225, %v224
  %v276 = vpack.c.b16 %v227, %v226
  %v277 = vpack.c.b16 %v229, %v228
  %v278 = vpack.c.b16 %v231, %v230
  %v279 = vpack.c.b16 %v233, %v232
  %v280 = vpack.c.b16 %v235, %v234
  %v281 = vpack.c.b16 %v237, %v236
  %v282 = vpack.c.b16 %v239, %v238
  %v283 = vpack.c.b16 %v241, %v240
  %v284 = vpack.c.b16 %v243, %v242
  %v285 = vpack.c.b16 %v245, %v244
  %v286 = vpack.c.b16 %v247, %v246
  %v287 = vpack.c.b16 %v249, %v248
  %v288 = vpack.c.b16 %v251, %v250
  %v289 = vpack.c.b16 %v253, %v252
  %v290 = vpack.c.b16 %v255, %v254
  %v291 = vpack.c.b16 %v257, %v256
  %v292 = vpack.c.b16 %v259, %v258
  %v293 = vpack.c.b16 %v261, %v260
  %326 = vmatprep.subr.bf16.mxu0 0
  %327 = vmatpush1.bf16.msra.mxu0 %v269
  %328 = vmatprep.subr.bf16.mxu0 0
  %329 = vmatpush1.bf16.msra.mxu0 %v268
  %330 = vmatprep.subr.bf16.mxu0 0
  %331 = vmatpush1.bf16.msra.mxu0 %v267
  %332 = vmatprep.subr.bf16.mxu0 0
  %333 = vmatpush1.bf16.msra.mxu0 %v266
  %334 = vmatprep.subr.bf16.mxu0 0
  %335 = vmatpush1.bf16.msra.mxu0 %v265
  %336 = vmatprep.subr.bf16.mxu0 0
  %337 = vmatpush1.bf16.msra.mxu0 %v264
  %338 = vmatprep.subr.bf16.mxu0 0
  %339 = vmatpush1.bf16.msra.mxu0 %v263
  %340 = vmatprep.subr.bf16.mxu0 0
  %341 = vmatpush1.bf16.msra.mxu0 %v262
  %342 = vmatprep.subr.bf16.mxu0 0
  %343 = vmatpush2.bf16.msra.mxu0 %v277
  %344 = vmatprep.subr.bf16.mxu0 0
  %345 = vmatpush2.bf16.msra.mxu0 %v276
  %346 = vmatprep.subr.bf16.mxu0 0
  %347 = vmatpush2.bf16.msra.mxu0 %v275
  %348 = vmatprep.subr.bf16.mxu0 0
  %349 = vmatpush2.bf16.msra.mxu0 %v274
  %350 = vmatprep.subr.bf16.mxu0 0
  %351 = vmatpush2.bf16.msra.mxu0 %v273
  %352 = vmatprep.subr.bf16.mxu0 0
  %353 = vmatpush2.bf16.msra.mxu0 %v272
  %354 = vmatprep.subr.bf16.mxu0 0
  %355 = vmatpush2.bf16.msra.mxu0 %v271
  %356 = vmatprep.subr.bf16.mxu0 0
  %357 = vmatpush2.bf16.msra.mxu0 %v270
  %358 = vmatprep.mubr.bf16.mxu0 %v119
  %359 = vmatmul.mubr.bf16.gmra.mxu0 %v118
  %v360 = vpop.f32.mrf.mxu0
  %v361 = vadd.f32 %v92, %v360
  %v362 = vpop.f32.mrf.mxu0
  %v363 = vpop.f32.mrf.mxu0
  %v364 = vadd.f32 %v92, %v363
  %v365 = vpop.f32.mrf.mxu0
  %366 = vmatprep.mubr.bf16.mxu0 %v123
  %367 = vmatmul.mubr.bf16.gmra.mxu0 %v122
  %v368 = vpop.f32.mrf.mxu0
  %v369 = vadd.f32 %v92, %v368
  %v370 = vpop.f32.mrf.mxu0
  %v371 = vpop.f32.mrf.mxu0
  %v372 = vadd.f32 %v92, %v371
  %v373 = vpop.f32.mrf.mxu0
  %374 = vdwg.mxu0
  %375 = vmatprep.subr.bf16.mxu0 0
  %376 = vmatpush1.bf16.msra.mxu0 %v285
  %377 = vmatprep.subr.bf16.mxu0 0
  %378 = vmatpush1.bf16.msra.mxu0 %v284
  %379 = vmatprep.subr.bf16.mxu0 0
  %380 = vmatpush1.bf16.msra.mxu0 %v283
  %381 = vmatprep.subr.bf16.mxu0 0
  %382 = vmatpush1.bf16.msra.mxu0 %v282
  %383 = vmatprep.subr.bf16.mxu0 0
  %384 = vmatpush1.bf16.msra.mxu0 %v281
  %385 = vmatprep.subr.bf16.mxu0 0
  %386 = vmatpush1.bf16.msra.mxu0 %v280
  %387 = vmatprep.subr.bf16.mxu0 0
  %388 = vmatpush1.bf16.msra.mxu0 %v279
  %389 = vmatprep.subr.bf16.mxu0 0
  %390 = vmatpush1.bf16.msra.mxu0 %v278
  %391 = vmatprep.subr.bf16.mxu0 0
  %392 = vmatpush2.bf16.msra.mxu0 %v293
  %393 = vmatprep.subr.bf16.mxu0 0
  %394 = vmatpush2.bf16.msra.mxu0 %v292
  %395 = vmatprep.subr.bf16.mxu0 0
  %396 = vmatpush2.bf16.msra.mxu0 %v291
  %397 = vmatprep.subr.bf16.mxu0 0
  %398 = vmatpush2.bf16.msra.mxu0 %v290
  %399 = vmatprep.subr.bf16.mxu0 0
  %400 = vmatpush2.bf16.msra.mxu0 %v289
  %401 = vmatprep.subr.bf16.mxu0 0
  %402 = vmatpush2.bf16.msra.mxu0 %v288
  %403 = vmatprep.subr.bf16.mxu0 0
  %404 = vmatpush2.bf16.msra.mxu0 %v287
  %405 = vmatprep.subr.bf16.mxu0 0
  %406 = vmatpush2.bf16.msra.mxu0 %v286
  %407 = vmatprep.mubr.bf16.mxu0 %v121
  %408 = vmatmul.mubr.bf16.gmra.mxu0 %v120
  %v409 = vpop.f32.mrf.mxu0
  %v410 = vadd.f32 %v361, %v409
  %v411 = vpop.f32.mrf.mxu0
  %v412 = vpop.f32.mrf.mxu0
  %v413 = vadd.f32 %v364, %v412
  %v414 = vpop.f32.mrf.mxu0
  %415 = vmatprep.mubr.bf16.mxu0 %v125
  %416 = vmatmul.mubr.bf16.gmra.mxu0 %v124
  %v417 = vpop.f32.mrf.mxu0
  %v418 = vadd.f32 %v369, %v417
  %v419 = vpop.f32.mrf.mxu0
  %v420 = vpop.f32.mrf.mxu0
  %v421 = vadd.f32 %v372, %v420
  %v422 = vpop.f32.mrf.mxu0
  %423 = vdwg.mxu0
  %v424 = vtanh.pop %v410
  %v425 = vtanh.pop %v413
  %v426 = vtanh.pop %v418
  %v427 = vtanh.pop %v421
  %vm428 = vcmask 23552
  %429 = vst.msk [vmem:[%s3] sm:$0xff] %vm428, %v424
  %430 = vst.msk [vmem:[%s3 + $0x8] sm:$0xff] %vm428, %v425
  %431 = vst.msk [vmem:[%s3 + $0x10] sm:$0xff] %vm428, %v426
  %432 = vst.msk [vmem:[%s3 + $0x18] sm:$0xff] %vm428, %v427
  // Predicated region
  $region14: #{decoder_forward.3} parent=0 // pred_check
    _
  $region15: #{decoder_forward.3} parent=0 // pred_check_branch
    %434 = sbr.rel (0) target = $region17
  $region16: #{decoder_forward.3} parent=0 // pred_region
    _
  $region17: #{decoder_forward.3} parent=0 // pred_fallthru
    _
  // Predicated region
  $region18: #{decoder_forward.3} parent=0 // pred_check
    _
  $region19: #{decoder_forward.3} parent=0 // pred_check_branch
    %436 = sbr.rel (0) target = $region21
  $region20: #{decoder_forward.3} parent=0 // pred_region
    _
  $region21: #{decoder_forward.3} parent=0 // pred_fallthru
    _

// kernel: decoder_forward.2
$region0: #{decoder_forward.2}
  #allocation0 [shape = 'u32[]', space=smem, size = 0x4, offset = 0x4, fixed_abs, tag = 'smem constant byte address 0x4 - core index']
  #allocation1 [shape = 'u32[144,128]{1,0:T(1,128)}', space=vmem, size = 0x12000, scoped, tag = 'internal scratch']
  %s0 = inlined_call_operand.hbm [shape: f32[2,128], index: 0, kind: input, shape index: {}]
  %s1 = inlined_call_operand.hbm [shape: bf16[128,8192], index: 1, kind: input, shape index: {}]
  %s2 = inlined_call_operand.hbm [shape: f32[1,8192], index: 2, kind: input, shape index: {}]
  %s3 = inlined_call_operand.vmem [shape: f32[2,8192], index: 3, kind: output, shape index: {}]
  %s4 = sld [smem:[#allocation0]]
  $region34: #{decoder_forward.2} parent=0
    _
  %s6 = ssub.s32 1, %s4
  %s7 = scalar_select 0, %s6, %s4
  $region1: #{decoder_forward.2} parent=0
    #allocation2 [shape = 'u8[1024]{0}', space=vmem, size = 0x400, scoped, tag = 'input window, operand 0, single buffered']
    #allocation3 [shape = 's32[1]{0}', space=sflag, size = 0x4, scoped, tag = 'scoped memory for decoder_forward.2']
    #allocation4 [shape = 'u8[2097152]{0}', space=vmem, size = 0x200000, scoped, tag = 'input window, operand 1, single buffered']
    #allocation5 [shape = 's32[1]{0}', space=sflag, size = 0x4, scoped, tag = 'scoped memory for decoder_forward.2']
    #allocation6 [shape = 'u8[32768]{0}', space=vmem, size = 0x8000, scoped, tag = 'input window, operand 2, single buffered']
    %8 = vsyncpa [#allocation3], 0
    %9 = vsyncpa [#allocation5], 0
    // Predicated region
    $region2: #{decoder_forward.2} parent=1 // pred_check
      _
    $region3: #{decoder_forward.2} parent=1 // pred_check_branch
      %11 = sbr.rel (0) target = $region5
    $region4: #{decoder_forward.2} parent=1 // pred_region
      %s13 = ssub.s32 32, 32
      %14 = vsyncadd [#allocation3], %s13
      %s16 = sshll.u32 [#allocation2], 4
      %s17 = int_to_ptr.vmem [resolvable:$true] %s16
      %19 = dma.hbm_to_vmem [thread:$0]  %s0, 32, %s17, [#allocation3]
    $region5: #{decoder_forward.2} parent=1 // pred_fallthru
      _
    // Predicated region
    $region6: #{decoder_forward.2} parent=1 // pred_check
      _
    $region7: #{decoder_forward.2} parent=1 // pred_check_branch
      %21 = sbr.rel (0) target = $region9
    $region8: #{decoder_forward.2} parent=1 // pred_region
      %s23 = ssub.s32 65536, 65536
      %24 = vsyncadd [#allocation5], %s23
      %s25 = sshll.u32 [#allocation4], 4
      %s26 = int_to_ptr.vmem [resolvable:$true] %s25
      %31 = dma.hbm_to_vmem [thread:$0]  %s1, 65536, %s26, [#allocation5], 4096, 4096, 256
    $region9: #{decoder_forward.2} parent=1 // pred_fallthru
      _
    // Predicated region
    $region10: #{decoder_forward.2} parent=1 // pred_check
      _
    $region11: #{decoder_forward.2} parent=1 // pred_check_branch
      %33 = sbr.rel (0) target = $region13
    $region12: #{decoder_forward.2} parent=1 // pred_region
      %s35 = ssub.s32 1024, 1024
      %36 = vsyncadd [#allocation5], %s35
      %s38 = sshll.u32 [#allocation6], 4
      %s39 = int_to_ptr.vmem [resolvable:$true] %s38
      %41 = dma.hbm_to_vmem [thread:$0]  %s2, 1024, %s39, [#allocation5]
    $region13: #{decoder_forward.2} parent=1 // pred_fallthru
      _
    // Predicated region
    $region14: #{decoder_forward.2} parent=1 // pred_check
      _
    $region15: #{decoder_forward.2} parent=1 // pred_check_branch
      %43 = sbr.rel (0) target = $region17
    $region16: #{decoder_forward.2} parent=1 // pred_region
      %44 = dma.done [#allocation3], 32
    $region17: #{decoder_forward.2} parent=1 // pred_fallthru
      _
    // Predicated region
    $region18: #{decoder_forward.2} parent=1 // pred_check
      _
    $region19: #{decoder_forward.2} parent=1 // pred_check_branch
      %46 = sbr.rel (0) target = $region21
    $region20: #{decoder_forward.2} parent=1 // pred_region
      %47 = dma.done [#allocation5], 65536
    $region21: #{decoder_forward.2} parent=1 // pred_fallthru
      _
    // Predicated region
    $region22: #{decoder_forward.2} parent=1 // pred_check
      _
    $region23: #{decoder_forward.2} parent=1 // pred_check_branch
      %49 = sbr.rel (0) target = $region25
    $region24: #{decoder_forward.2} parent=1 // pred_region
      %50 = dma.done [#allocation5], 1024
    $region25: #{decoder_forward.2} parent=1 // pred_fallthru
      _
    %v52 = vld [vmem:[#allocation2] sm:$0x3]
    %v53 = vmul.f32 %v52, %v52
    %vm54 = vcmask 1041408
    %v55 = vsel %vm54, %v53, 0.0
    %56 = vadd.xlane.f32.xlu0 %v55
    %v57 = vpop.xlane.xlu0 %56
    %v58 = vrcp.pop 128.0
    %v59 = vmul.f32 %v57, %v58
    %v60 = vadd.f32 %v59, 1e-08
    %v61 = vrsqrt.pop %v60
    %v62 = vmul.f32 %v52, %v61
    %v63 = vpack.c.bf16 %v62, %v62
    %v64 = vld [vmem:[#allocation4] sm:$0xff]
    %v65 = vld [vmem:[#allocation4 + $0x8] sm:$0xff]
    %v66 = vld [vmem:[#allocation4 + $0x10] sm:$0xff]
    %v67 = vld [vmem:[#allocation4 + $0x18] sm:$0xff]
    %v68 = vld [vmem:[#allocation4 + $0x20] sm:$0xff]
    %v69 = vld [vmem:[#allocation4 + $0x28] sm:$0xff]
    %v70 = vld [vmem:[#allocation4 + $0x30] sm:$0xff]
    %v71 = vld [vmem:[#allocation4 + $0x38] sm:$0xff]
    %v72 = vld [vmem:[#allocation4 + $0x40] sm:$0xff]
    %v73 = vld [vmem:[#allocation4 + $0x48] sm:$0xff]
    %v74 = vld [vmem:[#allocation4 + $0x50] sm:$0xff]
    %v75 = vld [vmem:[#allocation4 + $0x58] sm:$0xff]
    %v76 = vld [vmem:[#allocation4 + $0x60] sm:$0xff]
    %v77 = vld [vmem:[#allocation4 + $0x68] sm:$0xff]
    %v78 = vld [vmem:[#allocation4 + $0x70] sm:$0xff]
    %v79 = vld [vmem:[#allocation4 + $0x78] sm:$0xff]
    %v80 = vld [vmem:[#allocation4 + $0x80] sm:$0xff]
    %v81 = vld [vmem:[#allocation4 + $0x88] sm:$0xff]
    %v82 = vld [vmem:[#allocation4 + $0x90] sm:$0xff]
    %v83 = vld [vmem:[#allocation4 + $0x98] sm:$0xff]
    %v84 = vld [vmem:[#allocation4 + $0xa0] sm:$0xff]
    %v85 = vld [vmem:[#allocation4 + $0xa8] sm:$0xff]
    %v86 = vld [vmem:[#allocation4 + $0xb0] sm:$0xff]
    %v87 = vld [vmem:[#allocation4 + $0xb8] sm:$0xff]
    %v88 = vld [vmem:[#allocation4 + $0xc0] sm:$0xff]
    %v89 = vld [vmem:[#allocation4 + $0xc8] sm:$0xff]
    %v90 = vld [vmem:[#allocation4 + $0xd0] sm:$0xff]
    %v91 = vld [vmem:[#allocation4 + $0xd8] sm:$0xff]
    %v92 = vld [vmem:[#allocation4 + $0xe0] sm:$0xff]
    %v93 = vld [vmem:[#allocation4 + $0xe8] sm:$0xff]
    %v94 = vld [vmem:[#allocation4 + $0xf0] sm:$0xff]
    %v95 = vld [vmem:[#allocation4 + $0xf8] sm:$0xff]
    %v96 = vld [vmem:[#allocation4 + $0x100] sm:$0xff]
    %v97 = vld [vmem:[#allocation4 + $0x108] sm:$0xff]
    %v98 = vld [vmem:[#allocation4 + $0x110] sm:$0xff]
    %v99 = vld [vmem:[#allocation4 + $0x118] sm:$0xff]
    %v100 = vld [vmem:[#allocation4 + $0x120] sm:$0xff]
    %v101 = vld [vmem:[#allocation4 + $0x128] sm:$0xff]
    %v102 = vld [vmem:[#allocation4 + $0x130] sm:$0xff]
    %v103 = vld [vmem:[#allocation4 + $0x138] sm:$0xff]
    %v104 = vld [vmem:[#allocation4 + $0x140] sm:$0xff]
    %v105 = vld [vmem:[#allocation4 + $0x148] sm:$0xff]
    %v106 = vld [vmem:[#allocation4 + $0x150] sm:$0xff]
    %v107 = vld [vmem:[#allocation4 + $0x158] sm:$0xff]
    %v108 = vld [vmem:[#allocation4 + $0x160] sm:$0xff]
    %v109 = vld [vmem:[#allocation4 + $0x168] sm:$0xff]
    %v110 = vld [vmem:[#allocation4 + $0x170] sm:$0xff]
    %v111 = vld [vmem:[#allocation4 + $0x178] sm:$0xff]
    %v112 = vld [vmem:[#allocation4 + $0x180] sm:$0xff]
    %v113 = vld [vmem:[#allocation4 + $0x188] sm:$0xff]
    %v114 = vld [vmem:[#allocation4 + $0x190] sm:$0xff]
    %v115 = vld [vmem:[#allocation4 + $0x198] sm:$0xff]
    %v116 = vld [vmem:[#allocation4 + $0x1a0] sm:$0xff]
    %v117 = vld [vmem:[#allocation4 + $0x1a8] sm:$0xff]
    %v118 = vld [vmem:[#allocation4 + $0x1b0] sm:$0xff]
    %v119 = vld [vmem:[#allocation4 + $0x1b8] sm:$0xff]
    %v120 = vld [vmem:[#allocation4 + $0x1c0] sm:$0xff]
    %v121 = vld [vmem:[#allocation4 + $0x1c8] sm:$0xff]
    %v122 = vld [vmem:[#allocation4 + $0x1d0] sm:$0xff]
    %v123 = vld [vmem:[#allocation4 + $0x1d8] sm:$0xff]
    %v124 = vld [vmem:[#allocation4 + $0x1e0] sm:$0xff]
    %v125 = vld [vmem:[#allocation4 + $0x1e8] sm:$0xff]
    %v126 = vld [vmem:[#allocation4 + $0x1f0] sm:$0xff]
    %v127 = vld [vmem:[#allocation4 + $0x1f8] sm:$0xff]
    %v128 = vld [vmem:[#allocation4 + $0x200] sm:$0xff]
    %v129 = vld [vmem:[#allocation4 + $0x208] sm:$0xff]
    %v130 = vld [vmem:[#allocation4 + $0x210] sm:$0xff]
    %v131 = vld [vmem:[#allocation4 + $0x218] sm:$0xff]
    %v132 = vld [vmem:[#allocation4 + $0x220] sm:$0xff]
    %v133 = vld [vmem:[#allocation4 + $0x228] sm:$0xff]
    %v134 = vld [vmem:[#allocation4 + $0x230] sm:$0xff]
    %v135 = vld [vmem:[#allocation4 + $0x238] sm:$0xff]
    %v136 = vld [vmem:[#allocation4 + $0x240] sm:$0xff]
    %v137 = vld [vmem:[#allocation4 + $0x248] sm:$0xff]
    %v138 = vld [vmem:[#allocation4 + $0x250] sm:$0xff]
    %v139 = vld [vmem:[#allocation4 + $0x258] sm:$0xff]
    %v140 = vld [vmem:[#allocation4 + $0x260] sm:$0xff]
    %v141 = vld [vmem:[#allocation4 + $0x268] sm:$0xff]
    %v142 = vld [vmem:[#allocation4 + $0x270] sm:$0xff]
    %v143 = vld [vmem:[#allocation4 + $0x278] sm:$0xff]
    %v144 = vld [vmem:[#allocation4 + $0x280] sm:$0xff]
    %v145 = vld [vmem:[#allocation4 + $0x288] sm:$0xff]
    %v146 = vld [vmem:[#allocation4 + $0x290] sm:$0xff]
    %v147 = vld [vmem:[#allocation4 + $0x298] sm:$0xff]
    %v148 = vld [vmem:[#allocation4 + $0x2a0] sm:$0xff]
    %v149 = vld [vmem:[#allocation4 + $0x2a8] sm:$0xff]
    %v150 = vld [vmem:[#allocation4 + $0x2b0] sm:$0xff]
    %v151 = vld [vmem:[#allocation4 + $0x2b8] sm:$0xff]
    %v152 = vld [vmem:[#allocation4 + $0x2c0] sm:$0xff]
    %v153 = vld [vmem:[#allocation4 + $0x2c8] sm:$0xff]
    %v154 = vld [vmem:[#allocation4 + $0x2d0] sm:$0xff]
    %v155 = vld [vmem:[#allocation4 + $0x2d8] sm:$0xff]
    %v156 = vld [vmem:[#allocation4 + $0x2e0] sm:$0xff]
    %v157 = vld [vmem:[#allocation4 + $0x2e8] sm:$0xff]
    %v158 = vld [vmem:[#allocation4 + $0x2f0] sm:$0xff]
    %v159 = vld [vmem:[#allocation4 + $0x2f8] sm:$0xff]
    %v160 = vld [vmem:[#allocation4 + $0x300] sm:$0xff]
    %v161 = vld [vmem:[#allocation4 + $0x308] sm:$0xff]
    %v162 = vld [vmem:[#allocation4 + $0x310] sm:$0xff]
    %v163 = vld [vmem:[#allocation4 + $0x318] sm:$0xff]
    %v164 = vld [vmem:[#allocation4 + $0x320] sm:$0xff]
    %v165 = vld [vmem:[#allocation4 + $0x328] sm:$0xff]
    %v166 = vld [vmem:[#allocation4 + $0x330] sm:$0xff]
    %v167 = vld [vmem:[#allocation4 + $0x338] sm:$0xff]
    %v168 = vld [vmem:[#allocation4 + $0x340] sm:$0xff]
    %v169 = vld [vmem:[#allocation4 + $0x348] sm:$0xff]
    %v170 = vld [vmem:[#allocation4 + $0x350] sm:$0xff]
    %v171 = vld [vmem:[#allocation4 + $0x358] sm:$0xff]
    %v172 = vld [vmem:[#allocation4 + $0x360] sm:$0xff]
    %v173 = vld [vmem:[#allocation4 + $0x368] sm:$0xff]
    %v174 = vld [vmem:[#allocation4 + $0x370] sm:$0xff]
    %v175 = vld [vmem:[#allocation4 + $0x378] sm:$0xff]
    %v176 = vld [vmem:[#allocation4 + $0x380] sm:$0xff]
    %v177 = vld [vmem:[#allocation4 + $0x388] sm:$0xff]
    %v178 = vld [vmem:[#allocation4 + $0x390] sm:$0xff]
    %v179 = vld [vmem:[#allocation4 + $0x398] sm:$0xff]
    %v180 = vld [vmem:[#allocation4 + $0x3a0] sm:$0xff]
    %v181 = vld [vmem:[#allocation4 + $0x3a8] sm:$0xff]
    %v182 = vld [vmem:[#allocation4 + $0x3b0] sm:$0xff]
    %v183 = vld [vmem:[#allocation4 + $0x3b8] sm:$0xff]
    %v184 = vld [vmem:[#allocation4 + $0x3c0] sm:$0xff]
    %v185 = vld [vmem:[#allocation4 + $0x3c8] sm:$0xff]
    %v186 = vld [vmem:[#allocation4 + $0x3d0] sm:$0xff]
    %v187 = vld [vmem:[#allocation4 + $0x3d8] sm:$0xff]
    %v188 = vld [vmem:[#allocation4 + $0x3e0] sm:$0xff]
    %v189 = vld [vmem:[#allocation4 + $0x3e8] sm:$0xff]
    %v190 = vld [vmem:[#allocation4 + $0x3f0] sm:$0xff]
    %v191 = vld [vmem:[#allocation4 + $0x3f8] sm:$0xff]
    %v192 = vld [vmem:[#allocation4 + $0x400] sm:$0xff]
    %v193 = vld [vmem:[#allocation4 + $0x408] sm:$0xff]
    %v194 = vld [vmem:[#allocation4 + $0x410] sm:$0xff]
    %v195 = vld [vmem:[#allocation4 + $0x418] sm:$0xff]
    %v196 = vld [vmem:[#allocation4 + $0x420] sm:$0xff]
    %v197 = vld [vmem:[#allocation4 + $0x428] sm:$0xff]
    %v198 = vld [vmem:[#allocation4 + $0x430] sm:$0xff]
    %v199 = vld [vmem:[#allocation4 + $0x438] sm:$0xff]
    %v200 = vld [vmem:[#allocation4 + $0x440] sm:$0xff]
    %v201 = vld [vmem:[#allocation4 + $0x448] sm:$0xff]
    %v202 = vld [vmem:[#allocation4 + $0x450] sm:$0xff]
    %v203 = vld [vmem:[#allocation4 + $0x458] sm:$0xff]
    %v204 = vld [vmem:[#allocation4 + $0x460] sm:$0xff]
    %v205 = vld [vmem:[#allocation4 + $0x468] sm:$0xff]
    %v206 = vld [vmem:[#allocation4 + $0x470] sm:$0xff]
    %v207 = vld [vmem:[#allocation4 + $0x478] sm:$0xff]
    %v208 = vld [vmem:[#allocation4 + $0x480] sm:$0xff]
    %v209 = vld [vmem:[#allocation4 + $0x488] sm:$0xff]
    %v210 = vld [vmem:[#allocation4 + $0x490] sm:$0xff]
    %v211 = vld [vmem:[#allocation4 + $0x498] sm:$0xff]
    %v212 = vld [vmem:[#allocation4 + $0x4a0] sm:$0xff]
    %v213 = vld [vmem:[#allocation4 + $0x4a8] sm:$0xff]
    %v214 = vld [vmem:[#allocation4 + $0x4b0] sm:$0xff]
    %v215 = vld [vmem:[#allocation4 + $0x4b8] sm:$0xff]
    %v216 = vld [vmem:[#allocation4 + $0x4c0] sm:$0xff]
    %v217 = vld [vmem:[#allocation4 + $0x4c8] sm:$0xff]
    %v218 = vld [vmem:[#allocation4 + $0x4d0] sm:$0xff]
    %v219 = vld [vmem:[#allocation4 + $0x4d8] sm:$0xff]
    %v220 = vld [vmem:[#allocation4 + $0x4e0] sm:$0xff]
    %v221 = vld [vmem:[#allocation4 + $0x4e8] sm:$0xff]
    %v222 = vld [vmem:[#allocation4 + $0x4f0] sm:$0xff]
    %v223 = vld [vmem:[#allocation4 + $0x4f8] sm:$0xff]
    %v224 = vld [vmem:[#allocation4 + $0x500] sm:$0xff]
    %v225 = vld [vmem:[#allocation4 + $0x508] sm:$0xff]
    %v226 = vld [vmem:[#allocation4 + $0x510] sm:$0xff]
    %v227 = vld [vmem:[#allocation4 + $0x518] sm:$0xff]
    %v228 = vld [vmem:[#allocation4 + $0x520] sm:$0xff]
    %v229 = vld [vmem:[#allocation4 + $0x528] sm:$0xff]
    %v230 = vld [vmem:[#allocation4 + $0x530] sm:$0xff]
    %v231 = vld [vmem:[#allocation4 + $0x538] sm:$0xff]
    %v232 = vld [vmem:[#allocation4 + $0x540] sm:$0xff]
    %v233 = vld [vmem:[#allocation4 + $0x548] sm:$0xff]
    %v234 = vld [vmem:[#allocation4 + $0x550] sm:$0xff]
    %v235 = vld [vmem:[#allocation4 + $0x558] sm:$0xff]
    %v236 = vld [vmem:[#allocation4 + $0x560] sm:$0xff]
    %v237 = vld [vmem:[#allocation4 + $0x568] sm:$0xff]
    %v238 = vld [vmem:[#allocation4 + $0x570] sm:$0xff]
    %v239 = vld [vmem:[#allocation4 + $0x578] sm:$0xff]
    %v240 = vld [vmem:[#allocation4 + $0x580] sm:$0xff]
    %v241 = vld [vmem:[#allocation4 + $0x588] sm:$0xff]
    %v242 = vld [vmem:[#allocation4 + $0x590] sm:$0xff]
    %v243 = vld [vmem:[#allocation4 + $0x598] sm:$0xff]
    %v244 = vld [vmem:[#allocation4 + $0x5a0] sm:$0xff]
    %v245 = vld [vmem:[#allocation4 + $0x5a8] sm:$0xff]
    %v246 = vld [vmem:[#allocation4 + $0x5b0] sm:$0xff]
    %v247 = vld [vmem:[#allocation4 + $0x5b8] sm:$0xff]
    %v248 = vld [vmem:[#allocation4 + $0x5c0] sm:$0xff]
    %v249 = vld [vmem:[#allocation4 + $0x5c8] sm:$0xff]
    %v250 = vld [vmem:[#allocation4 + $0x5d0] sm:$0xff]
    %v251 = vld [vmem:[#allocation4 + $0x5d8] sm:$0xff]
    %v252 = vld [vmem:[#allocation4 + $0x5e0] sm:$0xff]
    %v253 = vld [vmem:[#allocation4 + $0x5e8] sm:$0xff]
    %v254 = vld [vmem:[#allocation4 + $0x5f0] sm:$0xff]
    %v255 = vld [vmem:[#allocation4 + $0x5f8] sm:$0xff]
    %v256 = vld [vmem:[#allocation4 + $0x600] sm:$0xff]
    %v257 = vld [vmem:[#allocation4 + $0x608] sm:$0xff]
    %v258 = vld [vmem:[#allocation4 + $0x610] sm:$0xff]
    %v259 = vld [vmem:[#allocation4 + $0x618] sm:$0xff]
    %v260 = vld [vmem:[#allocation4 + $0x620] sm:$0xff]
    %v261 = vld [vmem:[#allocation4 + $0x628] sm:$0xff]
    %v262 = vld [vmem:[#allocation4 + $0x630] sm:$0xff]
    %v263 = vld [vmem:[#allocation4 + $0x638] sm:$0xff]
    %v264 = vld [vmem:[#allocation4 + $0x640] sm:$0xff]
    %v265 = vld [vmem:[#allocation4 + $0x648] sm:$0xff]
    %v266 = vld [vmem:[#allocation4 + $0x650] sm:$0xff]
    %v267 = vld [vmem:[#allocation4 + $0x658] sm:$0xff]
    %v268 = vld [vmem:[#allocation4 + $0x660] sm:$0xff]
    %v269 = vld [vmem:[#allocation4 + $0x668] sm:$0xff]
    %v270 = vld [vmem:[#allocation4 + $0x670] sm:$0xff]
    %v271 = vld [vmem:[#allocation4 + $0x678] sm:$0xff]
    %v272 = vld [vmem:[#allocation4 + $0x680] sm:$0xff]
    %v273 = vld [vmem:[#allocation4 + $0x688] sm:$0xff]
    %v274 = vld [vmem:[#allocation4 + $0x690] sm:$0xff]
    %v275 = vld [vmem:[#allocation4 + $0x698] sm:$0xff]
    %v276 = vld [vmem:[#allocation4 + $0x6a0] sm:$0xff]
    %v277 = vld [vmem:[#allocation4 + $0x6a8] sm:$0xff]
    %v278 = vld [vmem:[#allocation4 + $0x6b0] sm:$0xff]
    %v279 = vld [vmem:[#allocation4 + $0x6b8] sm:$0xff]
    %v280 = vld [vmem:[#allocation4 + $0x6c0] sm:$0xff]
    %v281 = vld [vmem:[#allocation4 + $0x6c8] sm:$0xff]
    %v282 = vld [vmem:[#allocation4 + $0x6d0] sm:$0xff]
    %v283 = vld [vmem:[#allocation4 + $0x6d8] sm:$0xff]
    %v284 = vld [vmem:[#allocation4 + $0x6e0] sm:$0xff]
    %v285 = vld [vmem:[#allocation4 + $0x6e8] sm:$0xff]
    %v286 = vld [vmem:[#allocation4 + $0x6f0] sm:$0xff]
    %v287 = vld [vmem:[#allocation4 + $0x6f8] sm:$0xff]
    %v288 = vld [vmem:[#allocation4 + $0x700] sm:$0xff]
    %v289 = vld [vmem:[#allocation4 + $0x708] sm:$0xff]
    %v290 = vld [vmem:[#allocation4 + $0x710] sm:$0xff]
    %v291 = vld [vmem:[#allocation4 + $0x718] sm:$0xff]
    %v292 = vld [vmem:[#allocation4 + $0x720] sm:$0xff]
    %v293 = vld [vmem:[#allocation4 + $0x728] sm:$0xff]
    %v294 = vld [vmem:[#allocation4 + $0x730] sm:$0xff]
    %v295 = vld [vmem:[#allocation4 + $0x738] sm:$0xff]
    %v296 = vld [vmem:[#allocation4 + $0x740] sm:$0xff]
    %v297 = vld [vmem:[#allocation4 + $0x748] sm:$0xff]
    %v298 = vld [vmem:[#allocation4 + $0x750] sm:$0xff]
    %v299 = vld [vmem:[#allocation4 + $0x758] sm:$0xff]
    %v300 = vld [vmem:[#allocation4 + $0x760] sm:$0xff]
    %v301 = vld [vmem:[#allocation4 + $0x768] sm:$0xff]
    %v302 = vld [vmem:[#allocation4 + $0x770] sm:$0xff]
    %v303 = vld [vmem:[#allocation4 + $0x778] sm:$0xff]
    %v304 = vld [vmem:[#allocation4 + $0x780] sm:$0xff]
    %v305 = vld [vmem:[#allocation4 + $0x788] sm:$0xff]
    %v306 = vld [vmem:[#allocation4 + $0x790] sm:$0xff]
    %v307 = vld [vmem:[#allocation4 + $0x798] sm:$0xff]
    %v308 = vld [vmem:[#allocation4 + $0x7a0] sm:$0xff]
    %v309 = vld [vmem:[#allocation4 + $0x7a8] sm:$0xff]
    %v310 = vld [vmem:[#allocation4 + $0x7b0] sm:$0xff]
    %v311 = vld [vmem:[#allocation4 + $0x7b8] sm:$0xff]
    %v312 = vld [vmem:[#allocation4 + $0x7c0] sm:$0xff]
    %v313 = vld [vmem:[#allocation4 + $0x7c8] sm:$0xff]
    %v314 = vld [vmem:[#allocation4 + $0x7d0] sm:$0xff]
    %v315 = vld [vmem:[#allocation4 + $0x7d8] sm:$0xff]
    %v316 = vld [vmem:[#allocation4 + $0x7e0] sm:$0xff]
    %v317 = vld [vmem:[#allocation4 + $0x7e8] sm:$0xff]
    %v318 = vld [vmem:[#allocation4 + $0x7f0] sm:$0xff]
    %v319 = vld [vmem:[#allocation4 + $0x7f8] sm:$0xff]
    %v320 = vld [vmem:[#allocation4 + $0x800] sm:$0xff]
    %v321 = vld [vmem:[#allocation4 + $0x808] sm:$0xff]
    %v322 = vld [vmem:[#allocation4 + $0x810] sm:$0xff]
    %v323 = vld [vmem:[#allocation4 + $0x818] sm:$0xff]
    %v324 = vld [vmem:[#allocation4 + $0x820] sm:$0xff]
    %v325 = vld [vmem:[#allocation4 + $0x828] sm:$0xff]
    %v326 = vld [vmem:[#allocation4 + $0x830] sm:$0xff]
    %v327 = vld [vmem:[#allocation4 + $0x838] sm:$0xff]
    %v328 = vld [vmem:[#allocation4 + $0x840] sm:$0xff]
    %v329 = vld [vmem:[#allocation4 + $0x848] sm:$0xff]
    %v330 = vld [vmem:[#allocation4 + $0x850] sm:$0xff]
    %v331 = vld [vmem:[#allocation4 + $0x858] sm:$0xff]
    %v332 = vld [vmem:[#allocation4 + $0x860] sm:$0xff]
    %v333 = vld [vmem:[#allocation4 + $0x868] sm:$0xff]
    %v334 = vld [vmem:[#allocation4 + $0x870] sm:$0xff]
    %v335 = vld [vmem:[#allocation4 + $0x878] sm:$0xff]
    %v336 = vld [vmem:[#allocation4 + $0x880] sm:$0xff]
    %v337 = vld [vmem:[#allocation4 + $0x888] sm:$0xff]
    %v338 = vld [vmem:[#allocation4 + $0x890] sm:$0xff]
    %v339 = vld [vmem:[#allocation4 + $0x898] sm:$0xff]
    %v340 = vld [vmem:[#allocation4 + $0x8a0] sm:$0xff]
    %v341 = vld [vmem:[#allocation4 + $0x8a8] sm:$0xff]
    %v342 = vld [vmem:[#allocation4 + $0x8b0] sm:$0xff]
    %v343 = vld [vmem:[#allocation4 + $0x8b8] sm:$0xff]
    %v344 = vld [vmem:[#allocation4 + $0x8c0] sm:$0xff]
    %v345 = vld [vmem:[#allocation4 + $0x8c8] sm:$0xff]
    %v346 = vld [vmem:[#allocation4 + $0x8d0] sm:$0xff]
    %v347 = vld [vmem:[#allocation4 + $0x8d8] sm:$0xff]
    %v348 = vld [vmem:[#allocation4 + $0x8e0] sm:$0xff]
    %v349 = vld [vmem:[#allocation4 + $0x8e8] sm:$0xff]
    %v350 = vld [vmem:[#allocation4 + $0x8f0] sm:$0xff]
    %v351 = vld [vmem:[#allocation4 + $0x8f8] sm:$0xff]
    %v352 = vld [vmem:[#allocation4 + $0x900] sm:$0xff]
    %v353 = vld [vmem:[#allocation4 + $0x908] sm:$0xff]
    %v354 = vld [vmem:[#allocation4 + $0x910] sm:$0xff]
    %v355 = vld [vmem:[#allocation4 + $0x918] sm:$0xff]
    %v356 = vld [vmem:[#allocation4 + $0x920] sm:$0xff]
    %v357 = vld [vmem:[#allocation4 + $0x928] sm:$0xff]
    %v358 = vld [vmem:[#allocation4 + $0x930] sm:$0xff]
    %v359 = vld [vmem:[#allocation4 + $0x938] sm:$0xff]
    %v360 = vld [vmem:[#allocation4 + $0x940] sm:$0xff]
    %v361 = vld [vmem:[#allocation4 + $0x948] sm:$0xff]
    %v362 = vld [vmem:[#allocation4 + $0x950] sm:$0xff]
    %v363 = vld [vmem:[#allocation4 + $0x958] sm:$0xff]
    %v364 = vld [vmem:[#allocation4 + $0x960] sm:$0xff]
    %v365 = vld [vmem:[#allocation4 + $0x968] sm:$0xff]
    %v366 = vld [vmem:[#allocation4 + $0x970] sm:$0xff]
    %v367 = vld [vmem:[#allocation4 + $0x978] sm:$0xff]
    %v368 = vld [vmem:[#allocation4 + $0x980] sm:$0xff]
    %v369 = vld [vmem:[#allocation4 + $0x988] sm:$0xff]
    %v370 = vld [vmem:[#allocation4 + $0x990] sm:$0xff]
    %v371 = vld [vmem:[#allocation4 + $0x998] sm:$0xff]
    %v372 = vld [vmem:[#allocation4 + $0x9a0] sm:$0xff]
    %v373 = vld [vmem:[#allocation4 + $0x9a8] sm:$0xff]
    %v374 = vld [vmem:[#allocation4 + $0x9b0] sm:$0xff]
    %v375 = vld [vmem:[#allocation4 + $0x9b8] sm:$0xff]
    %v376 = vld [vmem:[#allocation4 + $0x9c0] sm:$0xff]
    %v377 = vld [vmem:[#allocation4 + $0x9c8] sm:$0xff]
    %v378 = vld [vmem:[#allocation4 + $0x9d0] sm:$0xff]
    %v379 = vld [vmem:[#allocation4 + $0x9d8] sm:$0xff]
    %v380 = vld [vmem:[#allocation4 + $0x9e0] sm:$0xff]
    %v381 = vld [vmem:[#allocation4 + $0x9e8] sm:$0xff]
    %v382 = vld [vmem:[#allocation4 + $0x9f0] sm:$0xff]
    %v383 = vld [vmem:[#allocation4 + $0x9f8] sm:$0xff]
    %v384 = vld [vmem:[#allocation4 + $0xa00] sm:$0xff]
    %v385 = vld [vmem:[#allocation4 + $0xa08] sm:$0xff]
    %v386 = vld [vmem:[#allocation4 + $0xa10] sm:$0xff]
    %v387 = vld [vmem:[#allocation4 + $0xa18] sm:$0xff]
    %v388 = vld [vmem:[#allocation4 + $0xa20] sm:$0xff]
    %v389 = vld [vmem:[#allocation4 + $0xa28] sm:$0xff]
    %v390 = vld [vmem:[#allocation4 + $0xa30] sm:$0xff]
    %v391 = vld [vmem:[#allocation4 + $0xa38] sm:$0xff]
    %v392 = vld [vmem:[#allocation4 + $0xa40] sm:$0xff]
    %v393 = vld [vmem:[#allocation4 + $0xa48] sm:$0xff]
    %v394 = vld [vmem:[#allocation4 + $0xa50] sm:$0xff]
    %v395 = vld [vmem:[#allocation4 + $0xa58] sm:$0xff]
    %v396 = vld [vmem:[#allocation4 + $0xa60] sm:$0xff]
    %v397 = vld [vmem:[#allocation4 + $0xa68] sm:$0xff]
    %v398 = vld [vmem:[#allocation4 + $0xa70] sm:$0xff]
    %v399 = vld [vmem:[#allocation4 + $0xa78] sm:$0xff]
    %v400 = vld [vmem:[#allocation4 + $0xa80] sm:$0xff]
    %v401 = vld [vmem:[#allocation4 + $0xa88] sm:$0xff]
    %v402 = vld [vmem:[#allocation4 + $0xa90] sm:$0xff]
    %v403 = vld [vmem:[#allocation4 + $0xa98] sm:$0xff]
    %v404 = vld [vmem:[#allocation4 + $0xaa0] sm:$0xff]
    %v405 = vld [vmem:[#allocation4 + $0xaa8] sm:$0xff]
    %v406 = vld [vmem:[#allocation4 + $0xab0] sm:$0xff]
    %v407 = vld [vmem:[#allocation4 + $0xab8] sm:$0xff]
    %v408 = vld [vmem:[#allocation4 + $0xac0] sm:$0xff]
    %v409 = vld [vmem:[#allocation4 + $0xac8] sm:$0xff]
    %v410 = vld [vmem:[#allocation4 + $0xad0] sm:$0xff]
    %v411 = vld [vmem:[#allocation4 + $0xad8] sm:$0xff]
    %v412 = vld [vmem:[#allocation4 + $0xae0] sm:$0xff]
    %v413 = vld [vmem:[#allocation4 + $0xae8] sm:$0xff]
    %v414 = vld [vmem:[#allocation4 + $0xaf0] sm:$0xff]
    %v415 = vld [vmem:[#allocation4 + $0xaf8] sm:$0xff]
    %v416 = vld [vmem:[#allocation4 + $0xb00] sm:$0xff]
    %v417 = vld [vmem:[#allocation4 + $0xb08] sm:$0xff]
    %v418 = vld [vmem:[#allocation4 + $0xb10] sm:$0xff]
    %v419 = vld [vmem:[#allocation4 + $0xb18] sm:$0xff]
    %v420 = vld [vmem:[#allocation4 + $0xb20] sm:$0xff]
    %v421 = vld [vmem:[#allocation4 + $0xb28] sm:$0xff]
    %v422 = vld [vmem:[#allocation4 + $0xb30] sm:$0xff]
    %v423 = vld [vmem:[#allocation4 + $0xb38] sm:$0xff]
    %v424 = vld [vmem:[#allocation4 + $0xb40] sm:$0xff]
    %v425 = vld [vmem:[#allocation4 + $0xb48] sm:$0xff]
    %v426 = vld [vmem:[#allocation4 + $0xb50] sm:$0xff]
    %v427 = vld [vmem:[#allocation4 + $0xb58] sm:$0xff]
    %v428 = vld [vmem:[#allocation4 + $0xb60] sm:$0xff]
    %v429 = vld [vmem:[#allocation4 + $0xb68] sm:$0xff]
    %v430 = vld [vmem:[#allocation4 + $0xb70] sm:$0xff]
    %v431 = vld [vmem:[#allocation4 + $0xb78] sm:$0xff]
    %v432 = vld [vmem:[#allocation4 + $0xb80] sm:$0xff]
    %v433 = vld [vmem:[#allocation4 + $0xb88] sm:$0xff]
    %v434 = vld [vmem:[#allocation4 + $0xb90] sm:$0xff]
    %v435 = vld [vmem:[#allocation4 + $0xb98] sm:$0xff]
    %v436 = vld [vmem:[#allocation4 + $0xba0] sm:$0xff]
    %v437 = vld [vmem:[#allocation4 + $0xba8] sm:$0xff]
    %v438 = vld [vmem:[#allocation4 + $0xbb0] sm:$0xff]
    %v439 = vld [vmem:[#allocation4 + $0xbb8] sm:$0xff]
    %v440 = vld [vmem:[#allocation4 + $0xbc0] sm:$0xff]
    %v441 = vld [vmem:[#allocation4 + $0xbc8] sm:$0xff]
    %v442 = vld [vmem:[#allocation4 + $0xbd0] sm:$0xff]
    %v443 = vld [vmem:[#allocation4 + $0xbd8] sm:$0xff]
    %v444 = vld [vmem:[#allocation4 + $0xbe0] sm:$0xff]
    %v445 = vld [vmem:[#allocation4 + $0xbe8] sm:$0xff]
    %v446 = vld [vmem:[#allocation4 + $0xbf0] sm:$0xff]
    %v447 = vld [vmem:[#allocation4 + $0xbf8] sm:$0xff]
    %v448 = vld [vmem:[#allocation4 + $0xc00] sm:$0xff]
    %v449 = vld [vmem:[#allocation4 + $0xc08] sm:$0xff]
    %v450 = vld [vmem:[#allocation4 + $0xc10] sm:$0xff]
    %v451 = vld [vmem:[#allocation4 + $0xc18] sm:$0xff]
    %v452 = vld [vmem:[#allocation4 + $0xc20] sm:$0xff]
    %v453 = vld [vmem:[#allocation4 + $0xc28] sm:$0xff]
    %v454 = vld [vmem:[#allocation4 + $0xc30] sm:$0xff]
    %v455 = vld [vmem:[#allocation4 + $0xc38] sm:$0xff]
    %v456 = vld [vmem:[#allocation4 + $0xc40] sm:$0xff]
    %v457 = vld [vmem:[#allocation4 + $0xc48] sm:$0xff]
    %v458 = vld [vmem:[#allocation4 + $0xc50] sm:$0xff]
    %v459 = vld [vmem:[#allocation4 + $0xc58] sm:$0xff]
    %v460 = vld [vmem:[#allocation4 + $0xc60] sm:$0xff]
    %v461 = vld [vmem:[#allocation4 + $0xc68] sm:$0xff]
    %v462 = vld [vmem:[#allocation4 + $0xc70] sm:$0xff]
    %v463 = vld [vmem:[#allocation4 + $0xc78] sm:$0xff]
    %v464 = vld [vmem:[#allocation4 + $0xc80] sm:$0xff]
    %v465 = vld [vmem:[#allocation4 + $0xc88] sm:$0xff]
    %v466 = vld [vmem:[#allocation4 + $0xc90] sm:$0xff]
    %v467 = vld [vmem:[#allocation4 + $0xc98] sm:$0xff]
    %v468 = vld [vmem:[#allocation4 + $0xca0] sm:$0xff]
    %v469 = vld [vmem:[#allocation4 + $0xca8] sm:$0xff]
    %v470 = vld [vmem:[#allocation4 + $0xcb0] sm:$0xff]
    %v471 = vld [vmem:[#allocation4 + $0xcb8] sm:$0xff]
    %v472 = vld [vmem:[#allocation4 + $0xcc0] sm:$0xff]
    %v473 = vld [vmem:[#allocation4 + $0xcc8] sm:$0xff]
    %v474 = vld [vmem:[#allocation4 + $0xcd0] sm:$0xff]
    %v475 = vld [vmem:[#allocation4 + $0xcd8] sm:$0xff]
    %v476 = vld [vmem:[#allocation4 + $0xce0] sm:$0xff]
    %v477 = vld [vmem:[#allocation4 + $0xce8] sm:$0xff]
    %v478 = vld [vmem:[#allocation4 + $0xcf0] sm:$0xff]
    %v479 = vld [vmem:[#allocation4 + $0xcf8] sm:$0xff]
    %v480 = vld [vmem:[#allocation4 + $0xd00] sm:$0xff]
    %v481 = vld [vmem:[#allocation4 + $0xd08] sm:$0xff]
    %v482 = vld [vmem:[#allocation4 + $0xd10] sm:$0xff]
    %v483 = vld [vmem:[#allocation4 + $0xd18] sm:$0xff]
    %v484 = vld [vmem:[#allocation4 + $0xd20] sm:$0xff]
    %v485 = vld [vmem:[#allocation4 + $0xd28] sm:$0xff]
    %v486 = vld [vmem:[#allocation4 + $0xd30] sm:$0xff]
    %v487 = vld [vmem:[#allocation4 + $0xd38] sm:$0xff]
    %v488 = vld [vmem:[#allocation4 + $0xd40] sm:$0xff]
    %v489 = vld [vmem:[#allocation4 + $0xd48] sm:$0xff]
    %v490 = vld [vmem:[#allocation4 + $0xd50] sm:$0xff]
    %v491 = vld [vmem:[#allocation4 + $0xd58] sm:$0xff]
    %v492 = vld [vmem:[#allocation4 + $0xd60] sm:$0xff]
    %v493 = vld [vmem:[#allocation4 + $0xd68] sm:$0xff]
    %v494 = vld [vmem:[#allocation4 + $0xd70] sm:$0xff]
    %v495 = vld [vmem:[#allocation4 + $0xd78] sm:$0xff]
    %v496 = vld [vmem:[#allocation4 + $0xd80] sm:$0xff]
    %v497 = vld [vmem:[#allocation4 + $0xd88] sm:$0xff]
    %v498 = vld [vmem:[#allocation4 + $0xd90] sm:$0xff]
    %v499 = vld [vmem:[#allocation4 + $0xd98] sm:$0xff]
    %v500 = vld [vmem:[#allocation4 + $0xda0] sm:$0xff]
    %v501 = vld [vmem:[#allocation4 + $0xda8] sm:$0xff]
    %v502 = vld [vmem:[#allocation4 + $0xdb0] sm:$0xff]
    %v503 = vld [vmem:[#allocation4 + $0xdb8] sm:$0xff]
    %v504 = vld [vmem:[#allocation4 + $0xdc0] sm:$0xff]
    %v505 = vld [vmem:[#allocation4 + $0xdc8] sm:$0xff]
    %v506 = vld [vmem:[#allocation4 + $0xdd0] sm:$0xff]
    %v507 = vld [vmem:[#allocation4 + $0xdd8] sm:$0xff]
    %v508 = vld [vmem:[#allocation4 + $0xde0] sm:$0xff]
    %v509 = vld [vmem:[#allocation4 + $0xde8] sm:$0xff]
    %v510 = vld [vmem:[#allocation4 + $0xdf0] sm:$0xff]
    %v511 = vld [vmem:[#allocation4 + $0xdf8] sm:$0xff]
    %v512 = vld [vmem:[#allocation4 + $0xe00] sm:$0xff]
    %v513 = vld [vmem:[#allocation4 + $0xe08] sm:$0xff]
    %v514 = vld [vmem:[#allocation4 + $0xe10] sm:$0xff]
    %v515 = vld [vmem:[#allocation4 + $0xe18] sm:$0xff]
    %v516 = vld [vmem:[#allocation4 + $0xe20] sm:$0xff]
    %v517 = vld [vmem:[#allocation4 + $0xe28] sm:$0xff]
    %v518 = vld [vmem:[#allocation4 + $0xe30] sm:$0xff]
    %v519 = vld [vmem:[#allocation4 + $0xe38] sm:$0xff]
    %v520 = vld [vmem:[#allocation4 + $0xe40] sm:$0xff]
    %v521 = vld [vmem:[#allocation4 + $0xe48] sm:$0xff]
    %v522 = vld [vmem:[#allocation4 + $0xe50] sm:$0xff]
    %v523 = vld [vmem:[#allocation4 + $0xe58] sm:$0xff]
    %v524 = vld [vmem:[#allocation4 + $0xe60] sm:$0xff]
    %v525 = vld [vmem:[#allocation4 + $0xe68] sm:$0xff]
    %v526 = vld [vmem:[#allocation4 + $0xe70] sm:$0xff]
    %v527 = vld [vmem:[#allocation4 + $0xe78] sm:$0xff]
    %v528 = vld [vmem:[#allocation4 + $0xe80] sm:$0xff]
    %v529 = vld [vmem:[#allocation4 + $0xe88] sm:$0xff]
    %v530 = vld [vmem:[#allocation4 + $0xe90] sm:$0xff]
    %v531 = vld [vmem:[#allocation4 + $0xe98] sm:$0xff]
    %v532 = vld [vmem:[#allocation4 + $0xea0] sm:$0xff]
    %v533 = vld [vmem:[#allocation4 + $0xea8] sm:$0xff]
    %v534 = vld [vmem:[#allocation4 + $0xeb0] sm:$0xff]
    %v535 = vld [vmem:[#allocation4 + $0xeb8] sm:$0xff]
    %v536 = vld [vmem:[#allocation4 + $0xec0] sm:$0xff]
    %v537 = vld [vmem:[#allocation4 + $0xec8] sm:$0xff]
    %v538 = vld [vmem:[#allocation4 + $0xed0] sm:$0xff]
    %v539 = vld [vmem:[#allocation4 + $0xed8] sm:$0xff]
    %v540 = vld [vmem:[#allocation4 + $0xee0] sm:$0xff]
    %v541 = vld [vmem:[#allocation4 + $0xee8] sm:$0xff]
    %v542 = vld [vmem:[#allocation4 + $0xef0] sm:$0xff]
    %v543 = vld [vmem:[#allocation4 + $0xef8] sm:$0xff]
    %v544 = vld [vmem:[#allocation4 + $0xf00] sm:$0xff]
    %v545 = vld [vmem:[#allocation4 + $0xf08] sm:$0xff]
    %v546 = vld [vmem:[#allocation4 + $0xf10] sm:$0xff]
    %v547 = vld [vmem:[#allocation4 + $0xf18] sm:$0xff]
    %v548 = vld [vmem:[#allocation4 + $0xf20] sm:$0xff]
    %v549 = vld [vmem:[#allocation4 + $0xf28] sm:$0xff]
    %v550 = vld [vmem:[#allocation4 + $0xf30] sm:$0xff]
    %v551 = vld [vmem:[#allocation4 + $0xf38] sm:$0xff]
    %v552 = vld [vmem:[#allocation4 + $0xf40] sm:$0xff]
    %v553 = vld [vmem:[#allocation4 + $0xf48] sm:$0xff]
    %v554 = vld [vmem:[#allocation4 + $0xf50] sm:$0xff]
    %v555 = vld [vmem:[#allocation4 + $0xf58] sm:$0xff]
    %v556 = vld [vmem:[#allocation4 + $0xf60] sm:$0xff]
    %v557 = vld [vmem:[#allocation4 + $0xf68] sm:$0xff]
    %v558 = vld [vmem:[#allocation4 + $0xf70] sm:$0xff]
    %v559 = vld [vmem:[#allocation4 + $0xf78] sm:$0xff]
    %v560 = vld [vmem:[#allocation4 + $0xf80] sm:$0xff]
    %v561 = vld [vmem:[#allocation4 + $0xf88] sm:$0xff]
    %v562 = vld [vmem:[#allocation4 + $0xf90] sm:$0xff]
    %v563 = vld [vmem:[#allocation4 + $0xf98] sm:$0xff]
    %v564 = vld [vmem:[#allocation4 + $0xfa0] sm:$0xff]
    %v565 = vld [vmem:[#allocation4 + $0xfa8] sm:$0xff]
    %v566 = vld [vmem:[#allocation4 + $0xfb0] sm:$0xff]
    %v567 = vld [vmem:[#allocation4 + $0xfb8] sm:$0xff]
    %v568 = vld [vmem:[#allocation4 + $0xfc0] sm:$0xff]
    %v569 = vld [vmem:[#allocation4 + $0xfc8] sm:$0xff]
    %v570 = vld [vmem:[#allocation4 + $0xfd0] sm:$0xff]
    %v571 = vld [vmem:[#allocation4 + $0xfd8] sm:$0xff]
    %v572 = vld [vmem:[#allocation4 + $0xfe0] sm:$0xff]
    %v573 = vld [vmem:[#allocation4 + $0xfe8] sm:$0xff]
    %v574 = vld [vmem:[#allocation4 + $0xff0] sm:$0xff]
    %v575 = vld [vmem:[#allocation4 + $0xff8] sm:$0xff]
    %v576 = vld [vmem:[#allocation6] sm:$0xff]
    %v577 = vld [vmem:[#allocation6 + $0x8] sm:$0xff]
    %v578 = vld [vmem:[#allocation6 + $0x10] sm:$0xff]
    %v579 = vld [vmem:[#allocation6 + $0x18] sm:$0xff]
    %v580 = vld [vmem:[#allocation6 + $0x20] sm:$0xff]
    %v581 = vld [vmem:[#allocation6 + $0x28] sm:$0xff]
    %v582 = vld [vmem:[#allocation6 + $0x30] sm:$0xff]
    %v583 = vld [vmem:[#allocation6 + $0x38] sm:$0xff]
    %v592 = vlaneseq
    %v593 = vshrl.u32 %v592, 7
    %v594 = vsub.s32 0, %v593
    %v595 = vrot.slane %v576, %v594
    %v596 = vlaneseq
    %v597 = vshrl.u32 %v596, 7
    %v598 = vsub.s32 1, %v597
    %v599 = vrot.slane %v576, %v598
    %v600 = vlaneseq
    %v601 = vshrl.u32 %v600, 7
    %v602 = vsub.s32 2, %v601
    %v603 = vrot.slane %v576, %v602
    %v604 = vlaneseq
    %v605 = vshrl.u32 %v604, 7
    %v606 = vsub.s32 3, %v605
    %v607 = vrot.slane %v576, %v606
    %v608 = vlaneseq
    %v609 = vshrl.u32 %v608, 7
    %v610 = vsub.s32 4, %v609
    %v611 = vrot.slane %v576, %v610
    %v612 = vlaneseq
    %v613 = vshrl.u32 %v612, 7
    %v614 = vsub.s32 5, %v613
    %v615 = vrot.slane %v576, %v614
    %v616 = vlaneseq
    %v617 = vshrl.u32 %v616, 7
    %v618 = vsub.s32 6, %v617
    %v619 = vrot.slane %v576, %v618
    %v620 = vlaneseq
    %v621 = vshrl.u32 %v620, 7
    %v622 = vsub.s32 7, %v621
    %v623 = vrot.slane %v576, %v622
    %v624 = vlaneseq
    %v625 = vshrl.u32 %v624, 7
    %v626 = vsub.s32 0, %v625
    %v627 = vrot.slane %v577, %v626
    %v628 = vlaneseq
    %v629 = vshrl.u32 %v628, 7
    %v630 = vsub.s32 1, %v629
    %v631 = vrot.slane %v577, %v630
    %v632 = vlaneseq
    %v633 = vshrl.u32 %v632, 7
    %v634 = vsub.s32 2, %v633
    %v635 = vrot.slane %v577, %v634
    %v636 = vlaneseq
    %v637 = vshrl.u32 %v636, 7
    %v638 = vsub.s32 3, %v637
    %v639 = vrot.slane %v577, %v638
    %v640 = vlaneseq
    %v641 = vshrl.u32 %v640, 7
    %v642 = vsub.s32 4, %v641
    %v643 = vrot.slane %v577, %v642
    %v644 = vlaneseq
    %v645 = vshrl.u32 %v644, 7
    %v646 = vsub.s32 5, %v645
    %v647 = vrot.slane %v577, %v646
    %v648 = vlaneseq
    %v649 = vshrl.u32 %v648, 7
    %v650 = vsub.s32 6, %v649
    %v651 = vrot.slane %v577, %v650
    %v652 = vlaneseq
    %v653 = vshrl.u32 %v652, 7
    %v654 = vsub.s32 7, %v653
    %v655 = vrot.slane %v577, %v654
    %v656 = vlaneseq
    %v657 = vshrl.u32 %v656, 7
    %v658 = vsub.s32 0, %v657
    %v659 = vrot.slane %v578, %v658
    %v660 = vlaneseq
    %v661 = vshrl.u32 %v660, 7
    %v662 = vsub.s32 1, %v661
    %v663 = vrot.slane %v578, %v662
    %v664 = vlaneseq
    %v665 = vshrl.u32 %v664, 7
    %v666 = vsub.s32 2, %v665
    %v667 = vrot.slane %v578, %v666
    %v668 = vlaneseq
    %v669 = vshrl.u32 %v668, 7
    %v670 = vsub.s32 3, %v669
    %v671 = vrot.slane %v578, %v670
    %v672 = vlaneseq
    %v673 = vshrl.u32 %v672, 7
    %v674 = vsub.s32 4, %v673
    %v675 = vrot.slane %v578, %v674
    %v676 = vlaneseq
    %v677 = vshrl.u32 %v676, 7
    %v678 = vsub.s32 5, %v677
    %v679 = vrot.slane %v578, %v678
    %v680 = vlaneseq
    %v681 = vshrl.u32 %v680, 7
    %v682 = vsub.s32 6, %v681
    %v683 = vrot.slane %v578, %v682
    %v684 = vlaneseq
    %v685 = vshrl.u32 %v684, 7
    %v686 = vsub.s32 7, %v685
    %v687 = vrot.slane %v578, %v686
    %v688 = vlaneseq
    %v689 = vshrl.u32 %v688, 7
    %v690 = vsub.s32 0, %v689
    %v691 = vrot.slane %v579, %v690
    %v692 = vlaneseq
    %v693 = vshrl.u32 %v692, 7
    %v694 = vsub.s32 1, %v693
    %v695 = vrot.slane %v579, %v694
    %v696 = vlaneseq
    %v697 = vshrl.u32 %v696, 7
    %v698 = vsub.s32 2, %v697
    %v699 = vrot.slane %v579, %v698
    %v700 = vlaneseq
    %v701 = vshrl.u32 %v700, 7
    %v702 = vsub.s32 3, %v701
    %v703 = vrot.slane %v579, %v702
    %v704 = vlaneseq
    %v705 = vshrl.u32 %v704, 7
    %v706 = vsub.s32 4, %v705
    %v707 = vrot.slane %v579, %v706
    %v708 = vlaneseq
    %v709 = vshrl.u32 %v708, 7
    %v710 = vsub.s32 5, %v709
    %v711 = vrot.slane %v579, %v710
    %v712 = vlaneseq
    %v713 = vshrl.u32 %v712, 7
    %v714 = vsub.s32 6, %v713
    %v715 = vrot.slane %v579, %v714
    %v716 = vlaneseq
    %v717 = vshrl.u32 %v716, 7
    %v718 = vsub.s32 7, %v717
    %v719 = vrot.slane %v579, %v718
    %v720 = vlaneseq
    %v721 = vshrl.u32 %v720, 7
    %v722 = vsub.s32 0, %v721
    %v723 = vrot.slane %v580, %v722
    %v724 = vlaneseq
    %v725 = vshrl.u32 %v724, 7
    %v726 = vsub.s32 1, %v725
    %v727 = vrot.slane %v580, %v726
    %v728 = vlaneseq
    %v729 = vshrl.u32 %v728, 7
    %v730 = vsub.s32 2, %v729
    %v731 = vrot.slane %v580, %v730
    %v732 = vlaneseq
    %v733 = vshrl.u32 %v732, 7
    %v734 = vsub.s32 3, %v733
    %v735 = vrot.slane %v580, %v734
    %v736 = vlaneseq
    %v737 = vshrl.u32 %v736, 7
    %v738 = vsub.s32 4, %v737
    %v739 = vrot.slane %v580, %v738
    %v740 = vlaneseq
    %v741 = vshrl.u32 %v740, 7
    %v742 = vsub.s32 5, %v741
    %v743 = vrot.slane %v580, %v742
    %v744 = vlaneseq
    %v745 = vshrl.u32 %v744, 7
    %v746 = vsub.s32 6, %v745
    %v747 = vrot.slane %v580, %v746
    %v748 = vlaneseq
    %v749 = vshrl.u32 %v748, 7
    %v750 = vsub.s32 7, %v749
    %v751 = vrot.slane %v580, %v750
    %v752 = vlaneseq
    %v753 = vshrl.u32 %v752, 7
    %v754 = vsub.s32 0, %v753
    %v755 = vrot.slane %v581, %v754
    %v756 = vlaneseq
    %v757 = vshrl.u32 %v756, 7
    %v758 = vsub.s32 1, %v757
    %v759 = vrot.slane %v581, %v758
    %v760 = vlaneseq
    %v761 = vshrl.u32 %v760, 7
    %v762 = vsub.s32 2, %v761
    %v763 = vrot.slane %v581, %v762
    %v764 = vlaneseq
    %v765 = vshrl.u32 %v764, 7
    %v766 = vsub.s32 3, %v765
    %v767 = vrot.slane %v581, %v766
    %v768 = vlaneseq
    %v769 = vshrl.u32 %v768, 7
    %v770 = vsub.s32 4, %v769
    %v771 = vrot.slane %v581, %v770
    %v772 = vlaneseq
    %v773 = vshrl.u32 %v772, 7
    %v774 = vsub.s32 5, %v773
    %v775 = vrot.slane %v581, %v774
    %v776 = vlaneseq
    %v777 = vshrl.u32 %v776, 7
    %v778 = vsub.s32 6, %v777
    %v779 = vrot.slane %v581, %v778
    %v780 = vlaneseq
    %v781 = vshrl.u32 %v780, 7
    %v782 = vsub.s32 7, %v781
    %v783 = vrot.slane %v581, %v782
    %v784 = vlaneseq
    %v785 = vshrl.u32 %v784, 7
    %v786 = vsub.s32 0, %v785
    %v787 = vrot.slane %v582, %v786
    %v788 = vlaneseq
    %v789 = vshrl.u32 %v788, 7
    %v790 = vsub.s32 1, %v789
    %v791 = vrot.slane %v582, %v790
    %v792 = vlaneseq
    %v793 = vshrl.u32 %v792, 7
    %v794 = vsub.s32 2, %v793
    %v795 = vrot.slane %v582, %v794
    %v796 = vlaneseq
    %v797 = vshrl.u32 %v796, 7
    %v798 = vsub.s32 3, %v797
    %v799 = vrot.slane %v582, %v798
    %v800 = vlaneseq
    %v801 = vshrl.u32 %v800, 7
    %v802 = vsub.s32 4, %v801
    %v803 = vrot.slane %v582, %v802
    %v804 = vlaneseq
    %v805 = vshrl.u32 %v804, 7
    %v806 = vsub.s32 5, %v805
    %v807 = vrot.slane %v582, %v806
    %v808 = vlaneseq
    %v809 = vshrl.u32 %v808, 7
    %v810 = vsub.s32 6, %v809
    %v811 = vrot.slane %v582, %v810
    %v812 = vlaneseq
    %v813 = vshrl.u32 %v812, 7
    %v814 = vsub.s32 7, %v813
    %v815 = vrot.slane %v582, %v814
    %v816 = vlaneseq
    %v817 = vshrl.u32 %v816, 7
    %v818 = vsub.s32 0, %v817
    %v819 = vrot.slane %v583, %v818
    %v820 = vlaneseq
    %v821 = vshrl.u32 %v820, 7
    %v822 = vsub.s32 1, %v821
    %v823 = vrot.slane %v583, %v822
    %v824 = vlaneseq
    %v825 = vshrl.u32 %v824, 7
    %v826 = vsub.s32 2, %v825
    %v827 = vrot.slane %v583, %v826
    %v828 = vlaneseq
    %v829 = vshrl.u32 %v828, 7
    %v830 = vsub.s32 3, %v829
    %v831 = vrot.slane %v583, %v830
    %v832 = vlaneseq
    %v833 = vshrl.u32 %v832, 7
    %v834 = vsub.s32 4, %v833
    %v835 = vrot.slane %v583, %v834
    %v836 = vlaneseq
    %v837 = vshrl.u32 %v836, 7
    %v838 = vsub.s32 5, %v837
    %v839 = vrot.slane %v583, %v838
    %v840 = vlaneseq
    %v841 = vshrl.u32 %v840, 7
    %v842 = vsub.s32 6, %v841
    %v843 = vrot.slane %v583, %v842
    %v844 = vlaneseq
    %v845 = vshrl.u32 %v844, 7
    %v846 = vsub.s32 7, %v845
    %v847 = vrot.slane %v583, %v846
    %v1424 = vunpack.c.l.b16 %v64
    %v1425 = vunpack.c.h.b16 %v64
    %v1426 = vunpack.c.l.b16 %v65
    %v1427 = vunpack.c.h.b16 %v65
    %v1428 = vunpack.c.l.b16 %v66
    %v1429 = vunpack.c.h.b16 %v66
    %v1430 = vunpack.c.l.b16 %v67
    %v1431 = vunpack.c.h.b16 %v67
    %v1432 = vunpack.c.l.b16 %v68
    %v1433 = vunpack.c.h.b16 %v68
    %v1434 = vunpack.c.l.b16 %v69
    %v1435 = vunpack.c.h.b16 %v69
    %v1436 = vunpack.c.l.b16 %v70
    %v1437 = vunpack.c.h.b16 %v70
    %v1438 = vunpack.c.l.b16 %v71
    %v1439 = vunpack.c.h.b16 %v71
    %v1440 = vunpack.c.l.b16 %v72
    %v1441 = vunpack.c.h.b16 %v72
    %v1442 = vunpack.c.l.b16 %v73
    %v1443 = vunpack.c.h.b16 %v73
    %v1444 = vunpack.c.l.b16 %v74
    %v1445 = vunpack.c.h.b16 %v74
    %v1446 = vunpack.c.l.b16 %v75
    %v1447 = vunpack.c.h.b16 %v75
    %v1448 = vunpack.c.l.b16 %v76
    %v1449 = vunpack.c.h.b16 %v76
    %v1450 = vunpack.c.l.b16 %v77
    %v1451 = vunpack.c.h.b16 %v77
    %v1452 = vunpack.c.l.b16 %v78
    %v1453 = vunpack.c.h.b16 %v78
    %v1454 = vunpack.c.l.b16 %v79
    %v1455 = vunpack.c.h.b16 %v79
    %v1456 = vunpack.c.l.b16 %v80
    %v1457 = vunpack.c.h.b16 %v80
    %v1458 = vunpack.c.l.b16 %v81
    %v1459 = vunpack.c.h.b16 %v81
    %v1460 = vunpack.c.l.b16 %v82
    %v1461 = vunpack.c.h.b16 %v82
    %v1462 = vunpack.c.l.b16 %v83
    %v1463 = vunpack.c.h.b16 %v83
    %v1464 = vunpack.c.l.b16 %v84
    %v1465 = vunpack.c.h.b16 %v84
    %v1466 = vunpack.c.l.b16 %v85
    %v1467 = vunpack.c.h.b16 %v85
    %v1468 = vunpack.c.l.b16 %v86
    %v1469 = vunpack.c.h.b16 %v86
    %v1470 = vunpack.c.l.b16 %v87
    %v1471 = vunpack.c.h.b16 %v87
    %v1472 = vunpack.c.l.b16 %v88
    %v1473 = vunpack.c.h.b16 %v88
    %v1474 = vunpack.c.l.b16 %v89
    %v1475 = vunpack.c.h.b16 %v89
    %v1476 = vunpack.c.l.b16 %v90
    %v1477 = vunpack.c.h.b16 %v90
    %v1478 = vunpack.c.l.b16 %v91
    %v1479 = vunpack.c.h.b16 %v91
    %v1480 = vunpack.c.l.b16 %v92
    %v1481 = vunpack.c.h.b16 %v92
    %v1482 = vunpack.c.l.b16 %v93
    %v1483 = vunpack.c.h.b16 %v93
    %v1484 = vunpack.c.l.b16 %v94
    %v1485 = vunpack.c.h.b16 %v94
    %v1486 = vunpack.c.l.b16 %v95
    %v1487 = vunpack.c.h.b16 %v95
    %v1488 = vunpack.c.l.b16 %v96
    %v1489 = vunpack.c.h.b16 %v96
    %v1490 = vunpack.c.l.b16 %v97
    %v1491 = vunpack.c.h.b16 %v97
    %v1492 = vunpack.c.l.b16 %v98
    %v1493 = vunpack.c.h.b16 %v98
    %v1494 = vunpack.c.l.b16 %v99
    %v1495 = vunpack.c.h.b16 %v99
    %v1496 = vunpack.c.l.b16 %v100
    %v1497 = vunpack.c.h.b16 %v100
    %v1498 = vunpack.c.l.b16 %v101
    %v1499 = vunpack.c.h.b16 %v101
    %v1500 = vunpack.c.l.b16 %v102
    %v1501 = vunpack.c.h.b16 %v102
    %v1502 = vunpack.c.l.b16 %v103
    %v1503 = vunpack.c.h.b16 %v103
    %v1504 = vunpack.c.l.b16 %v104
    %v1505 = vunpack.c.h.b16 %v104
    %v1506 = vunpack.c.l.b16 %v105
    %v1507 = vunpack.c.h.b16 %v105
    %v1508 = vunpack.c.l.b16 %v106
    %v1509 = vunpack.c.h.b16 %v106
    %v1510 = vunpack.c.l.b16 %v107
    %v1511 = vunpack.c.h.b16 %v107
    %v1512 = vunpack.c.l.b16 %v108
    %v1513 = vunpack.c.h.b16 %v108
    %v1514 = vunpack.c.l.b16 %v109
    %v1515 = vunpack.c.h.b16 %v109
    %v1516 = vunpack.c.l.b16 %v110
    %v1517 = vunpack.c.h.b16 %v110
    %v1518 = vunpack.c.l.b16 %v111
    %v1519 = vunpack.c.h.b16 %v111
    %v1520 = vunpack.c.l.b16 %v112
    %v1521 = vunpack.c.h.b16 %v112
    %v1522 = vunpack.c.l.b16 %v113
    %v1523 = vunpack.c.h.b16 %v113
    %v1524 = vunpack.c.l.b16 %v114
    %v1525 = vunpack.c.h.b16 %v114
    %v1526 = vunpack.c.l.b16 %v115
    %v1527 = vunpack.c.h.b16 %v115
    %v1528 = vunpack.c.l.b16 %v116
    %v1529 = vunpack.c.h.b16 %v116
    %v1530 = vunpack.c.l.b16 %v117
    %v1531 = vunpack.c.h.b16 %v117
    %v1532 = vunpack.c.l.b16 %v118
    %v1533 = vunpack.c.h.b16 %v118
    %v1534 = vunpack.c.l.b16 %v119
    %v1535 = vunpack.c.h.b16 %v119
    %v1536 = vunpack.c.l.b16 %v120
    %v1537 = vunpack.c.h.b16 %v120
    %v1538 = vunpack.c.l.b16 %v121
    %v1539 = vunpack.c.h.b16 %v121
    %v1540 = vunpack.c.l.b16 %v122
    %v1541 = vunpack.c.h.b16 %v122
    %v1542 = vunpack.c.l.b16 %v123
    %v1543 = vunpack.c.h.b16 %v123
    %v1544 = vunpack.c.l.b16 %v124
    %v1545 = vunpack.c.h.b16 %v124
    %v1546 = vunpack.c.l.b16 %v125
    %v1547 = vunpack.c.h.b16 %v125
    %v1548 = vunpack.c.l.b16 %v126
    %v1549 = vunpack.c.h.b16 %v126
    %v1550 = vunpack.c.l.b16 %v127
    %v1551 = vunpack.c.h.b16 %v127
    %v1552 = vunpack.c.l.b16 %v128
    %v1553 = vunpack.c.h.b16 %v128
    %v1554 = vunpack.c.l.b16 %v129
    %v1555 = vunpack.c.h.b16 %v129
    %v1556 = vunpack.c.l.b16 %v130
    %v1557 = vunpack.c.h.b16 %v130
    %v1558 = vunpack.c.l.b16 %v131
    %v1559 = vunpack.c.h.b16 %v131
    %v1560 = vunpack.c.l.b16 %v132
    %v1561 = vunpack.c.h.b16 %v132
    %v1562 = vunpack.c.l.b16 %v133
    %v1563 = vunpack.c.h.b16 %v133
    %v1564 = vunpack.c.l.b16 %v134
    %v1565 = vunpack.c.h.b16 %v134
    %v1566 = vunpack.c.l.b16 %v135
    %v1567 = vunpack.c.h.b16 %v135
    %v1568 = vunpack.c.l.b16 %v136
    %v1569 = vunpack.c.h.b16 %v136
    %v1570 = vunpack.c.l.b16 %v137
    %v1571 = vunpack.c.h.b16 %v137
    %v1572 = vunpack.c.l.b16 %v138
    %v1573 = vunpack.c.h.b16 %v138
    %v1574 = vunpack.c.l.b16 %v139
    %v1575 = vunpack.c.h.b16 %v139
    %v1576 = vunpack.c.l.b16 %v140
    %v1577 = vunpack.c.h.b16 %v140
    %v1578 = vunpack.c.l.b16 %v141
    %v1579 = vunpack.c.h.b16 %v141
    %v1580 = vunpack.c.l.b16 %v142
    %v1581 = vunpack.c.h.b16 %v142
    %v1582 = vunpack.c.l.b16 %v143
    %v1583 = vunpack.c.h.b16 %v143
    %v1584 = vunpack.c.l.b16 %v144
    %v1585 = vunpack.c.h.b16 %v144
    %v1586 = vunpack.c.l.b16 %v145
    %v1587 = vunpack.c.h.b16 %v145
    %v1588 = vunpack.c.l.b16 %v146
    %v1589 = vunpack.c.h.b16 %v146
    %v1590 = vunpack.c.l.b16 %v147
    %v1591 = vunpack.c.h.b16 %v147
    %v1592 = vunpack.c.l.b16 %v148
    %v1593 = vunpack.c.h.b16 %v148
    %v1594 = vunpack.c.l.b16 %v149
    %v1595 = vunpack.c.h.b16 %v149
    %v1596 = vunpack.c.l.b16 %v150
    %v1597 = vunpack.c.h.b16 %v150
    %v1598 = vunpack.c.l.b16 %v151
    %v1599 = vunpack.c.h.b16 %v151
    %v1600 = vunpack.c.l.b16 %v152
    %v1601 = vunpack.c.h.b16 %v152
    %v1602 = vunpack.c.l.b16 %v153
    %v1603 = vunpack.c.h.b16 %v153
    %v1604 = vunpack.c.l.b16 %v154
    %v1605 = vunpack.c.h.b16 %v154
    %v1606 = vunpack.c.l.b16 %v155
    %v1607 = vunpack.c.h.b16 %v155
    %v1608 = vunpack.c.l.b16 %v156
    %v1609 = vunpack.c.h.b16 %v156
    %v1610 = vunpack.c.l.b16 %v157
    %v1611 = vunpack.c.h.b16 %v157
    %v1612 = vunpack.c.l.b16 %v158
    %v1613 = vunpack.c.h.b16 %v158
    %v1614 = vunpack.c.l.b16 %v159
    %v1615 = vunpack.c.h.b16 %v159
    %v1616 = vunpack.c.l.b16 %v160
    %v1617 = vunpack.c.h.b16 %v160
    %v1618 = vunpack.c.l.b16 %v161
    %v1619 = vunpack.c.h.b16 %v161
    %v1620 = vunpack.c.l.b16 %v162
    %v1621 = vunpack.c.h.b16 %v162
    %v1622 = vunpack.c.l.b16 %v163
    %v1623 = vunpack.c.h.b16 %v163
    %v1624 = vunpack.c.l.b16 %v164
    %v1625 = vunpack.c.h.b16 %v164
    %v1626 = vunpack.c.l.b16 %v165
    %v1627 = vunpack.c.h.b16 %v165
    %v1628 = vunpack.c.l.b16 %v166
    %v1629 = vunpack.c.h.b16 %v166
    %v1630 = vunpack.c.l.b16 %v167
    %v1631 = vunpack.c.h.b16 %v167
    %v1632 = vunpack.c.l.b16 %v168
    %v1633 = vunpack.c.h.b16 %v168
    %v1634 = vunpack.c.l.b16 %v169
    %v1635 = vunpack.c.h.b16 %v169
    %v1636 = vunpack.c.l.b16 %v170
    %v1637 = vunpack.c.h.b16 %v170
    %v1638 = vunpack.c.l.b16 %v171
    %v1639 = vunpack.c.h.b16 %v171
    %v1640 = vunpack.c.l.b16 %v172
    %v1641 = vunpack.c.h.b16 %v172
    %v1642 = vunpack.c.l.b16 %v173
    %v1643 = vunpack.c.h.b16 %v173
    %v1644 = vunpack.c.l.b16 %v174
    %v1645 = vunpack.c.h.b16 %v174
    %v1646 = vunpack.c.l.b16 %v175
    %v1647 = vunpack.c.h.b16 %v175
    %v1648 = vunpack.c.l.b16 %v176
    %v1649 = vunpack.c.h.b16 %v176
    %v1650 = vunpack.c.l.b16 %v177
    %v1651 = vunpack.c.h.b16 %v177
    %v1652 = vunpack.c.l.b16 %v178
    %v1653 = vunpack.c.h.b16 %v178
    %v1654 = vunpack.c.l.b16 %v179
    %v1655 = vunpack.c.h.b16 %v179
    %v1656 = vunpack.c.l.b16 %v180
    %v1657 = vunpack.c.h.b16 %v180
    %v1658 = vunpack.c.l.b16 %v181
    %v1659 = vunpack.c.h.b16 %v181
    %v1660 = vunpack.c.l.b16 %v182
    %v1661 = vunpack.c.h.b16 %v182
    %v1662 = vunpack.c.l.b16 %v183
    %v1663 = vunpack.c.h.b16 %v183
    %v1664 = vunpack.c.l.b16 %v184
    %v1665 = vunpack.c.h.b16 %v184
    %v1666 = vunpack.c.l.b16 %v185
    %v1667 = vunpack.c.h.b16 %v185
    %v1668 = vunpack.c.l.b16 %v186
    %v1669 = vunpack.c.h.b16 %v186
    %v1670 = vunpack.c.l.b16 %v187
    %v1671 = vunpack.c.h.b16 %v187
    %v1672 = vunpack.c.l.b16 %v188
    %v1673 = vunpack.c.h.b16 %v188
    %v1674 = vunpack.c.l.b16 %v189
    %v1675 = vunpack.c.h.b16 %v189
    %v1676 = vunpack.c.l.b16 %v190
    %v1677 = vunpack.c.h.b16 %v190
    %v1678 = vunpack.c.l.b16 %v191
    %v1679 = vunpack.c.h.b16 %v191
    %v1680 = vunpack.c.l.b16 %v192
    %v1681 = vunpack.c.h.b16 %v192
    %v1682 = vunpack.c.l.b16 %v193
    %v1683 = vunpack.c.h.b16 %v193
    %v1684 = vunpack.c.l.b16 %v194
    %v1685 = vunpack.c.h.b16 %v194
    %v1686 = vunpack.c.l.b16 %v195
    %v1687 = vunpack.c.h.b16 %v195
    %v1688 = vunpack.c.l.b16 %v196
    %v1689 = vunpack.c.h.b16 %v196
    %v1690 = vunpack.c.l.b16 %v197
    %v1691 = vunpack.c.h.b16 %v197
    %v1692 = vunpack.c.l.b16 %v198
    %v1693 = vunpack.c.h.b16 %v198
    %v1694 = vunpack.c.l.b16 %v199
    %v1695 = vunpack.c.h.b16 %v199
    %v1696 = vunpack.c.l.b16 %v200
    %v1697 = vunpack.c.h.b16 %v200
    %v1698 = vunpack.c.l.b16 %v201
    %v1699 = vunpack.c.h.b16 %v201
    %v1700 = vunpack.c.l.b16 %v202
    %v1701 = vunpack.c.h.b16 %v202
    %v1702 = vunpack.c.l.b16 %v203
    %v1703 = vunpack.c.h.b16 %v203
    %v1704 = vunpack.c.l.b16 %v204
    %v1705 = vunpack.c.h.b16 %v204
    %v1706 = vunpack.c.l.b16 %v205
    %v1707 = vunpack.c.h.b16 %v205
    %v1708 = vunpack.c.l.b16 %v206
    %v1709 = vunpack.c.h.b16 %v206
    %v1710 = vunpack.c.l.b16 %v207
    %v1711 = vunpack.c.h.b16 %v207
    %v1712 = vunpack.c.l.b16 %v208
    %v1713 = vunpack.c.h.b16 %v208
    %v1714 = vunpack.c.l.b16 %v209
    %v1715 = vunpack.c.h.b16 %v209
    %v1716 = vunpack.c.l.b16 %v210
    %v1717 = vunpack.c.h.b16 %v210
    %v1718 = vunpack.c.l.b16 %v211
    %v1719 = vunpack.c.h.b16 %v211
    %v1720 = vunpack.c.l.b16 %v212
    %v1721 = vunpack.c.h.b16 %v212
    %v1722 = vunpack.c.l.b16 %v213
    %v1723 = vunpack.c.h.b16 %v213
    %v1724 = vunpack.c.l.b16 %v214
    %v1725 = vunpack.c.h.b16 %v214
    %v1726 = vunpack.c.l.b16 %v215
    %v1727 = vunpack.c.h.b16 %v215
    %v1728 = vunpack.c.l.b16 %v216
    %v1729 = vunpack.c.h.b16 %v216
    %v1730 = vunpack.c.l.b16 %v217
    %v1731 = vunpack.c.h.b16 %v217
    %v1732 = vunpack.c.l.b16 %v218
    %v1733 = vunpack.c.h.b16 %v218
    %v1734 = vunpack.c.l.b16 %v219
    %v1735 = vunpack.c.h.b16 %v219
    %v1736 = vunpack.c.l.b16 %v220
    %v1737 = vunpack.c.h.b16 %v220
    %v1738 = vunpack.c.l.b16 %v221
    %v1739 = vunpack.c.h.b16 %v221
    %v1740 = vunpack.c.l.b16 %v222
    %v1741 = vunpack.c.h.b16 %v222
    %v1742 = vunpack.c.l.b16 %v223
    %v1743 = vunpack.c.h.b16 %v223
    %v1744 = vunpack.c.l.b16 %v224
    %v1745 = vunpack.c.h.b16 %v224
    %v1746 = vunpack.c.l.b16 %v225
    %v1747 = vunpack.c.h.b16 %v225
    %v1748 = vunpack.c.l.b16 %v226
    %v1749 = vunpack.c.h.b16 %v226
    %v1750 = vunpack.c.l.b16 %v227
    %v1751 = vunpack.c.h.b16 %v227
    %v1752 = vunpack.c.l.b16 %v228
    %v1753 = vunpack.c.h.b16 %v228
    %v1754 = vunpack.c.l.b16 %v229
    %v1755 = vunpack.c.h.b16 %v229
    %v1756 = vunpack.c.l.b16 %v230
    %v1757 = vunpack.c.h.b16 %v230
    %v1758 = vunpack.c.l.b16 %v231
    %v1759 = vunpack.c.h.b16 %v231
    %v1760 = vunpack.c.l.b16 %v232
    %v1761 = vunpack.c.h.b16 %v232
    %v1762 = vunpack.c.l.b16 %v233
    %v1763 = vunpack.c.h.b16 %v233
    %v1764 = vunpack.c.l.b16 %v234
    %v1765 = vunpack.c.h.b16 %v234
    %v1766 = vunpack.c.l.b16 %v235
    %v1767 = vunpack.c.h.b16 %v235
    %v1768 = vunpack.c.l.b16 %v236
    %v1769 = vunpack.c.h.b16 %v236
    %v1770 = vunpack.c.l.b16 %v237
    %v1771 = vunpack.c.h.b16 %v237
    %v1772 = vunpack.c.l.b16 %v238
    %v1773 = vunpack.c.h.b16 %v238
    %v1774 = vunpack.c.l.b16 %v239
    %v1775 = vunpack.c.h.b16 %v239
    %v1776 = vunpack.c.l.b16 %v240
    %v1777 = vunpack.c.h.b16 %v240
    %v1778 = vunpack.c.l.b16 %v241
    %v1779 = vunpack.c.h.b16 %v241
    %v1780 = vunpack.c.l.b16 %v242
    %v1781 = vunpack.c.h.b16 %v242
    %v1782 = vunpack.c.l.b16 %v243
    %v1783 = vunpack.c.h.b16 %v243
    %v1784 = vunpack.c.l.b16 %v244
    %v1785 = vunpack.c.h.b16 %v244
    %v1786 = vunpack.c.l.b16 %v245
    %v1787 = vunpack.c.h.b16 %v245
    %v1788 = vunpack.c.l.b16 %v246
    %v1789 = vunpack.c.h.b16 %v246
    %v1790 = vunpack.c.l.b16 %v247
    %v1791 = vunpack.c.h.b16 %v247
    %v1792 = vunpack.c.l.b16 %v248
    %v1793 = vunpack.c.h.b16 %v248
    %v1794 = vunpack.c.l.b16 %v249
    %v1795 = vunpack.c.h.b16 %v249
    %v1796 = vunpack.c.l.b16 %v250
    %v1797 = vunpack.c.h.b16 %v250
    %v1798 = vunpack.c.l.b16 %v251
    %v1799 = vunpack.c.h.b16 %v251
    %v1800 = vunpack.c.l.b16 %v252
    %v1801 = vunpack.c.h.b16 %v252
    %v1802 = vunpack.c.l.b16 %v253
    %v1803 = vunpack.c.h.b16 %v253
    %v1804 = vunpack.c.l.b16 %v254
    %v1805 = vunpack.c.h.b16 %v254
    %v1806 = vunpack.c.l.b16 %v255
    %v1807 = vunpack.c.h.b16 %v255
    %v1808 = vunpack.c.l.b16 %v256
    %v1809 = vunpack.c.h.b16 %v256
    %v1810 = vunpack.c.l.b16 %v257
    %v1811 = vunpack.c.h.b16 %v257
    %v1812 = vunpack.c.l.b16 %v258
    %v1813 = vunpack.c.h.b16 %v258
    %v1814 = vunpack.c.l.b16 %v259
    %v1815 = vunpack.c.h.b16 %v259
    %v1816 = vunpack.c.l.b16 %v260
    %v1817 = vunpack.c.h.b16 %v260
    %v1818 = vunpack.c.l.b16 %v261
    %v1819 = vunpack.c.h.b16 %v261
    %v1820 = vunpack.c.l.b16 %v262
    %v1821 = vunpack.c.h.b16 %v262
    %v1822 = vunpack.c.l.b16 %v263
    %v1823 = vunpack.c.h.b16 %v263
    %v1824 = vunpack.c.l.b16 %v264
    %v1825 = vunpack.c.h.b16 %v264
    %v1826 = vunpack.c.l.b16 %v265
    %v1827 = vunpack.c.h.b16 %v265
    %v1828 = vunpack.c.l.b16 %v266
    %v1829 = vunpack.c.h.b16 %v266
    %v1830 = vunpack.c.l.b16 %v267
    %v1831 = vunpack.c.h.b16 %v267
    %v1832 = vunpack.c.l.b16 %v268
    %v1833 = vunpack.c.h.b16 %v268
    %v1834 = vunpack.c.l.b16 %v269
    %v1835 = vunpack.c.h.b16 %v269
    %v1836 = vunpack.c.l.b16 %v270
    %v1837 = vunpack.c.h.b16 %v270
    %v1838 = vunpack.c.l.b16 %v271
    %v1839 = vunpack.c.h.b16 %v271
    %v1840 = vunpack.c.l.b16 %v272
    %v1841 = vunpack.c.h.b16 %v272
    %v1842 = vunpack.c.l.b16 %v273
    %v1843 = vunpack.c.h.b16 %v273
    %v1844 = vunpack.c.l.b16 %v274
    %v1845 = vunpack.c.h.b16 %v274
    %v1846 = vunpack.c.l.b16 %v275
    %v1847 = vunpack.c.h.b16 %v275
    %v1848 = vunpack.c.l.b16 %v276
    %v1849 = vunpack.c.h.b16 %v276
    %v1850 = vunpack.c.l.b16 %v277
    %v1851 = vunpack.c.h.b16 %v277
    %v1852 = vunpack.c.l.b16 %v278
    %v1853 = vunpack.c.h.b16 %v278
    %v1854 = vunpack.c.l.b16 %v279
    %v1855 = vunpack.c.h.b16 %v279
    %v1856 = vunpack.c.l.b16 %v280
    %v1857 = vunpack.c.h.b16 %v280
    %v1858 = vunpack.c.l.b16 %v281
    %v1859 = vunpack.c.h.b16 %v281
    %v1860 = vunpack.c.l.b16 %v282
    %v1861 = vunpack.c.h.b16 %v282
    %v1862 = vunpack.c.l.b16 %v283
    %v1863 = vunpack.c.h.b16 %v283
    %v1864 = vunpack.c.l.b16 %v284
    %v1865 = vunpack.c.h.b16 %v284
    %v1866 = vunpack.c.l.b16 %v285
    %v1867 = vunpack.c.h.b16 %v285
    %v1868 = vunpack.c.l.b16 %v286
    %v1869 = vunpack.c.h.b16 %v286
    %v1870 = vunpack.c.l.b16 %v287
    %v1871 = vunpack.c.h.b16 %v287
    %v1872 = vunpack.c.l.b16 %v288
    %v1873 = vunpack.c.h.b16 %v288
    %v1874 = vunpack.c.l.b16 %v289
    %v1875 = vunpack.c.h.b16 %v289
    %v1876 = vunpack.c.l.b16 %v290
    %v1877 = vunpack.c.h.b16 %v290
    %v1878 = vunpack.c.l.b16 %v291
    %v1879 = vunpack.c.h.b16 %v291
    %v1880 = vunpack.c.l.b16 %v292
    %v1881 = vunpack.c.h.b16 %v292
    %v1882 = vunpack.c.l.b16 %v293
    %v1883 = vunpack.c.h.b16 %v293
    %v1884 = vunpack.c.l.b16 %v294
    %v1885 = vunpack.c.h.b16 %v294
    %v1886 = vunpack.c.l.b16 %v295
    %v1887 = vunpack.c.h.b16 %v295
    %v1888 = vunpack.c.l.b16 %v296
    %v1889 = vunpack.c.h.b16 %v296
    %v1890 = vunpack.c.l.b16 %v297
    %v1891 = vunpack.c.h.b16 %v297
    %v1892 = vunpack.c.l.b16 %v298
    %v1893 = vunpack.c.h.b16 %v298
    %v1894 = vunpack.c.l.b16 %v299
    %v1895 = vunpack.c.h.b16 %v299
    %v1896 = vunpack.c.l.b16 %v300
    %v1897 = vunpack.c.h.b16 %v300
    %v1898 = vunpack.c.l.b16 %v301
    %v1899 = vunpack.c.h.b16 %v301
    %v1900 = vunpack.c.l.b16 %v302
    %v1901 = vunpack.c.h.b16 %v302
    %v1902 = vunpack.c.l.b16 %v303
    %v1903 = vunpack.c.h.b16 %v303
    %v1904 = vunpack.c.l.b16 %v304
    %v1905 = vunpack.c.h.b16 %v304
    %v1906 = vunpack.c.l.b16 %v305
    %v1907 = vunpack.c.h.b16 %v305
    %v1908 = vunpack.c.l.b16 %v306
    %v1909 = vunpack.c.h.b16 %v306
    %v1910 = vunpack.c.l.b16 %v307
    %v1911 = vunpack.c.h.b16 %v307
    %v1912 = vunpack.c.l.b16 %v308
    %v1913 = vunpack.c.h.b16 %v308
    %v1914 = vunpack.c.l.b16 %v309
    %v1915 = vunpack.c.h.b16 %v309
    %v1916 = vunpack.c.l.b16 %v310
    %v1917 = vunpack.c.h.b16 %v310
    %v1918 = vunpack.c.l.b16 %v311
    %v1919 = vunpack.c.h.b16 %v311
    %v1920 = vunpack.c.l.b16 %v312
    %v1921 = vunpack.c.h.b16 %v312
    %v1922 = vunpack.c.l.b16 %v313
    %v1923 = vunpack.c.h.b16 %v313
    %v1924 = vunpack.c.l.b16 %v314
    %v1925 = vunpack.c.h.b16 %v314
    %v1926 = vunpack.c.l.b16 %v315
    %v1927 = vunpack.c.h.b16 %v315
    %v1928 = vunpack.c.l.b16 %v316
    %v1929 = vunpack.c.h.b16 %v316
    %v1930 = vunpack.c.l.b16 %v317
    %v1931 = vunpack.c.h.b16 %v317
    %v1932 = vunpack.c.l.b16 %v318
    %v1933 = vunpack.c.h.b16 %v318
    %v1934 = vunpack.c.l.b16 %v319
    %v1935 = vunpack.c.h.b16 %v319
    %v1936 = vunpack.c.l.b16 %v320
    %v1937 = vunpack.c.h.b16 %v320
    %v1938 = vunpack.c.l.b16 %v321
    %v1939 = vunpack.c.h.b16 %v321
    %v1940 = vunpack.c.l.b16 %v322
    %v1941 = vunpack.c.h.b16 %v322
    %v1942 = vunpack.c.l.b16 %v323
    %v1943 = vunpack.c.h.b16 %v323
    %v1944 = vunpack.c.l.b16 %v324
    %v1945 = vunpack.c.h.b16 %v324
    %v1946 = vunpack.c.l.b16 %v325
    %v1947 = vunpack.c.h.b16 %v325
    %v1948 = vunpack.c.l.b16 %v326
    %v1949 = vunpack.c.h.b16 %v326
    %v1950 = vunpack.c.l.b16 %v327
    %v1951 = vunpack.c.h.b16 %v327
    %v1952 = vunpack.c.l.b16 %v328
    %v1953 = vunpack.c.h.b16 %v328
    %v1954 = vunpack.c.l.b16 %v329
    %v1955 = vunpack.c.h.b16 %v329
    %v1956 = vunpack.c.l.b16 %v330
    %v1957 = vunpack.c.h.b16 %v330
    %v1958 = vunpack.c.l.b16 %v331
    %v1959 = vunpack.c.h.b16 %v331
    %v1960 = vunpack.c.l.b16 %v332
    %v1961 = vunpack.c.h.b16 %v332
    %v1962 = vunpack.c.l.b16 %v333
    %v1963 = vunpack.c.h.b16 %v333
    %v1964 = vunpack.c.l.b16 %v334
    %v1965 = vunpack.c.h.b16 %v334
    %v1966 = vunpack.c.l.b16 %v335
    %v1967 = vunpack.c.h.b16 %v335
    %v1968 = vunpack.c.l.b16 %v336
    %v1969 = vunpack.c.h.b16 %v336
    %v1970 = vunpack.c.l.b16 %v337
    %v1971 = vunpack.c.h.b16 %v337
    %v1972 = vunpack.c.l.b16 %v338
    %v1973 = vunpack.c.h.b16 %v338
    %v1974 = vunpack.c.l.b16 %v339
    %v1975 = vunpack.c.h.b16 %v339
    %v1976 = vunpack.c.l.b16 %v340
    %v1977 = vunpack.c.h.b16 %v340
    %v1978 = vunpack.c.l.b16 %v341
    %v1979 = vunpack.c.h.b16 %v341
    %v1980 = vunpack.c.l.b16 %v342
    %v1981 = vunpack.c.h.b16 %v342
    %v1982 = vunpack.c.l.b16 %v343
    %v1983 = vunpack.c.h.b16 %v343
    %v1984 = vunpack.c.l.b16 %v344
    %v1985 = vunpack.c.h.b16 %v344
    %v1986 = vunpack.c.l.b16 %v345
    %v1987 = vunpack.c.h.b16 %v345
    %v1988 = vunpack.c.l.b16 %v346
    %v1989 = vunpack.c.h.b16 %v346
    %v1990 = vunpack.c.l.b16 %v347
    %v1991 = vunpack.c.h.b16 %v347
    %v1992 = vunpack.c.l.b16 %v348
    %v1993 = vunpack.c.h.b16 %v348
    %v1994 = vunpack.c.l.b16 %v349
    %v1995 = vunpack.c.h.b16 %v349
    %v1996 = vunpack.c.l.b16 %v350
    %v1997 = vunpack.c.h.b16 %v350
    %v1998 = vunpack.c.l.b16 %v351
    %v1999 = vunpack.c.h.b16 %v351
    %v2000 = vunpack.c.l.b16 %v352
    %v2001 = vunpack.c.h.b16 %v352
    %v2002 = vunpack.c.l.b16 %v353
    %v2003 = vunpack.c.h.b16 %v353
    %v2004 = vunpack.c.l.b16 %v354
    %v2005 = vunpack.c.h.b16 %v354
    %v2006 = vunpack.c.l.b16 %v355
    %v2007 = vunpack.c.h.b16 %v355
    %v2008 = vunpack.c.l.b16 %v356
    %v2009 = vunpack.c.h.b16 %v356
    %v2010 = vunpack.c.l.b16 %v357
    %v2011 = vunpack.c.h.b16 %v357
    %v2012 = vunpack.c.l.b16 %v358
    %v2013 = vunpack.c.h.b16 %v358
    %v2014 = vunpack.c.l.b16 %v359
    %v2015 = vunpack.c.h.b16 %v359
    %v2016 = vunpack.c.l.b16 %v360
    %v2017 = vunpack.c.h.b16 %v360
    %v2018 = vunpack.c.l.b16 %v361
    %v2019 = vunpack.c.h.b16 %v361
    %v2020 = vunpack.c.l.b16 %v362
    %v2021 = vunpack.c.h.b16 %v362
    %v2022 = vunpack.c.l.b16 %v363
    %v2023 = vunpack.c.h.b16 %v363
    %v2024 = vunpack.c.l.b16 %v364
    %v2025 = vunpack.c.h.b16 %v364
    %v2026 = vunpack.c.l.b16 %v365
    %v2027 = vunpack.c.h.b16 %v365
    %v2028 = vunpack.c.l.b16 %v366
    %v2029 = vunpack.c.h.b16 %v366
    %v2030 = vunpack.c.l.b16 %v367
    %v2031 = vunpack.c.h.b16 %v367
    %v2032 = vunpack.c.l.b16 %v368
    %v2033 = vunpack.c.h.b16 %v368
    %v2034 = vunpack.c.l.b16 %v369
    %v2035 = vunpack.c.h.b16 %v369
    %v2036 = vunpack.c.l.b16 %v370
    %v2037 = vunpack.c.h.b16 %v370
    %v2038 = vunpack.c.l.b16 %v371
    %v2039 = vunpack.c.h.b16 %v371
    %v2040 = vunpack.c.l.b16 %v372
    %v2041 = vunpack.c.h.b16 %v372
    %v2042 = vunpack.c.l.b16 %v373
    %v2043 = vunpack.c.h.b16 %v373
    %v2044 = vunpack.c.l.b16 %v374
    %v2045 = vunpack.c.h.b16 %v374
    %v2046 = vunpack.c.l.b16 %v375
    %v2047 = vunpack.c.h.b16 %v375
    %v2048 = vunpack.c.l.b16 %v376
    %v2049 = vunpack.c.h.b16 %v376
    %v2050 = vunpack.c.l.b16 %v377
    %v2051 = vunpack.c.h.b16 %v377
    %v2052 = vunpack.c.l.b16 %v378
    %v2053 = vunpack.c.h.b16 %v378
    %v2054 = vunpack.c.l.b16 %v379
    %v2055 = vunpack.c.h.b16 %v379
    %v2056 = vunpack.c.l.b16 %v380
    %v2057 = vunpack.c.h.b16 %v380
    %v2058 = vunpack.c.l.b16 %v381
    %v2059 = vunpack.c.h.b16 %v381
    %v2060 = vunpack.c.l.b16 %v382
    %v2061 = vunpack.c.h.b16 %v382
    %v2062 = vunpack.c.l.b16 %v383
    %v2063 = vunpack.c.h.b16 %v383
    %v2064 = vunpack.c.l.b16 %v384
    %v2065 = vunpack.c.h.b16 %v384
    %v2066 = vunpack.c.l.b16 %v385
    %v2067 = vunpack.c.h.b16 %v385
    %v2068 = vunpack.c.l.b16 %v386
    %v2069 = vunpack.c.h.b16 %v386
    %v2070 = vunpack.c.l.b16 %v387
    %v2071 = vunpack.c.h.b16 %v387
    %v2072 = vunpack.c.l.b16 %v388
    %v2073 = vunpack.c.h.b16 %v388
    %v2074 = vunpack.c.l.b16 %v389
    %v2075 = vunpack.c.h.b16 %v389
    %v2076 = vunpack.c.l.b16 %v390
    %v2077 = vunpack.c.h.b16 %v390
    %v2078 = vunpack.c.l.b16 %v391
    %v2079 = vunpack.c.h.b16 %v391
    %v2080 = vunpack.c.l.b16 %v392
    %v2081 = vunpack.c.h.b16 %v392
    %v2082 = vunpack.c.l.b16 %v393
    %v2083 = vunpack.c.h.b16 %v393
    %v2084 = vunpack.c.l.b16 %v394
    %v2085 = vunpack.c.h.b16 %v394
    %v2086 = vunpack.c.l.b16 %v395
    %v2087 = vunpack.c.h.b16 %v395
    %v2088 = vunpack.c.l.b16 %v396
    %v2089 = vunpack.c.h.b16 %v396
    %v2090 = vunpack.c.l.b16 %v397
    %v2091 = vunpack.c.h.b16 %v397
    %v2092 = vunpack.c.l.b16 %v398
    %v2093 = vunpack.c.h.b16 %v398
    %v2094 = vunpack.c.l.b16 %v399
    %v2095 = vunpack.c.h.b16 %v399
    %v2096 = vunpack.c.l.b16 %v400
    %v2097 = vunpack.c.h.b16 %v400
    %v2098 = vunpack.c.l.b16 %v401
    %v2099 = vunpack.c.h.b16 %v401
    %v2100 = vunpack.c.l.b16 %v402
    %v2101 = vunpack.c.h.b16 %v402
    %v2102 = vunpack.c.l.b16 %v403
    %v2103 = vunpack.c.h.b16 %v403
    %v2104 = vunpack.c.l.b16 %v404
    %v2105 = vunpack.c.h.b16 %v404
    %v2106 = vunpack.c.l.b16 %v405
    %v2107 = vunpack.c.h.b16 %v405
    %v2108 = vunpack.c.l.b16 %v406
    %v2109 = vunpack.c.h.b16 %v406
    %v2110 = vunpack.c.l.b16 %v407
    %v2111 = vunpack.c.h.b16 %v407
    %v2112 = vunpack.c.l.b16 %v408
    %v2113 = vunpack.c.h.b16 %v408
    %v2114 = vunpack.c.l.b16 %v409
    %v2115 = vunpack.c.h.b16 %v409
    %v2116 = vunpack.c.l.b16 %v410
    %v2117 = vunpack.c.h.b16 %v410
    %v2118 = vunpack.c.l.b16 %v411
    %v2119 = vunpack.c.h.b16 %v411
    %v2120 = vunpack.c.l.b16 %v412
    %v2121 = vunpack.c.h.b16 %v412
    %v2122 = vunpack.c.l.b16 %v413
    %v2123 = vunpack.c.h.b16 %v413
    %v2124 = vunpack.c.l.b16 %v414
    %v2125 = vunpack.c.h.b16 %v414
    %v2126 = vunpack.c.l.b16 %v415
    %v2127 = vunpack.c.h.b16 %v415
    %v2128 = vunpack.c.l.b16 %v416
    %v2129 = vunpack.c.h.b16 %v416
    %v2130 = vunpack.c.l.b16 %v417
    %v2131 = vunpack.c.h.b16 %v417
    %v2132 = vunpack.c.l.b16 %v418
    %v2133 = vunpack.c.h.b16 %v418
    %v2134 = vunpack.c.l.b16 %v419
    %v2135 = vunpack.c.h.b16 %v419
    %v2136 = vunpack.c.l.b16 %v420
    %v2137 = vunpack.c.h.b16 %v420
    %v2138 = vunpack.c.l.b16 %v421
    %v2139 = vunpack.c.h.b16 %v421
    %v2140 = vunpack.c.l.b16 %v422
    %v2141 = vunpack.c.h.b16 %v422
    %v2142 = vunpack.c.l.b16 %v423
    %v2143 = vunpack.c.h.b16 %v423
    %v2144 = vunpack.c.l.b16 %v424
    %v2145 = vunpack.c.h.b16 %v424
    %v2146 = vunpack.c.l.b16 %v425
    %v2147 = vunpack.c.h.b16 %v425
    %v2148 = vunpack.c.l.b16 %v426
    %v2149 = vunpack.c.h.b16 %v426
    %v2150 = vunpack.c.l.b16 %v427
    %v2151 = vunpack.c.h.b16 %v427
    %v2152 = vunpack.c.l.b16 %v428
    %v2153 = vunpack.c.h.b16 %v428
    %v2154 = vunpack.c.l.b16 %v429
    %v2155 = vunpack.c.h.b16 %v429
    %v2156 = vunpack.c.l.b16 %v430
    %v2157 = vunpack.c.h.b16 %v430
    %v2158 = vunpack.c.l.b16 %v431
    %v2159 = vunpack.c.h.b16 %v431
    %v2160 = vunpack.c.l.b16 %v432
    %v2161 = vunpack.c.h.b16 %v432
    %v2162 = vunpack.c.l.b16 %v433
    %v2163 = vunpack.c.h.b16 %v433
    %v2164 = vunpack.c.l.b16 %v434
    %v2165 = vunpack.c.h.b16 %v434
    %v2166 = vunpack.c.l.b16 %v435
    %v2167 = vunpack.c.h.b16 %v435
    %v2168 = vunpack.c.l.b16 %v436
    %v2169 = vunpack.c.h.b16 %v436
    %v2170 = vunpack.c.l.b16 %v437
    %v2171 = vunpack.c.h.b16 %v437
    %v2172 = vunpack.c.l.b16 %v438
    %v2173 = vunpack.c.h.b16 %v438
    %v2174 = vunpack.c.l.b16 %v439
    %v2175 = vunpack.c.h.b16 %v439
    %v2176 = vunpack.c.l.b16 %v440
    %v2177 = vunpack.c.h.b16 %v440
    %v2178 = vunpack.c.l.b16 %v441
    %v2179 = vunpack.c.h.b16 %v441
    %v2180 = vunpack.c.l.b16 %v442
    %v2181 = vunpack.c.h.b16 %v442
    %v2182 = vunpack.c.l.b16 %v443
    %v2183 = vunpack.c.h.b16 %v443
    %v2184 = vunpack.c.l.b16 %v444
    %v2185 = vunpack.c.h.b16 %v444
    %v2186 = vunpack.c.l.b16 %v445
    %v2187 = vunpack.c.h.b16 %v445
    %v2188 = vunpack.c.l.b16 %v446
    %v2189 = vunpack.c.h.b16 %v446
    %v2190 = vunpack.c.l.b16 %v447
    %v2191 = vunpack.c.h.b16 %v447
    %v2192 = vunpack.c.l.b16 %v448
    %v2193 = vunpack.c.h.b16 %v448
    %v2194 = vunpack.c.l.b16 %v449
    %v2195 = vunpack.c.h.b16 %v449
    %v2196 = vunpack.c.l.b16 %v450
    %v2197 = vunpack.c.h.b16 %v450
    %v2198 = vunpack.c.l.b16 %v451
    %v2199 = vunpack.c.h.b16 %v451
    %v2200 = vunpack.c.l.b16 %v452
    %v2201 = vunpack.c.h.b16 %v452
    %v2202 = vunpack.c.l.b16 %v453
    %v2203 = vunpack.c.h.b16 %v453
    %v2204 = vunpack.c.l.b16 %v454
    %v2205 = vunpack.c.h.b16 %v454
    %v2206 = vunpack.c.l.b16 %v455
    %v2207 = vunpack.c.h.b16 %v455
    %v2208 = vunpack.c.l.b16 %v456
    %v2209 = vunpack.c.h.b16 %v456
    %v2210 = vunpack.c.l.b16 %v457
    %v2211 = vunpack.c.h.b16 %v457
    %v2212 = vunpack.c.l.b16 %v458
    %v2213 = vunpack.c.h.b16 %v458
    %v2214 = vunpack.c.l.b16 %v459
    %v2215 = vunpack.c.h.b16 %v459
    %v2216 = vunpack.c.l.b16 %v460
    %v2217 = vunpack.c.h.b16 %v460
    %v2218 = vunpack.c.l.b16 %v461
    %v2219 = vunpack.c.h.b16 %v461
    %v2220 = vunpack.c.l.b16 %v462
    %v2221 = vunpack.c.h.b16 %v462
    %v2222 = vunpack.c.l.b16 %v463
    %v2223 = vunpack.c.h.b16 %v463
    %v2224 = vunpack.c.l.b16 %v464
    %v2225 = vunpack.c.h.b16 %v464
    %v2226 = vunpack.c.l.b16 %v465
    %v2227 = vunpack.c.h.b16 %v465
    %v2228 = vunpack.c.l.b16 %v466
    %v2229 = vunpack.c.h.b16 %v466
    %v2230 = vunpack.c.l.b16 %v467
    %v2231 = vunpack.c.h.b16 %v467
    %v2232 = vunpack.c.l.b16 %v468
    %v2233 = vunpack.c.h.b16 %v468
    %v2234 = vunpack.c.l.b16 %v469
    %v2235 = vunpack.c.h.b16 %v469
    %v2236 = vunpack.c.l.b16 %v470
    %v2237 = vunpack.c.h.b16 %v470
    %v2238 = vunpack.c.l.b16 %v471
    %v2239 = vunpack.c.h.b16 %v471
    %v2240 = vunpack.c.l.b16 %v472
    %v2241 = vunpack.c.h.b16 %v472
    %v2242 = vunpack.c.l.b16 %v473
    %v2243 = vunpack.c.h.b16 %v473
    %v2244 = vunpack.c.l.b16 %v474
    %v2245 = vunpack.c.h.b16 %v474
    %v2246 = vunpack.c.l.b16 %v475
    %v2247 = vunpack.c.h.b16 %v475
    %v2248 = vunpack.c.l.b16 %v476
    %v2249 = vunpack.c.h.b16 %v476
    %v2250 = vunpack.c.l.b16 %v477
    %v2251 = vunpack.c.h.b16 %v477
    %v2252 = vunpack.c.l.b16 %v478
    %v2253 = vunpack.c.h.b16 %v478
    %v2254 = vunpack.c.l.b16 %v479
    %v2255 = vunpack.c.h.b16 %v479
    %v2256 = vunpack.c.l.b16 %v480
    %v2257 = vunpack.c.h.b16 %v480
    %v2258 = vunpack.c.l.b16 %v481
    %v2259 = vunpack.c.h.b16 %v481
    %v2260 = vunpack.c.l.b16 %v482
    %v2261 = vunpack.c.h.b16 %v482
    %v2262 = vunpack.c.l.b16 %v483
    %v2263 = vunpack.c.h.b16 %v483
    %v2264 = vunpack.c.l.b16 %v484
    %v2265 = vunpack.c.h.b16 %v484
    %v2266 = vunpack.c.l.b16 %v485
    %v2267 = vunpack.c.h.b16 %v485
    %v2268 = vunpack.c.l.b16 %v486
    %v2269 = vunpack.c.h.b16 %v486
    %v2270 = vunpack.c.l.b16 %v487
    %v2271 = vunpack.c.h.b16 %v487
    %v2272 = vunpack.c.l.b16 %v488
    %v2273 = vunpack.c.h.b16 %v488
    %v2274 = vunpack.c.l.b16 %v489
    %v2275 = vunpack.c.h.b16 %v489
    %v2276 = vunpack.c.l.b16 %v490
    %v2277 = vunpack.c.h.b16 %v490
    %v2278 = vunpack.c.l.b16 %v491
    %v2279 = vunpack.c.h.b16 %v491
    %v2280 = vunpack.c.l.b16 %v492
    %v2281 = vunpack.c.h.b16 %v492
    %v2282 = vunpack.c.l.b16 %v493
    %v2283 = vunpack.c.h.b16 %v493
    %v2284 = vunpack.c.l.b16 %v494
    %v2285 = vunpack.c.h.b16 %v494
    %v2286 = vunpack.c.l.b16 %v495
    %v2287 = vunpack.c.h.b16 %v495
    %v2288 = vunpack.c.l.b16 %v496
    %v2289 = vunpack.c.h.b16 %v496
    %v2290 = vunpack.c.l.b16 %v497
    %v2291 = vunpack.c.h.b16 %v497
    %v2292 = vunpack.c.l.b16 %v498
    %v2293 = vunpack.c.h.b16 %v498
    %v2294 = vunpack.c.l.b16 %v499
    %v2295 = vunpack.c.h.b16 %v499
    %v2296 = vunpack.c.l.b16 %v500
    %v2297 = vunpack.c.h.b16 %v500
    %v2298 = vunpack.c.l.b16 %v501
    %v2299 = vunpack.c.h.b16 %v501
    %v2300 = vunpack.c.l.b16 %v502
    %v2301 = vunpack.c.h.b16 %v502
    %v2302 = vunpack.c.l.b16 %v503
    %v2303 = vunpack.c.h.b16 %v503
    %v2304 = vunpack.c.l.b16 %v504
    %v2305 = vunpack.c.h.b16 %v504
    %v2306 = vunpack.c.l.b16 %v505
    %v2307 = vunpack.c.h.b16 %v505
    %v2308 = vunpack.c.l.b16 %v506
    %v2309 = vunpack.c.h.b16 %v506
    %v2310 = vunpack.c.l.b16 %v507
    %v2311 = vunpack.c.h.b16 %v507
    %v2312 = vunpack.c.l.b16 %v508
    %v2313 = vunpack.c.h.b16 %v508
    %v2314 = vunpack.c.l.b16 %v509
    %v2315 = vunpack.c.h.b16 %v509
    %v2316 = vunpack.c.l.b16 %v510
    %v2317 = vunpack.c.h.b16 %v510
    %v2318 = vunpack.c.l.b16 %v511
    %v2319 = vunpack.c.h.b16 %v511
    %v2320 = vunpack.c.l.b16 %v512
    %v2321 = vunpack.c.h.b16 %v512
    %v2322 = vunpack.c.l.b16 %v513
    %v2323 = vunpack.c.h.b16 %v513
    %v2324 = vunpack.c.l.b16 %v514
    %v2325 = vunpack.c.h.b16 %v514
    %v2326 = vunpack.c.l.b16 %v515
    %v2327 = vunpack.c.h.b16 %v515
    %v2328 = vunpack.c.l.b16 %v516
    %v2329 = vunpack.c.h.b16 %v516
    %v2330 = vunpack.c.l.b16 %v517
    %v2331 = vunpack.c.h.b16 %v517
    %v2332 = vunpack.c.l.b16 %v518
    %v2333 = vunpack.c.h.b16 %v518
    %v2334 = vunpack.c.l.b16 %v519
    %v2335 = vunpack.c.h.b16 %v519
    %v2336 = vunpack.c.l.b16 %v520
    %v2337 = vunpack.c.h.b16 %v520
    %v2338 = vunpack.c.l.b16 %v521
    %v2339 = vunpack.c.h.b16 %v521
    %v2340 = vunpack.c.l.b16 %v522
    %v2341 = vunpack.c.h.b16 %v522
    %v2342 = vunpack.c.l.b16 %v523
    %v2343 = vunpack.c.h.b16 %v523
    %v2344 = vunpack.c.l.b16 %v524
    %v2345 = vunpack.c.h.b16 %v524
    %v2346 = vunpack.c.l.b16 %v525
    %v2347 = vunpack.c.h.b16 %v525
    %v2348 = vunpack.c.l.b16 %v526
    %v2349 = vunpack.c.h.b16 %v526
    %v2350 = vunpack.c.l.b16 %v527
    %v2351 = vunpack.c.h.b16 %v527
    %v2352 = vunpack.c.l.b16 %v528
    %v2353 = vunpack.c.h.b16 %v528
    %v2354 = vunpack.c.l.b16 %v529
    %v2355 = vunpack.c.h.b16 %v529
    %v2356 = vunpack.c.l.b16 %v530
    %v2357 = vunpack.c.h.b16 %v530
    %v2358 = vunpack.c.l.b16 %v531
    %v2359 = vunpack.c.h.b16 %v531
    %v2360 = vunpack.c.l.b16 %v532
    %v2361 = vunpack.c.h.b16 %v532
    %v2362 = vunpack.c.l.b16 %v533
    %v2363 = vunpack.c.h.b16 %v533
    %v2364 = vunpack.c.l.b16 %v534
    %v2365 = vunpack.c.h.b16 %v534
    %v2366 = vunpack.c.l.b16 %v535
    %v2367 = vunpack.c.h.b16 %v535
    %v2368 = vunpack.c.l.b16 %v536
    %v2369 = vunpack.c.h.b16 %v536
    %v2370 = vunpack.c.l.b16 %v537
    %v2371 = vunpack.c.h.b16 %v537
    %v2372 = vunpack.c.l.b16 %v538
    %v2373 = vunpack.c.h.b16 %v538
    %v2374 = vunpack.c.l.b16 %v539
    %v2375 = vunpack.c.h.b16 %v539
    %v2376 = vunpack.c.l.b16 %v540
    %v2377 = vunpack.c.h.b16 %v540
    %v2378 = vunpack.c.l.b16 %v541
    %v2379 = vunpack.c.h.b16 %v541
    %v2380 = vunpack.c.l.b16 %v542
    %v2381 = vunpack.c.h.b16 %v542
    %v2382 = vunpack.c.l.b16 %v543
    %v2383 = vunpack.c.h.b16 %v543
    %v2384 = vunpack.c.l.b16 %v544
    %v2385 = vunpack.c.h.b16 %v544
    %v2386 = vunpack.c.l.b16 %v545
    %v2387 = vunpack.c.h.b16 %v545
    %v2388 = vunpack.c.l.b16 %v546
    %v2389 = vunpack.c.h.b16 %v546
    %v2390 = vunpack.c.l.b16 %v547
    %v2391 = vunpack.c.h.b16 %v547
    %v2392 = vunpack.c.l.b16 %v548
    %v2393 = vunpack.c.h.b16 %v548
    %v2394 = vunpack.c.l.b16 %v549
    %v2395 = vunpack.c.h.b16 %v549
    %v2396 = vunpack.c.l.b16 %v550
    %v2397 = vunpack.c.h.b16 %v550
    %v2398 = vunpack.c.l.b16 %v551
    %v2399 = vunpack.c.h.b16 %v551
    %v2400 = vunpack.c.l.b16 %v552
    %v2401 = vunpack.c.h.b16 %v552
    %v2402 = vunpack.c.l.b16 %v553
    %v2403 = vunpack.c.h.b16 %v553
    %v2404 = vunpack.c.l.b16 %v554
    %v2405 = vunpack.c.h.b16 %v554
    %v2406 = vunpack.c.l.b16 %v555
    %v2407 = vunpack.c.h.b16 %v555
    %v2408 = vunpack.c.l.b16 %v556
    %v2409 = vunpack.c.h.b16 %v556
    %v2410 = vunpack.c.l.b16 %v557
    %v2411 = vunpack.c.h.b16 %v557
    %v2412 = vunpack.c.l.b16 %v558
    %v2413 = vunpack.c.h.b16 %v558
    %v2414 = vunpack.c.l.b16 %v559
    %v2415 = vunpack.c.h.b16 %v559
    %v2416 = vunpack.c.l.b16 %v560
    %v2417 = vunpack.c.h.b16 %v560
    %v2418 = vunpack.c.l.b16 %v561
    %v2419 = vunpack.c.h.b16 %v561
    %v2420 = vunpack.c.l.b16 %v562
    %v2421 = vunpack.c.h.b16 %v562
    %v2422 = vunpack.c.l.b16 %v563
    %v2423 = vunpack.c.h.b16 %v563
    %v2424 = vunpack.c.l.b16 %v564
    %v2425 = vunpack.c.h.b16 %v564
    %v2426 = vunpack.c.l.b16 %v565
    %v2427 = vunpack.c.h.b16 %v565
    %v2428 = vunpack.c.l.b16 %v566
    %v2429 = vunpack.c.h.b16 %v566
    %v2430 = vunpack.c.l.b16 %v567
    %v2431 = vunpack.c.h.b16 %v567
    %v2432 = vunpack.c.l.b16 %v568
    %v2433 = vunpack.c.h.b16 %v568
    %v2434 = vunpack.c.l.b16 %v569
    %v2435 = vunpack.c.h.b16 %v569
    %v2436 = vunpack.c.l.b16 %v570
    %v2437 = vunpack.c.h.b16 %v570
    %v2438 = vunpack.c.l.b16 %v571
    %v2439 = vunpack.c.h.b16 %v571
    %v2440 = vunpack.c.l.b16 %v572
    %v2441 = vunpack.c.h.b16 %v572
    %v2442 = vunpack.c.l.b16 %v573
    %v2443 = vunpack.c.h.b16 %v573
    %v2444 = vunpack.c.l.b16 %v574
    %v2445 = vunpack.c.h.b16 %v574
    %v2446 = vunpack.c.l.b16 %v575
    %v2447 = vunpack.c.h.b16 %v575
    %v2448 = vpack.c.b16 %v1488, %v1424
    %v2449 = vpack.c.b16 %v1489, %v1425
    %v2450 = vpack.c.b16 %v1490, %v1426
    %v2451 = vpack.c.b16 %v1491, %v1427
    %v2452 = vpack.c.b16 %v1492, %v1428
    %v2453 = vpack.c.b16 %v1493, %v1429
    %v2454 = vpack.c.b16 %v1494, %v1430
    %v2455 = vpack.c.b16 %v1495, %v1431
    %v2456 = vpack.c.b16 %v1496, %v1432
    %v2457 = vpack.c.b16 %v1497, %v1433
    %v2458 = vpack.c.b16 %v1498, %v1434
    %v2459 = vpack.c.b16 %v1499, %v1435
    %v2460 = vpack.c.b16 %v1500, %v1436
    %v2461 = vpack.c.b16 %v1501, %v1437
    %v2462 = vpack.c.b16 %v1502, %v1438
    %v2463 = vpack.c.b16 %v1503, %v1439
    %v2464 = vpack.c.b16 %v1504, %v1440
    %v2465 = vpack.c.b16 %v1505, %v1441
    %v2466 = vpack.c.b16 %v1506, %v1442
    %v2467 = vpack.c.b16 %v1507, %v1443
    %v2468 = vpack.c.b16 %v1508, %v1444
    %v2469 = vpack.c.b16 %v1509, %v1445
    %v2470 = vpack.c.b16 %v1510, %v1446
    %v2471 = vpack.c.b16 %v1511, %v1447
    %v2472 = vpack.c.b16 %v1512, %v1448
    %v2473 = vpack.c.b16 %v1513, %v1449
    %v2474 = vpack.c.b16 %v1514, %v1450
    %v2475 = vpack.c.b16 %v1515, %v1451
    %v2476 = vpack.c.b16 %v1516, %v1452
    %v2477 = vpack.c.b16 %v1517, %v1453
    %v2478 = vpack.c.b16 %v1518, %v1454
    %v2479 = vpack.c.b16 %v1519, %v1455
    %v2480 = vpack.c.b16 %v1520, %v1456
    %v2481 = vpack.c.b16 %v1521, %v1457
    %v2482 = vpack.c.b16 %v1522, %v1458
    %v2483 = vpack.c.b16 %v1523, %v1459
    %v2484 = vpack.c.b16 %v1524, %v1460
    %v2485 = vpack.c.b16 %v1525, %v1461
    %v2486 = vpack.c.b16 %v1526, %v1462
    %v2487 = vpack.c.b16 %v1527, %v1463
    %v2488 = vpack.c.b16 %v1528, %v1464
    %v2489 = vpack.c.b16 %v1529, %v1465
    %v2490 = vpack.c.b16 %v1530, %v1466
    %v2491 = vpack.c.b16 %v1531, %v1467
    %v2492 = vpack.c.b16 %v1532, %v1468
    %v2493 = vpack.c.b16 %v1533, %v1469
    %v2494 = vpack.c.b16 %v1534, %v1470
    %v2495 = vpack.c.b16 %v1535, %v1471
    %v2496 = vpack.c.b16 %v1536, %v1472
    %v2497 = vpack.c.b16 %v1537, %v1473
    %v2498 = vpack.c.b16 %v1538, %v1474
    %v2499 = vpack.c.b16 %v1539, %v1475
    %v2500 = vpack.c.b16 %v1540, %v1476
    %v2501 = vpack.c.b16 %v1541, %v1477
    %v2502 = vpack.c.b16 %v1542, %v1478
    %v2503 = vpack.c.b16 %v1543, %v1479
    %v2504 = vpack.c.b16 %v1544, %v1480
    %v2505 = vpack.c.b16 %v1545, %v1481
    %v2506 = vpack.c.b16 %v1546, %v1482
    %v2507 = vpack.c.b16 %v1547, %v1483
    %v2508 = vpack.c.b16 %v1548, %v1484
    %v2509 = vpack.c.b16 %v1549, %v1485
    %v2510 = vpack.c.b16 %v1550, %v1486
    %v2511 = vpack.c.b16 %v1551, %v1487
    %v2512 = vpack.c.b16 %v1616, %v1552
    %v2513 = vpack.c.b16 %v1617, %v1553
    %v2514 = vpack.c.b16 %v1618, %v1554
    %v2515 = vpack.c.b16 %v1619, %v1555
    %v2516 = vpack.c.b16 %v1620, %v1556
    %v2517 = vpack.c.b16 %v1621, %v1557
    %v2518 = vpack.c.b16 %v1622, %v1558
    %v2519 = vpack.c.b16 %v1623, %v1559
    %v2520 = vpack.c.b16 %v1624, %v1560
    %v2521 = vpack.c.b16 %v1625, %v1561
    %v2522 = vpack.c.b16 %v1626, %v1562
    %v2523 = vpack.c.b16 %v1627, %v1563
    %v2524 = vpack.c.b16 %v1628, %v1564
    %v2525 = vpack.c.b16 %v1629, %v1565
    %v2526 = vpack.c.b16 %v1630, %v1566
    %v2527 = vpack.c.b16 %v1631, %v1567
    %v2528 = vpack.c.b16 %v1632, %v1568
    %v2529 = vpack.c.b16 %v1633, %v1569
    %v2530 = vpack.c.b16 %v1634, %v1570
    %v2531 = vpack.c.b16 %v1635, %v1571
    %v2532 = vpack.c.b16 %v1636, %v1572
    %v2533 = vpack.c.b16 %v1637, %v1573
    %v2534 = vpack.c.b16 %v1638, %v1574
    %v2535 = vpack.c.b16 %v1639, %v1575
    %v2536 = vpack.c.b16 %v1640, %v1576
    %v2537 = vpack.c.b16 %v1641, %v1577
    %v2538 = vpack.c.b16 %v1642, %v1578
    %v2539 = vpack.c.b16 %v1643, %v1579
    %v2540 = vpack.c.b16 %v1644, %v1580
    %v2541 = vpack.c.b16 %v1645, %v1581
    %v2542 = vpack.c.b16 %v1646, %v1582
    %v2543 = vpack.c.b16 %v1647, %v1583
    %v2544 = vpack.c.b16 %v1648, %v1584
    %v2545 = vpack.c.b16 %v1649, %v1585
    %v2546 = vpack.c.b16 %v1650, %v1586
    %v2547 = vpack.c.b16 %v1651, %v1587
    %v2548 = vpack.c.b16 %v1652, %v1588
    %v2549 = vpack.c.b16 %v1653, %v1589
    %v2550 = vpack.c.b16 %v1654, %v1590
    %v2551 = vpack.c.b16 %v1655, %v1591
    %v2552 = vpack.c.b16 %v1656, %v1592
    %v2553 = vpack.c.b16 %v1657, %v1593
    %v2554 = vpack.c.b16 %v1658, %v1594
    %v2555 = vpack.c.b16 %v1659, %v1595
    %v2556 = vpack.c.b16 %v1660, %v1596
    %v2557 = vpack.c.b16 %v1661, %v1597
    %v2558 = vpack.c.b16 %v1662, %v1598
    %v2559 = vpack.c.b16 %v1663, %v1599
    %v2560 = vpack.c.b16 %v1664, %v1600
    %v2561 = vpack.c.b16 %v1665, %v1601
    %v2562 = vpack.c.b16 %v1666, %v1602
    %v2563 = vpack.c.b16 %v1667, %v1603
    %v2564 = vpack.c.b16 %v1668, %v1604
    %v2565 = vpack.c.b16 %v1669, %v1605
    %v2566 = vpack.c.b16 %v1670, %v1606
    %v2567 = vpack.c.b16 %v1671, %v1607
    %v2568 = vpack.c.b16 %v1672, %v1608
    %v2569 = vpack.c.b16 %v1673, %v1609
    %v2570 = vpack.c.b16 %v1674, %v1610
    %v2571 = vpack.c.b16 %v1675, %v1611
    %v2572 = vpack.c.b16 %v1676, %v1612
    %v2573 = vpack.c.b16 %v1677, %v1613
    %v2574 = vpack.c.b16 %v1678, %v1614
    %v2575 = vpack.c.b16 %v1679, %v1615
    %v2576 = vpack.c.b16 %v1744, %v1680
    %v2577 = vpack.c.b16 %v1745, %v1681
    %v2578 = vpack.c.b16 %v1746, %v1682
    %v2579 = vpack.c.b16 %v1747, %v1683
    %v2580 = vpack.c.b16 %v1748, %v1684
    %v2581 = vpack.c.b16 %v1749, %v1685
    %v2582 = vpack.c.b16 %v1750, %v1686
    %v2583 = vpack.c.b16 %v1751, %v1687
    %v2584 = vpack.c.b16 %v1752, %v1688
    %v2585 = vpack.c.b16 %v1753, %v1689
    %v2586 = vpack.c.b16 %v1754, %v1690
    %v2587 = vpack.c.b16 %v1755, %v1691
    %v2588 = vpack.c.b16 %v1756, %v1692
    %v2589 = vpack.c.b16 %v1757, %v1693
    %v2590 = vpack.c.b16 %v1758, %v1694
    %v2591 = vpack.c.b16 %v1759, %v1695
    %v2592 = vpack.c.b16 %v1760, %v1696
    %v2593 = vpack.c.b16 %v1761, %v1697
    %v2594 = vpack.c.b16 %v1762, %v1698
    %v2595 = vpack.c.b16 %v1763, %v1699
    %v2596 = vpack.c.b16 %v1764, %v1700
    %v2597 = vpack.c.b16 %v1765, %v1701
    %v2598 = vpack.c.b16 %v1766, %v1702
    %v2599 = vpack.c.b16 %v1767, %v1703
    %v2600 = vpack.c.b16 %v1768, %v1704
    %v2601 = vpack.c.b16 %v1769, %v1705
    %v2602 = vpack.c.b16 %v1770, %v1706
    %v2603 = vpack.c.b16 %v1771, %v1707
    %v2604 = vpack.c.b16 %v1772, %v1708
    %v2605 = vpack.c.b16 %v1773, %v1709
    %v2606 = vpack.c.b16 %v1774, %v1710
    %v2607 = vpack.c.b16 %v1775, %v1711
    %v2608 = vpack.c.b16 %v1776, %v1712
    %v2609 = vpack.c.b16 %v1777, %v1713
    %v2610 = vpack.c.b16 %v1778, %v1714
    %v2611 = vpack.c.b16 %v1779, %v1715
    %v2612 = vpack.c.b16 %v1780, %v1716
    %v2613 = vpack.c.b16 %v1781, %v1717
    %v2614 = vpack.c.b16 %v1782, %v1718
    %v2615 = vpack.c.b16 %v1783, %v1719
    %v2616 = vpack.c.b16 %v1784, %v1720
    %v2617 = vpack.c.b16 %v1785, %v1721
    %v2618 = vpack.c.b16 %v1786, %v1722
    %v2619 = vpack.c.b16 %v1787, %v1723
    %v2620 = vpack.c.b16 %v1788, %v1724
    %v2621 = vpack.c.b16 %v1789, %v1725
    %v2622 = vpack.c.b16 %v1790, %v1726
    %v2623 = vpack.c.b16 %v1791, %v1727
    %v2624 = vpack.c.b16 %v1792, %v1728
    %v2625 = vpack.c.b16 %v1793, %v1729
    %v2626 = vpack.c.b16 %v1794, %v1730
    %v2627 = vpack.c.b16 %v1795, %v1731
    %v2628 = vpack.c.b16 %v1796, %v1732
    %v2629 = vpack.c.b16 %v1797, %v1733
    %v2630 = vpack.c.b16 %v1798, %v1734
    %v2631 = vpack.c.b16 %v1799, %v1735
    %v2632 = vpack.c.b16 %v1800, %v1736
    %v2633 = vpack.c.b16 %v1801, %v1737
    %v2634 = vpack.c.b16 %v1802, %v1738
    %v2635 = vpack.c.b16 %v1803, %v1739
    %v2636 = vpack.c.b16 %v1804, %v1740
    %v2637 = vpack.c.b16 %v1805, %v1741
    %v2638 = vpack.c.b16 %v1806, %v1742
    %v2639 = vpack.c.b16 %v1807, %v1743
    %v2640 = vpack.c.b16 %v1872, %v1808
    %v2641 = vpack.c.b16 %v1873, %v1809
    %v2642 = vpack.c.b16 %v1874, %v1810
    %v2643 = vpack.c.b16 %v1875, %v1811
    %v2644 = vpack.c.b16 %v1876, %v1812
    %v2645 = vpack.c.b16 %v1877, %v1813
    %v2646 = vpack.c.b16 %v1878, %v1814
    %v2647 = vpack.c.b16 %v1879, %v1815
    %v2648 = vpack.c.b16 %v1880, %v1816
    %v2649 = vpack.c.b16 %v1881, %v1817
    %v2650 = vpack.c.b16 %v1882, %v1818
    %v2651 = vpack.c.b16 %v1883, %v1819
    %v2652 = vpack.c.b16 %v1884, %v1820
    %v2653 = vpack.c.b16 %v1885, %v1821
    %v2654 = vpack.c.b16 %v1886, %v1822
    %v2655 = vpack.c.b16 %v1887, %v1823
    %v2656 = vpack.c.b16 %v1888, %v1824
    %v2657 = vpack.c.b16 %v1889, %v1825
    %v2658 = vpack.c.b16 %v1890, %v1826
    %v2659 = vpack.c.b16 %v1891, %v1827
    %v2660 = vpack.c.b16 %v1892, %v1828
    %v2661 = vpack.c.b16 %v1893, %v1829
    %v2662 = vpack.c.b16 %v1894, %v1830
    %v2663 = vpack.c.b16 %v1895, %v1831
    %v2664 = vpack.c.b16 %v1896, %v1832
    %v2665 = vpack.c.b16 %v1897, %v1833
    %v2666 = vpack.c.b16 %v1898, %v1834
    %v2667 = vpack.c.b16 %v1899, %v1835
    %v2668 = vpack.c.b16 %v1900, %v1836
    %v2669 = vpack.c.b16 %v1901, %v1837
    %v2670 = vpack.c.b16 %v1902, %v1838
    %v2671 = vpack.c.b16 %v1903, %v1839
    %v2672 = vpack.c.b16 %v1904, %v1840
    %v2673 = vpack.c.b16 %v1905, %v1841
    %v2674 = vpack.c.b16 %v1906, %v1842
    %v2675 = vpack.c.b16 %v1907, %v1843
    %v2676 = vpack.c.b16 %v1908, %v1844
    %v2677 = vpack.c.b16 %v1909, %v1845
    %v2678 = vpack.c.b16 %v1910, %v1846
    %v2679 = vpack.c.b16 %v1911, %v1847
    %v2680 = vpack.c.b16 %v1912, %v1848
    %v2681 = vpack.c.b16 %v1913, %v1849
    %v2682 = vpack.c.b16 %v1914, %v1850
    %v2683 = vpack.c.b16 %v1915, %v1851
    %v2684 = vpack.c.b16 %v1916, %v1852
    %v2685 = vpack.c.b16 %v1917, %v1853
    %v2686 = vpack.c.b16 %v1918, %v1854
    %v2687 = vpack.c.b16 %v1919, %v1855
    %v2688 = vpack.c.b16 %v1920, %v1856
    %v2689 = vpack.c.b16 %v1921, %v1857
    %v2690 = vpack.c.b16 %v1922, %v1858
    %v2691 = vpack.c.b16 %v1923, %v1859
    %v2692 = vpack.c.b16 %v1924, %v1860
    %v2693 = vpack.c.b16 %v1925, %v1861
    %v2694 = vpack.c.b16 %v1926, %v1862
    %v2695 = vpack.c.b16 %v1927, %v1863
    %v2696 = vpack.c.b16 %v1928, %v1864
    %v2697 = vpack.c.b16 %v1929, %v1865
    %v2698 = vpack.c.b16 %v1930, %v1866
    %v2699 = vpack.c.b16 %v1931, %v1867
    %v2700 = vpack.c.b16 %v1932, %v1868
    %v2701 = vpack.c.b16 %v1933, %v1869
    %v2702 = vpack.c.b16 %v1934, %v1870
    %v2703 = vpack.c.b16 %v1935, %v1871
    %v2704 = vpack.c.b16 %v2000, %v1936
    %v2705 = vpack.c.b16 %v2001, %v1937
    %v2706 = vpack.c.b16 %v2002, %v1938
    %v2707 = vpack.c.b16 %v2003, %v1939
    %v2708 = vpack.c.b16 %v2004, %v1940
    %v2709 = vpack.c.b16 %v2005, %v1941
    %v2710 = vpack.c.b16 %v2006, %v1942
    %v2711 = vpack.c.b16 %v2007, %v1943
    %v2712 = vpack.c.b16 %v2008, %v1944
    %v2713 = vpack.c.b16 %v2009, %v1945
    %v2714 = vpack.c.b16 %v2010, %v1946
    %v2715 = vpack.c.b16 %v2011, %v1947
    %v2716 = vpack.c.b16 %v2012, %v1948
    %v2717 = vpack.c.b16 %v2013, %v1949
    %v2718 = vpack.c.b16 %v2014, %v1950
    %v2719 = vpack.c.b16 %v2015, %v1951
    %v2720 = vpack.c.b16 %v2016, %v1952
    %v2721 = vpack.c.b16 %v2017, %v1953
    %v2722 = vpack.c.b16 %v2018, %v1954
    %v2723 = vpack.c.b16 %v2019, %v1955
    %v2724 = vpack.c.b16 %v2020, %v1956
    %v2725 = vpack.c.b16 %v2021, %v1957
    %v2726 = vpack.c.b16 %v2022, %v1958
    %v2727 = vpack.c.b16 %v2023, %v1959
    %v2728 = vpack.c.b16 %v2024, %v1960
    %v2729 = vpack.c.b16 %v2025, %v1961
    %v2730 = vpack.c.b16 %v2026, %v1962
    %v2731 = vpack.c.b16 %v2027, %v1963
    %v2732 = vpack.c.b16 %v2028, %v1964
    %v2733 = vpack.c.b16 %v2029, %v1965
    %v2734 = vpack.c.b16 %v2030, %v1966
    %v2735 = vpack.c.b16 %v2031, %v1967
    %v2736 = vpack.c.b16 %v2032, %v1968
    %v2737 = vpack.c.b16 %v2033, %v1969
    %v2738 = vpack.c.b16 %v2034, %v1970
    %v2739 = vpack.c.b16 %v2035, %v1971
    %v2740 = vpack.c.b16 %v2036, %v1972
    %v2741 = vpack.c.b16 %v2037, %v1973
    %v2742 = vpack.c.b16 %v2038, %v1974
    %v2743 = vpack.c.b16 %v2039, %v1975
    %v2744 = vpack.c.b16 %v2040, %v1976
    %v2745 = vpack.c.b16 %v2041, %v1977
    %v2746 = vpack.c.b16 %v2042, %v1978
    %v2747 = vpack.c.b16 %v2043, %v1979
    %v2748 = vpack.c.b16 %v2044, %v1980
    %v2749 = vpack.c.b16 %v2045, %v1981
    %v2750 = vpack.c.b16 %v2046, %v1982
    %v2751 = vpack.c.b16 %v2047, %v1983
    %v2752 = vpack.c.b16 %v2048, %v1984
    %v2753 = vpack.c.b16 %v2049, %v1985
    %v2754 = vpack.c.b16 %v2050, %v1986
    %v2755 = vpack.c.b16 %v2051, %v1987
    %v2756 = vpack.c.b16 %v2052, %v1988
    %v2757 = vpack.c.b16 %v2053, %v1989
    %v2758 = vpack.c.b16 %v2054, %v1990
    %v2759 = vpack.c.b16 %v2055, %v1991
    %v2760 = vpack.c.b16 %v2056, %v1992
    %v2761 = vpack.c.b16 %v2057, %v1993
    %v2762 = vpack.c.b16 %v2058, %v1994
    %v2763 = vpack.c.b16 %v2059, %v1995
    %v2764 = vpack.c.b16 %v2060, %v1996
    %v2765 = vpack.c.b16 %v2061, %v1997
    %v2766 = vpack.c.b16 %v2062, %v1998
    %v2767 = vpack.c.b16 %v2063, %v1999
    %v2768 = vpack.c.b16 %v2128, %v2064
    %v2769 = vpack.c.b16 %v2129, %v2065
    %v2770 = vpack.c.b16 %v2130, %v2066
    %v2771 = vpack.c.b16 %v2131, %v2067
    %v2772 = vpack.c.b16 %v2132, %v2068
    %v2773 = vpack.c.b16 %v2133, %v2069
    %v2774 = vpack.c.b16 %v2134, %v2070
    %v2775 = vpack.c.b16 %v2135, %v2071
    %v2776 = vpack.c.b16 %v2136, %v2072
    %v2777 = vpack.c.b16 %v2137, %v2073
    %v2778 = vpack.c.b16 %v2138, %v2074
    %v2779 = vpack.c.b16 %v2139, %v2075
    %v2780 = vpack.c.b16 %v2140, %v2076
    %v2781 = vpack.c.b16 %v2141, %v2077
    %v2782 = vpack.c.b16 %v2142, %v2078
    %v2783 = vpack.c.b16 %v2143, %v2079
    %v2784 = vpack.c.b16 %v2144, %v2080
    %v2785 = vpack.c.b16 %v2145, %v2081
    %v2786 = vpack.c.b16 %v2146, %v2082
    %v2787 = vpack.c.b16 %v2147, %v2083
    %v2788 = vpack.c.b16 %v2148, %v2084
    %v2789 = vpack.c.b16 %v2149, %v2085
    %v2790 = vpack.c.b16 %v2150, %v2086
    %v2791 = vpack.c.b16 %v2151, %v2087
    %v2792 = vpack.c.b16 %v2152, %v2088
    %v2793 = vpack.c.b16 %v2153, %v2089
    %v2794 = vpack.c.b16 %v2154, %v2090
    %v2795 = vpack.c.b16 %v2155, %v2091
    %v2796 = vpack.c.b16 %v2156, %v2092
    %v2797 = vpack.c.b16 %v2157, %v2093
    %v2798 = vpack.c.b16 %v2158, %v2094
    %v2799 = vpack.c.b16 %v2159, %v2095
    %v2800 = vpack.c.b16 %v2160, %v2096
    %v2801 = vpack.c.b16 %v2161, %v2097
    %v2802 = vpack.c.b16 %v2162, %v2098
    %v2803 = vpack.c.b16 %v2163, %v2099
    %v2804 = vpack.c.b16 %v2164, %v2100
    %v2805 = vpack.c.b16 %v2165, %v2101
    %v2806 = vpack.c.b16 %v2166, %v2102
    %v2807 = vpack.c.b16 %v2167, %v2103
    %v2808 = vpack.c.b16 %v2168, %v2104
    %v2809 = vpack.c.b16 %v2169, %v2105
    %v2810 = vpack.c.b16 %v2170, %v2106
    %v2811 = vpack.c.b16 %v2171, %v2107
    %v2812 = vpack.c.b16 %v2172, %v2108
    %v2813 = vpack.c.b16 %v2173, %v2109
    %v2814 = vpack.c.b16 %v2174, %v2110
    %v2815 = vpack.c.b16 %v2175, %v2111
    %v2816 = vpack.c.b16 %v2176, %v2112
    %v2817 = vpack.c.b16 %v2177, %v2113
    %v2818 = vpack.c.b16 %v2178, %v2114
    %v2819 = vpack.c.b16 %v2179, %v2115
    %v2820 = vpack.c.b16 %v2180, %v2116
    %v2821 = vpack.c.b16 %v2181, %v2117
    %v2822 = vpack.c.b16 %v2182, %v2118
    %v2823 = vpack.c.b16 %v2183, %v2119
    %v2824 = vpack.c.b16 %v2184, %v2120
    %v2825 = vpack.c.b16 %v2185, %v2121
    %v2826 = vpack.c.b16 %v2186, %v2122
    %v2827 = vpack.c.b16 %v2187, %v2123
    %v2828 = vpack.c.b16 %v2188, %v2124
    %v2829 = vpack.c.b16 %v2189, %v2125
    %v2830 = vpack.c.b16 %v2190, %v2126
    %v2831 = vpack.c.b16 %v2191, %v2127
    %v2832 = vpack.c.b16 %v2256, %v2192
    %v2833 = vpack.c.b16 %v2257, %v2193
    %v2834 = vpack.c.b16 %v2258, %v2194
    %v2835 = vpack.c.b16 %v2259, %v2195
    %v2836 = vpack.c.b16 %v2260, %v2196
    %v2837 = vpack.c.b16 %v2261, %v2197
    %v2838 = vpack.c.b16 %v2262, %v2198
    %v2839 = vpack.c.b16 %v2263, %v2199
    %v2840 = vpack.c.b16 %v2264, %v2200
    %v2841 = vpack.c.b16 %v2265, %v2201
    %v2842 = vpack.c.b16 %v2266, %v2202
    %v2843 = vpack.c.b16 %v2267, %v2203
    %v2844 = vpack.c.b16 %v2268, %v2204
    %v2845 = vpack.c.b16 %v2269, %v2205
    %v2846 = vpack.c.b16 %v2270, %v2206
    %v2847 = vpack.c.b16 %v2271, %v2207
    %v2848 = vpack.c.b16 %v2272, %v2208
    %v2849 = vpack.c.b16 %v2273, %v2209
    %v2850 = vpack.c.b16 %v2274, %v2210
    %v2851 = vpack.c.b16 %v2275, %v2211
    %v2852 = vpack.c.b16 %v2276, %v2212
    %v2853 = vpack.c.b16 %v2277, %v2213
    %v2854 = vpack.c.b16 %v2278, %v2214
    %v2855 = vpack.c.b16 %v2279, %v2215
    %v2856 = vpack.c.b16 %v2280, %v2216
    %v2857 = vpack.c.b16 %v2281, %v2217
    %v2858 = vpack.c.b16 %v2282, %v2218
    %v2859 = vpack.c.b16 %v2283, %v2219
    %v2860 = vpack.c.b16 %v2284, %v2220
    %v2861 = vpack.c.b16 %v2285, %v2221
    %v2862 = vpack.c.b16 %v2286, %v2222
    %v2863 = vpack.c.b16 %v2287, %v2223
    %v2864 = vpack.c.b16 %v2288, %v2224
    %v2865 = vpack.c.b16 %v2289, %v2225
    %v2866 = vpack.c.b16 %v2290, %v2226
    %v2867 = vpack.c.b16 %v2291, %v2227
    %v2868 = vpack.c.b16 %v2292, %v2228
    %v2869 = vpack.c.b16 %v2293, %v2229
    %v2870 = vpack.c.b16 %v2294, %v2230
    %v2871 = vpack.c.b16 %v2295, %v2231
    %v2872 = vpack.c.b16 %v2296, %v2232
    %v2873 = vpack.c.b16 %v2297, %v2233
    %v2874 = vpack.c.b16 %v2298, %v2234
    %v2875 = vpack.c.b16 %v2299, %v2235
    %v2876 = vpack.c.b16 %v2300, %v2236
    %v2877 = vpack.c.b16 %v2301, %v2237
    %v2878 = vpack.c.b16 %v2302, %v2238
    %v2879 = vpack.c.b16 %v2303, %v2239
    %v2880 = vpack.c.b16 %v2304, %v2240
    %v2881 = vpack.c.b16 %v2305, %v2241
    %v2882 = vpack.c.b16 %v2306, %v2242
    %v2883 = vpack.c.b16 %v2307, %v2243
    %v2884 = vpack.c.b16 %v2308, %v2244
    %v2885 = vpack.c.b16 %v2309, %v2245
    %v2886 = vpack.c.b16 %v2310, %v2246
    %v2887 = vpack.c.b16 %v2311, %v2247
    %v2888 = vpack.c.b16 %v2312, %v2248
    %v2889 = vpack.c.b16 %v2313, %v2249
    %v2890 = vpack.c.b16 %v2314, %v2250
    %v2891 = vpack.c.b16 %v2315, %v2251
    %v2892 = vpack.c.b16 %v2316, %v2252
    %v2893 = vpack.c.b16 %v2317, %v2253
    %v2894 = vpack.c.b16 %v2318, %v2254
    %v2895 = vpack.c.b16 %v2319, %v2255
    %v2896 = vpack.c.b16 %v2384, %v2320
    %v2897 = vpack.c.b16 %v2385, %v2321
    %v2898 = vpack.c.b16 %v2386, %v2322
    %v2899 = vpack.c.b16 %v2387, %v2323
    %v2900 = vpack.c.b16 %v2388, %v2324
    %v2901 = vpack.c.b16 %v2389, %v2325
    %v2902 = vpack.c.b16 %v2390, %v2326
    %v2903 = vpack.c.b16 %v2391, %v2327
    %v2904 = vpack.c.b16 %v2392, %v2328
    %v2905 = vpack.c.b16 %v2393, %v2329
    %v2906 = vpack.c.b16 %v2394, %v2330
    %v2907 = vpack.c.b16 %v2395, %v2331
    %v2908 = vpack.c.b16 %v2396, %v2332
    %v2909 = vpack.c.b16 %v2397, %v2333
    %v2910 = vpack.c.b16 %v2398, %v2334
    %v2911 = vpack.c.b16 %v2399, %v2335
    %v2912 = vpack.c.b16 %v2400, %v2336
    %v2913 = vpack.c.b16 %v2401, %v2337
    %v2914 = vpack.c.b16 %v2402, %v2338
    %v2915 = vpack.c.b16 %v2403, %v2339
    %v2916 = vpack.c.b16 %v2404, %v2340
    %v2917 = vpack.c.b16 %v2405, %v2341
    %v2918 = vpack.c.b16 %v2406, %v2342
    %v2919 = vpack.c.b16 %v2407, %v2343
    %v2920 = vpack.c.b16 %v2408, %v2344
    %v2921 = vpack.c.b16 %v2409, %v2345
    %v2922 = vpack.c.b16 %v2410, %v2346
    %v2923 = vpack.c.b16 %v2411, %v2347
    %v2924 = vpack.c.b16 %v2412, %v2348
    %v2925 = vpack.c.b16 %v2413, %v2349
    %v2926 = vpack.c.b16 %v2414, %v2350
    %v2927 = vpack.c.b16 %v2415, %v2351
    %v2928 = vpack.c.b16 %v2416, %v2352
    %v2929 = vpack.c.b16 %v2417, %v2353
    %v2930 = vpack.c.b16 %v2418, %v2354
    %v2931 = vpack.c.b16 %v2419, %v2355
    %v2932 = vpack.c.b16 %v2420, %v2356
    %v2933 = vpack.c.b16 %v2421, %v2357
    %v2934 = vpack.c.b16 %v2422, %v2358
    %v2935 = vpack.c.b16 %v2423, %v2359
    %v2936 = vpack.c.b16 %v2424, %v2360
    %v2937 = vpack.c.b16 %v2425, %v2361
    %v2938 = vpack.c.b16 %v2426, %v2362
    %v2939 = vpack.c.b16 %v2427, %v2363
    %v2940 = vpack.c.b16 %v2428, %v2364
    %v2941 = vpack.c.b16 %v2429, %v2365
    %v2942 = vpack.c.b16 %v2430, %v2366
    %v2943 = vpack.c.b16 %v2431, %v2367
    %v2944 = vpack.c.b16 %v2432, %v2368
    %v2945 = vpack.c.b16 %v2433, %v2369
    %v2946 = vpack.c.b16 %v2434, %v2370
    %v2947 = vpack.c.b16 %v2435, %v2371
    %v2948 = vpack.c.b16 %v2436, %v2372
    %v2949 = vpack.c.b16 %v2437, %v2373
    %v2950 = vpack.c.b16 %v2438, %v2374
    %v2951 = vpack.c.b16 %v2439, %v2375
    %v2952 = vpack.c.b16 %v2440, %v2376
    %v2953 = vpack.c.b16 %v2441, %v2377
    %v2954 = vpack.c.b16 %v2442, %v2378
    %v2955 = vpack.c.b16 %v2443, %v2379
    %v2956 = vpack.c.b16 %v2444, %v2380
    %v2957 = vpack.c.b16 %v2445, %v2381
    %v2958 = vpack.c.b16 %v2446, %v2382
    %v2959 = vpack.c.b16 %v2447, %v2383
    %3472 = vmatprep.subr.bf16.mxu0 %v2897
    %3473 = vmatpush1.bf16.msra.mxu0 %v2896
    %3474 = vmatprep.subr.bf16.mxu0 %v2833
    %3475 = vmatpush1.bf16.msra.mxu0 %v2832
    %3476 = vmatprep.subr.bf16.mxu0 %v2769
    %3477 = vmatpush1.bf16.msra.mxu0 %v2768
    %3478 = vmatprep.subr.bf16.mxu0 %v2705
    %3479 = vmatpush1.bf16.msra.mxu0 %v2704
    %3480 = vmatprep.subr.bf16.mxu0 %v2641
    %3481 = vmatpush1.bf16.msra.mxu0 %v2640
    %3482 = vmatprep.subr.bf16.mxu0 %v2577
    %3483 = vmatpush1.bf16.msra.mxu0 %v2576
    %3484 = vmatprep.subr.bf16.mxu0 %v2513
    %3485 = vmatpush1.bf16.msra.mxu0 %v2512
    %3486 = vmatprep.subr.bf16.mxu0 %v2449
    %3487 = vmatpush1.bf16.msra.mxu0 %v2448
    %3488 = vmatprep.subr.bf16.mxu0 0
    %3489 = vmatpush2.bf16.msra.mxu0 0
    %3490 = vmatprep.subr.bf16.mxu0 0
    %3491 = vmatpush2.bf16.msra.mxu0 0
    %3492 = vmatprep.subr.bf16.mxu0 0
    %3493 = vmatpush2.bf16.msra.mxu0 0
    %3494 = vmatprep.subr.bf16.mxu0 0
    %3495 = vmatpush2.bf16.msra.mxu0 0
    %3496 = vmatprep.subr.bf16.mxu0 0
    %3497 = vmatpush2.bf16.msra.mxu0 0
    %3498 = vmatprep.subr.bf16.mxu0 0
    %3499 = vmatpush2.bf16.msra.mxu0 0
    %3500 = vmatprep.subr.bf16.mxu0 0
    %3501 = vmatpush2.bf16.msra.mxu0 0
    %3502 = vmatprep.subr.bf16.mxu0 0
    %3503 = vmatpush2.bf16.msra.mxu0 0
    %3504 = vmatprep.mubr.bf16.mxu0 0
    %3505 = vmatmul.mubr.bf16.gmra.mxu0 %v63
    %v3506 = vpop.f32.mrf.mxu0
    %v3507 = vadd.f32 %v595, %v3506
    %v3508 = vpop.f32.mrf.mxu0
    %v3509 = vadd.f32 %v599, %v3508
    %v3510 = vpop.f32.mrf.mxu0
    %v3511 = vpop.f32.mrf.mxu0
    %3512 = vdwg.mxu0
    %3513 = vmatprep.subr.bf16.mxu0 %v2899
    %3514 = vmatpush1.bf16.msra.mxu0 %v2898
    %3515 = vmatprep.subr.bf16.mxu0 %v2835
    %3516 = vmatpush1.bf16.msra.mxu0 %v2834
    %3517 = vmatprep.subr.bf16.mxu0 %v2771
    %3518 = vmatpush1.bf16.msra.mxu0 %v2770
    %3519 = vmatprep.subr.bf16.mxu0 %v2707
    %3520 = vmatpush1.bf16.msra.mxu0 %v2706
    %3521 = vmatprep.subr.bf16.mxu0 %v2643
    %3522 = vmatpush1.bf16.msra.mxu0 %v2642
    %3523 = vmatprep.subr.bf16.mxu0 %v2579
    %3524 = vmatpush1.bf16.msra.mxu0 %v2578
    %3525 = vmatprep.subr.bf16.mxu0 %v2515
    %3526 = vmatpush1.bf16.msra.mxu0 %v2514
    %3527 = vmatprep.subr.bf16.mxu0 %v2451
    %3528 = vmatpush1.bf16.msra.mxu0 %v2450
    %3529 = vmatprep.subr.bf16.mxu0 0
    %3530 = vmatpush2.bf16.msra.mxu0 0
    %3531 = vmatprep.subr.bf16.mxu0 0
    %3532 = vmatpush2.bf16.msra.mxu0 0
    %3533 = vmatprep.subr.bf16.mxu0 0
    %3534 = vmatpush2.bf16.msra.mxu0 0
    %3535 = vmatprep.subr.bf16.mxu0 0
    %3536 = vmatpush2.bf16.msra.mxu0 0
    %3537 = vmatprep.subr.bf16.mxu0 0
    %3538 = vmatpush2.bf16.msra.mxu0 0
    %3539 = vmatprep.subr.bf16.mxu0 0
    %3540 = vmatpush2.bf16.msra.mxu0 0
    %3541 = vmatprep.subr.bf16.mxu0 0
    %3542 = vmatpush2.bf16.msra.mxu0 0
    %3543 = vmatprep.subr.bf16.mxu0 0
    %3544 = vmatpush2.bf16.msra.mxu0 0
    %3545 = vmatprep.mubr.bf16.mxu0 0
    %3546 = vmatmul.mubr.bf16.gmra.mxu0 %v63
    %v3547 = vpop.f32.mrf.mxu0
    %v3548 = vadd.f32 %v603, %v3547
    %v3549 = vpop.f32.mrf.mxu0
    %v3550 = vadd.f32 %v607, %v3549
    %v3551 = vpop.f32.mrf.mxu0
    %v3552 = vpop.f32.mrf.mxu0
    %3553 = vdwg.mxu0
    %3554 = vmatprep.subr.bf16.mxu0 %v2901
    %3555 = vmatpush1.bf16.msra.mxu0 %v2900
    %3556 = vmatprep.subr.bf16.mxu0 %v2837
    %3557 = vmatpush1.bf16.msra.mxu0 %v2836
    %3558 = vmatprep.subr.bf16.mxu0 %v2773
    %3559 = vmatpush1.bf16.msra.mxu0 %v2772
    %3560 = vmatprep.subr.bf16.mxu0 %v2709
    %3561 = vmatpush1.bf16.msra.mxu0 %v2708
    %3562 = vmatprep.subr.bf16.mxu0 %v2645
    %3563 = vmatpush1.bf16.msra.mxu0 %v2644
    %3564 = vmatprep.subr.bf16.mxu0 %v2581
    %3565 = vmatpush1.bf16.msra.mxu0 %v2580
    %3566 = vmatprep.subr.bf16.mxu0 %v2517
    %3567 = vmatpush1.bf16.msra.mxu0 %v2516
    %3568 = vmatprep.subr.bf16.mxu0 %v2453
    %3569 = vmatpush1.bf16.msra.mxu0 %v2452
    %3570 = vmatprep.subr.bf16.mxu0 0
    %3571 = vmatpush2.bf16.msra.mxu0 0
    %3572 = vmatprep.subr.bf16.mxu0 0
    %3573 = vmatpush2.bf16.msra.mxu0 0
    %3574 = vmatprep.subr.bf16.mxu0 0
    %3575 = vmatpush2.bf16.msra.mxu0 0
    %3576 = vmatprep.subr.bf16.mxu0 0
    %3577 = vmatpush2.bf16.msra.mxu0 0
    %3578 = vmatprep.subr.bf16.mxu0 0
    %3579 = vmatpush2.bf16.msra.mxu0 0
    %3580 = vmatprep.subr.bf16.mxu0 0
    %3581 = vmatpush2.bf16.msra.mxu0 0
    %3582 = vmatprep.subr.bf16.mxu0 0
    %3583 = vmatpush2.bf16.msra.mxu0 0
    %3584 = vmatprep.subr.bf16.mxu0 0
    %3585 = vmatpush2.bf16.msra.mxu0 0
    %3586 = vmatprep.mubr.bf16.mxu0 0
    %3587 = vmatmul.mubr.bf16.gmra.mxu0 %v63
    %v3588 = vpop.f32.mrf.mxu0
    %v3589 = vadd.f32 %v611, %v3588
    %v3590 = vpop.f32.mrf.mxu0
    %v3591 = vadd.f32 %v615, %v3590
    %v3592 = vpop.f32.mrf.mxu0
    %v3593 = vpop.f32.mrf.mxu0
    %3594 = vdwg.mxu0
    %3595 = vmatprep.subr.bf16.mxu0 %v2903
    %3596 = vmatpush1.bf16.msra.mxu0 %v2902
    %3597 = vmatprep.subr.bf16.mxu0 %v2839
    %3598 = vmatpush1.bf16.msra.mxu0 %v2838
    %3599 = vmatprep.subr.bf16.mxu0 %v2775
    %3600 = vmatpush1.bf16.msra.mxu0 %v2774
    %3601 = vmatprep.subr.bf16.mxu0 %v2711
    %3602 = vmatpush1.bf16.msra.mxu0 %v2710
    %3603 = vmatprep.subr.bf16.mxu0 %v2647
    %3604 = vmatpush1.bf16.msra.mxu0 %v2646
    %3605 = vmatprep.subr.bf16.mxu0 %v2583
    %3606 = vmatpush1.bf16.msra.mxu0 %v2582
    %3607 = vmatprep.subr.bf16.mxu0 %v2519
    %3608 = vmatpush1.bf16.msra.mxu0 %v2518
    %3609 = vmatprep.subr.bf16.mxu0 %v2455
    %3610 = vmatpush1.bf16.msra.mxu0 %v2454
    %3611 = vmatprep.subr.bf16.mxu0 0
    %3612 = vmatpush2.bf16.msra.mxu0 0
    %3613 = vmatprep.subr.bf16.mxu0 0
    %3614 = vmatpush2.bf16.msra.mxu0 0
    %3615 = vmatprep.subr.bf16.mxu0 0
    %3616 = vmatpush2.bf16.msra.mxu0 0
    %3617 = vmatprep.subr.bf16.mxu0 0
    %3618 = vmatpush2.bf16.msra.mxu0 0
    %3619 = vmatprep.subr.bf16.mxu0 0
    %3620 = vmatpush2.bf16.msra.mxu0 0
    %3621 = vmatprep.subr.bf16.mxu0 0
    %3622 = vmatpush2.bf16.msra.mxu0 0
    %3623 = vmatprep.subr.bf16.mxu0 0
    %3624 = vmatpush2.bf16.msra.mxu0 0
    %3625 = vmatprep.subr.bf16.mxu0 0
    %3626 = vmatpush2.bf16.msra.mxu0 0
    %3627 = vmatprep.mubr.bf16.mxu0 0
    %3628 = vmatmul.mubr.bf16.gmra.mxu0 %v63
    %v3629 = vpop.f32.mrf.mxu0
    %v3630 = vadd.f32 %v619, %v3629
    %v3631 = vpop.f32.mrf.mxu0
    %v3632 = vadd.f32 %v623, %v3631
    %v3633 = vpop.f32.mrf.mxu0
    %v3634 = vpop.f32.mrf.mxu0
    %3635 = vdwg.mxu0
    %3636 = vmatprep.subr.bf16.mxu0 %v2905
    %3637 = vmatpush1.bf16.msra.mxu0 %v2904
    %3638 = vmatprep.subr.bf16.mxu0 %v2841
    %3639 = vmatpush1.bf16.msra.mxu0 %v2840
    %3640 = vmatprep.subr.bf16.mxu0 %v2777
    %3641 = vmatpush1.bf16.msra.mxu0 %v2776
    %3642 = vmatprep.subr.bf16.mxu0 %v2713
    %3643 = vmatpush1.bf16.msra.mxu0 %v2712
    %3644 = vmatprep.subr.bf16.mxu0 %v2649
    %3645 = vmatpush1.bf16.msra.mxu0 %v2648
    %3646 = vmatprep.subr.bf16.mxu0 %v2585
    %3647 = vmatpush1.bf16.msra.mxu0 %v2584
    %3648 = vmatprep.subr.bf16.mxu0 %v2521
    %3649 = vmatpush1.bf16.msra.mxu0 %v2520
    %3650 = vmatprep.subr.bf16.mxu0 %v2457
    %3651 = vmatpush1.bf16.msra.mxu0 %v2456
    %3652 = vmatprep.subr.bf16.mxu0 0
    %3653 = vmatpush2.bf16.msra.mxu0 0
    %3654 = vmatprep.subr.bf16.mxu0 0
    %3655 = vmatpush2.bf16.msra.mxu0 0
    %3656 = vmatprep.subr.bf16.mxu0 0
    %3657 = vmatpush2.bf16.msra.mxu0 0
    %3658 = vmatprep.subr.bf16.mxu0 0
    %3659 = vmatpush2.bf16.msra.mxu0 0
    %3660 = vmatprep.subr.bf16.mxu0 0
    %3661 = vmatpush2.bf16.msra.mxu0 0
    %3662 = vmatprep.subr.bf16.mxu0 0
    %3663 = vmatpush2.bf16.msra.mxu0 0
    %3664 = vmatprep.subr.bf16.mxu0 0
    %3665 = vmatpush2.bf16.msra.mxu0 0
    %3666 = vmatprep.subr.bf16.mxu0 0
    %3667 = vmatpush2.bf16.msra.mxu0 0
    %3668 = vmatprep.mubr.bf16.mxu0 0
    %3669 = vmatmul.mubr.bf16.gmra.mxu0 %v63
    %v3670 = vpop.f32.mrf.mxu0
    %v3671 = vadd.f32 %v627, %v3670
    %v3672 = vpop.f32.mrf.mxu0
    %v3673 = vadd.f32 %v631, %v3672
    %v3674 = vpop.f32.mrf.mxu0
    %v3675 = vpop.f32.mrf.mxu0
    %3676 = vdwg.mxu0
    %3677 = vmatprep.subr.bf16.mxu0 %v2907
    %3678 = vmatpush1.bf16.msra.mxu0 %v2906
    %3679 = vmatprep.subr.bf16.mxu0 %v2843
    %3680 = vmatpush1.bf16.msra.mxu0 %v2842
    %3681 = vmatprep.subr.bf16.mxu0 %v2779
    %3682 = vmatpush1.bf16.msra.mxu0 %v2778
    %3683 = vmatprep.subr.bf16.mxu0 %v2715
    %3684 = vmatpush1.bf16.msra.mxu0 %v2714
    %3685 = vmatprep.subr.bf16.mxu0 %v2651
    %3686 = vmatpush1.bf16.msra.mxu0 %v2650
    %3687 = vmatprep.subr.bf16.mxu0 %v2587
    %3688 = vmatpush1.bf16.msra.mxu0 %v2586
    %3689 = vmatprep.subr.bf16.mxu0 %v2523
    %3690 = vmatpush1.bf16.msra.mxu0 %v2522
    %3691 = vmatprep.subr.bf16.mxu0 %v2459
    %3692 = vmatpush1.bf16.msra.mxu0 %v2458
    %3693 = vmatprep.subr.bf16.mxu0 0
    %3694 = vmatpush2.bf16.msra.mxu0 0
    %3695 = vmatprep.subr.bf16.mxu0 0
    %3696 = vmatpush2.bf16.msra.mxu0 0
    %3697 = vmatprep.subr.bf16.mxu0 0
    %3698 = vmatpush2.bf16.msra.mxu0 0
    %3699 = vmatprep.subr.bf16.mxu0 0
    %3700 = vmatpush2.bf16.msra.mxu0 0
    %3701 = vmatprep.subr.bf16.mxu0 0
    %3702 = vmatpush2.bf16.msra.mxu0 0
    %3703 = vmatprep.subr.bf16.mxu0 0
    %3704 = vmatpush2.bf16.msra.mxu0 0
    %3705 = vmatprep.subr.bf16.mxu0 0
    %3706 = vmatpush2.bf16.msra.mxu0 0
    %3707 = vmatprep.subr.bf16.mxu0 0
    %3708 = vmatpush2.bf16.msra.mxu0 0
    %3709 = vmatprep.mubr.bf16.mxu0 0
    %3710 = vmatmul.mubr.bf16.gmra.mxu0 %v63
    %v3711 = vpop.f32.mrf.mxu0
    %v3712 = vadd.f32 %v635, %v3711
    %v3713 = vpop.f32.mrf.mxu0
    %v3714 = vadd.f32 %v639, %v3713
    %v3715 = vpop.f32.mrf.mxu0
    %v3716 = vpop.f32.mrf.mxu0
    %3717 = vdwg.mxu0
    %3718 = vmatprep.subr.bf16.mxu0 %v2909
    %3719 = vmatpush1.bf16.msra.mxu0 %v2908
    %3720 = vmatprep.subr.bf16.mxu0 %v2845
    %3721 = vmatpush1.bf16.msra.mxu0 %v2844
    %3722 = vmatprep.subr.bf16.mxu0 %v2781
    %3723 = vmatpush1.bf16.msra.mxu0 %v2780
    %3724 = vmatprep.subr.bf16.mxu0 %v2717
    %3725 = vmatpush1.bf16.msra.mxu0 %v2716
    %3726 = vmatprep.subr.bf16.mxu0 %v2653
    %3727 = vmatpush1.bf16.msra.mxu0 %v2652
    %3728 = vmatprep.subr.bf16.mxu0 %v2589
    %3729 = vmatpush1.bf16.msra.mxu0 %v2588
    %3730 = vmatprep.subr.bf16.mxu0 %v2525
    %3731 = vmatpush1.bf16.msra.mxu0 %v2524
    %3732 = vmatprep.subr.bf16.mxu0 %v2461
    %3733 = vmatpush1.bf16.msra.mxu0 %v2460
    %3734 = vmatprep.subr.bf16.mxu0 0
    %3735 = vmatpush2.bf16.msra.mxu0 0
    %3736 = vmatprep.subr.bf16.mxu0 0
    %3737 = vmatpush2.bf16.msra.mxu0 0
    %3738 = vmatprep.subr.bf16.mxu0 0
    %3739 = vmatpush2.bf16.msra.mxu0 0
    %3740 = vmatprep.subr.bf16.mxu0 0
    %3741 = vmatpush2.bf16.msra.mxu0 0
    %3742 = vmatprep.subr.bf16.mxu0 0
    %3743 = vmatpush2.bf16.msra.mxu0 0
    %3744 = vmatprep.subr.bf16.mxu0 0
    %3745 = vmatpush2.bf16.msra.mxu0 0
    %3746 = vmatprep.subr.bf16.mxu0 0
    %3747 = vmatpush2.bf16.msra.mxu0 0
    %3748 = vmatprep.subr.bf16.mxu0 0
    %3749 = vmatpush2.bf16.msra.mxu0 0
    %3750 = vmatprep.mubr.bf16.mxu0 0
    %3751 = vmatmul.mubr.bf16.gmra.mxu0 %v63
    %v3752 = vpop.f32.mrf.mxu0
    %v3753 = vadd.f32 %v643, %v3752
    %v3754 = vpop.f32.mrf.mxu0
    %v3755 = vadd.f32 %v647, %v3754
    %v3756 = vpop.f32.mrf.mxu0
    %v3757 = vpop.f32.mrf.mxu0
    %3758 = vdwg.mxu0
    %3759 = vmatprep.subr.bf16.mxu0 %v2911
    %3760 = vmatpush1.bf16.msra.mxu0 %v2910
    %3761 = vmatprep.subr.bf16.mxu0 %v2847
    %3762 = vmatpush1.bf16.msra.mxu0 %v2846
    %3763 = vmatprep.subr.bf16.mxu0 %v2783
    %3764 = vmatpush1.bf16.msra.mxu0 %v2782
    %3765 = vmatprep.subr.bf16.mxu0 %v2719
    %3766 = vmatpush1.bf16.msra.mxu0 %v2718
    %3767 = vmatprep.subr.bf16.mxu0 %v2655
    %3768 = vmatpush1.bf16.msra.mxu0 %v2654
    %3769 = vmatprep.subr.bf16.mxu0 %v2591
    %3770 = vmatpush1.bf16.msra.mxu0 %v2590
    %3771 = vmatprep.subr.bf16.mxu0 %v2527
    %3772 = vmatpush1.bf16.msra.mxu0 %v2526
    %3773 = vmatprep.subr.bf16.mxu0 %v2463
    %3774 = vmatpush1.bf16.msra.mxu0 %v2462
    %3775 = vmatprep.subr.bf16.mxu0 0
    %3776 = vmatpush2.bf16.msra.mxu0 0
    %3777 = vmatprep.subr.bf16.mxu0 0
    %3778 = vmatpush2.bf16.msra.mxu0 0
    %3779 = vmatprep.subr.bf16.mxu0 0
    %3780 = vmatpush2.bf16.msra.mxu0 0
    %3781 = vmatprep.subr.bf16.mxu0 0
    %3782 = vmatpush2.bf16.msra.mxu0 0
    %3783 = vmatprep.subr.bf16.mxu0 0
    %3784 = vmatpush2.bf16.msra.mxu0 0
    %3785 = vmatprep.subr.bf16.mxu0 0
    %3786 = vmatpush2.bf16.msra.mxu0 0
    %3787 = vmatprep.subr.bf16.mxu0 0
    %3788 = vmatpush2.bf16.msra.mxu0 0
    %3789 = vmatprep.subr.bf16.mxu0 0
    %3790 = vmatpush2.bf16.msra.mxu0 0
    %3791 = vmatprep.mubr.bf16.mxu0 0
    %3792 = vmatmul.mubr.bf16.gmra.mxu0 %v63
    %v3793 = vpop.f32.mrf.mxu0
    %v3794 = vadd.f32 %v651, %v3793
    %v3795 = vpop.f32.mrf.mxu0
    %v3796 = vadd.f32 %v655, %v3795
    %v3797 = vpop.f32.mrf.mxu0
    %v3798 = vpop.f32.mrf.mxu0
    %3799 = vdwg.mxu0
    %3800 = vmatprep.subr.bf16.mxu0 %v2913
    %3801 = vmatpush1.bf16.msra.mxu0 %v2912
    %3802 = vmatprep.subr.bf16.mxu0 %v2849
    %3803 = vmatpush1.bf16.msra.mxu0 %v2848
    %3804 = vmatprep.subr.bf16.mxu0 %v2785
    %3805 = vmatpush1.bf16.msra.mxu0 %v2784
    %3806 = vmatprep.subr.bf16.mxu0 %v2721
    %3807 = vmatpush1.bf16.msra.mxu0 %v2720
    %3808 = vmatprep.subr.bf16.mxu0 %v2657
    %3809 = vmatpush1.bf16.msra.mxu0 %v2656
    %3810 = vmatprep.subr.bf16.mxu0 %v2593
    %3811 = vmatpush1.bf16.msra.mxu0 %v2592
    %3812 = vmatprep.subr.bf16.mxu0 %v2529
    %3813 = vmatpush1.bf16.msra.mxu0 %v2528
    %3814 = vmatprep.subr.bf16.mxu0 %v2465
    %3815 = vmatpush1.bf16.msra.mxu0 %v2464
    %3816 = vmatprep.subr.bf16.mxu0 0
    %3817 = vmatpush2.bf16.msra.mxu0 0
    %3818 = vmatprep.subr.bf16.mxu0 0
    %3819 = vmatpush2.bf16.msra.mxu0 0
    %3820 = vmatprep.subr.bf16.mxu0 0
    %3821 = vmatpush2.bf16.msra.mxu0 0
    %3822 = vmatprep.subr.bf16.mxu0 0
    %3823 = vmatpush2.bf16.msra.mxu0 0
    %3824 = vmatprep.subr.bf16.mxu0 0
    %3825 = vmatpush2.bf16.msra.mxu0 0
    %3826 = vmatprep.subr.bf16.mxu0 0
    %3827 = vmatpush2.bf16.msra.mxu0 0
    %3828 = vmatprep.subr.bf16.mxu0 0
    %3829 = vmatpush2.bf16.msra.mxu0 0
    %3830 = vmatprep.subr.bf16.mxu0 0
    %3831 = vmatpush2.bf16.msra.mxu0 0
    %3832 = vmatprep.mubr.bf16.mxu0 0
    %3833 = vmatmul.mubr.bf16.gmra.mxu0 %v63
    %v3834 = vpop.f32.mrf.mxu0
    %v3835 = vadd.f32 %v659, %v3834
    %v3836 = vpop.f32.mrf.mxu0
    %v3837 = vadd.f32 %v663, %v3836
    %v3838 = vpop.f32.mrf.mxu0
    %v3839 = vpop.f32.mrf.mxu0
    %3840 = vdwg.mxu0
    %3841 = vmatprep.subr.bf16.mxu0 %v2915
    %3842 = vmatpush1.bf16.msra.mxu0 %v2914
    %3843 = vmatprep.subr.bf16.mxu0 %v2851
    %3844 = vmatpush1.bf16.msra.mxu0 %v2850
    %3845 = vmatprep.subr.bf16.mxu0 %v2787
    %3846 = vmatpush1.bf16.msra.mxu0 %v2786
    %3847 = vmatprep.subr.bf16.mxu0 %v2723
    %3848 = vmatpush1.bf16.msra.mxu0 %v2722
    %3849 = vmatprep.subr.bf16.mxu0 %v2659
    %3850 = vmatpush1.bf16.msra.mxu0 %v2658
    %3851 = vmatprep.subr.bf16.mxu0 %v2595
    %3852 = vmatpush1.bf16.msra.mxu0 %v2594
    %3853 = vmatprep.subr.bf16.mxu0 %v2531
    %3854 = vmatpush1.bf16.msra.mxu0 %v2530
    %3855 = vmatprep.subr.bf16.mxu0 %v2467
    %3856 = vmatpush1.bf16.msra.mxu0 %v2466
    %3857 = vmatprep.subr.bf16.mxu0 0
    %3858 = vmatpush2.bf16.msra.mxu0 0
    %3859 = vmatprep.subr.bf16.mxu0 0
    %3860 = vmatpush2.bf16.msra.mxu0 0
    %3861 = vmatprep.subr.bf16.mxu0 0
    %3862 = vmatpush2.bf16.msra.mxu0 0
    %3863 = vmatprep.subr.bf16.mxu0 0
    %3864 = vmatpush2.bf16.msra.mxu0 0
    %3865 = vmatprep.subr.bf16.mxu0 0
    %3866 = vmatpush2.bf16.msra.mxu0 0
    %3867 = vmatprep.subr.bf16.mxu0 0
    %3868 = vmatpush2.bf16.msra.mxu0 0
    %3869 = vmatprep.subr.bf16.mxu0 0
    %3870 = vmatpush2.bf16.msra.mxu0 0
    %3871 = vmatprep.subr.bf16.mxu0 0
    %3872 = vmatpush2.bf16.msra.mxu0 0
    %3873 = vmatprep.mubr.bf16.mxu0 0
    %3874 = vmatmul.mubr.bf16.gmra.mxu0 %v63
    %v3875 = vpop.f32.mrf.mxu0
    %v3876 = vadd.f32 %v667, %v3875
    %v3877 = vpop.f32.mrf.mxu0
    %v3878 = vadd.f32 %v671, %v3877
    %v3879 = vpop.f32.mrf.mxu0
    %v3880 = vpop.f32.mrf.mxu0
    %3881 = vdwg.mxu0
    %3882 = vmatprep.subr.bf16.mxu0 %v2917
    %3883 = vmatpush1.bf16.msra.mxu0 %v2916
    %3884 = vmatprep.subr.bf16.mxu0 %v2853
    %3885 = vmatpush1.bf16.msra.mxu0 %v2852
    %3886 = vmatprep.subr.bf16.mxu0 %v2789
    %3887 = vmatpush1.bf16.msra.mxu0 %v2788
    %3888 = vmatprep.subr.bf16.mxu0 %v2725
    %3889 = vmatpush1.bf16.msra.mxu0 %v2724
    %3890 = vmatprep.subr.bf16.mxu0 %v2661
    %3891 = vmatpush1.bf16.msra.mxu0 %v2660
    %3892 = vmatprep.subr.bf16.mxu0 %v2597
    %3893 = vmatpush1.bf16.msra.mxu0 %v2596
    %3894 = vmatprep.subr.bf16.mxu0 %v2533
    %3895 = vmatpush1.bf16.msra.mxu0 %v2532
    %3896 = vmatprep.subr.bf16.mxu0 %v2469
    %3897 = vmatpush1.bf16.msra.mxu0 %v2468
    %3898 = vmatprep.subr.bf16.mxu0 0
    %3899 = vmatpush2.bf16.msra.mxu0 0
    %3900 = vmatprep.subr.bf16.mxu0 0
    %3901 = vmatpush2.bf16.msra.mxu0 0
    %3902 = vmatprep.subr.bf16.mxu0 0
    %3903 = vmatpush2.bf16.msra.mxu0 0
    %3904 = vmatprep.subr.bf16.mxu0 0
    %3905 = vmatpush2.bf16.msra.mxu0 0
    %3906 = vmatprep.subr.bf16.mxu0 0
    %3907 = vmatpush2.bf16.msra.mxu0 0
    %3908 = vmatprep.subr.bf16.mxu0 0
    %3909 = vmatpush2.bf16.msra.mxu0 0
    %3910 = vmatprep.subr.bf16.mxu0 0
    %3911 = vmatpush2.bf16.msra.mxu0 0
    %3912 = vmatprep.subr.bf16.mxu0 0
    %3913 = vmatpush2.bf16.msra.mxu0 0
    %3914 = vmatprep.mubr.bf16.mxu0 0
    %3915 = vmatmul.mubr.bf16.gmra.mxu0 %v63
    %v3916 = vpop.f32.mrf.mxu0
    %v3917 = vadd.f32 %v675, %v3916
    %v3918 = vpop.f32.mrf.mxu0
    %v3919 = vadd.f32 %v679, %v3918
    %v3920 = vpop.f32.mrf.mxu0
    %v3921 = vpop.f32.mrf.mxu0
    %3922 = vdwg.mxu0
    %3923 = vmatprep.subr.bf16.mxu0 %v2919
    %3924 = vmatpush1.bf16.msra.mxu0 %v2918
    %3925 = vmatprep.subr.bf16.mxu0 %v2855
    %3926 = vmatpush1.bf16.msra.mxu0 %v2854
    %3927 = vmatprep.subr.bf16.mxu0 %v2791
    %3928 = vmatpush1.bf16.msra.mxu0 %v2790
    %3929 = vmatprep.subr.bf16.mxu0 %v2727
    %3930 = vmatpush1.bf16.msra.mxu0 %v2726
    %3931 = vmatprep.subr.bf16.mxu0 %v2663
    %3932 = vmatpush1.bf16.msra.mxu0 %v2662
    %3933 = vmatprep.subr.bf16.mxu0 %v2599
    %3934 = vmatpush1.bf16.msra.mxu0 %v2598
    %3935 = vmatprep.subr.bf16.mxu0 %v2535
    %3936 = vmatpush1.bf16.msra.mxu0 %v2534
    %3937 = vmatprep.subr.bf16.mxu0 %v2471
    %3938 = vmatpush1.bf16.msra.mxu0 %v2470
    %3939 = vmatprep.subr.bf16.mxu0 0
    %3940 = vmatpush2.bf16.msra.mxu0 0
    %3941 = vmatprep.subr.bf16.mxu0 0
    %3942 = vmatpush2.bf16.msra.mxu0 0
    %3943 = vmatprep.subr.bf16.mxu0 0
    %3944 = vmatpush2.bf16.msra.mxu0 0
    %3945 = vmatprep.subr.bf16.mxu0 0
    %3946 = vmatpush2.bf16.msra.mxu0 0
    %3947 = vmatprep.subr.bf16.mxu0 0
    %3948 = vmatpush2.bf16.msra.mxu0 0
    %3949 = vmatprep.subr.bf16.mxu0 0
    %3950 = vmatpush2.bf16.msra.mxu0 0
    %3951 = vmatprep.subr.bf16.mxu0 0
    %3952 = vmatpush2.bf16.msra.mxu0 0
    %3953 = vmatprep.subr.bf16.mxu0 0
    %3954 = vmatpush2.bf16.msra.mxu0 0
    %3955 = vmatprep.mubr.bf16.mxu0 0
    %3956 = vmatmul.mubr.bf16.gmra.mxu0 %v63
    %v3957 = vpop.f32.mrf.mxu0
    %v3958 = vadd.f32 %v683, %v3957
    %v3959 = vpop.f32.mrf.mxu0
    %v3960 = vadd.f32 %v687, %v3959
    %v3961 = vpop.f32.mrf.mxu0
    %v3962 = vpop.f32.mrf.mxu0
    %3963 = vdwg.mxu0
    %3964 = vmatprep.subr.bf16.mxu0 %v2921
    %3965 = vmatpush1.bf16.msra.mxu0 %v2920
    %3966 = vmatprep.subr.bf16.mxu0 %v2857
    %3967 = vmatpush1.bf16.msra.mxu0 %v2856
    %3968 = vmatprep.subr.bf16.mxu0 %v2793
    %3969 = vmatpush1.bf16.msra.mxu0 %v2792
    %3970 = vmatprep.subr.bf16.mxu0 %v2729
    %3971 = vmatpush1.bf16.msra.mxu0 %v2728
    %3972 = vmatprep.subr.bf16.mxu0 %v2665
    %3973 = vmatpush1.bf16.msra.mxu0 %v2664
    %3974 = vmatprep.subr.bf16.mxu0 %v2601
    %3975 = vmatpush1.bf16.msra.mxu0 %v2600
    %3976 = vmatprep.subr.bf16.mxu0 %v2537
    %3977 = vmatpush1.bf16.msra.mxu0 %v2536
    %3978 = vmatprep.subr.bf16.mxu0 %v2473
    %3979 = vmatpush1.bf16.msra.mxu0 %v2472
    %3980 = vmatprep.subr.bf16.mxu0 0
    %3981 = vmatpush2.bf16.msra.mxu0 0
    %3982 = vmatprep.subr.bf16.mxu0 0
    %3983 = vmatpush2.bf16.msra.mxu0 0
    %3984 = vmatprep.subr.bf16.mxu0 0
    %3985 = vmatpush2.bf16.msra.mxu0 0
    %3986 = vmatprep.subr.bf16.mxu0 0
    %3987 = vmatpush2.bf16.msra.mxu0 0
    %3988 = vmatprep.subr.bf16.mxu0 0
    %3989 = vmatpush2.bf16.msra.mxu0 0
    %3990 = vmatprep.subr.bf16.mxu0 0
    %3991 = vmatpush2.bf16.msra.mxu0 0
    %3992 = vmatprep.subr.bf16.mxu0 0
    %3993 = vmatpush2.bf16.msra.mxu0 0
    %3994 = vmatprep.subr.bf16.mxu0 0
    %3995 = vmatpush2.bf16.msra.mxu0 0
    %3996 = vmatprep.mubr.bf16.mxu0 0
    %3997 = vmatmul.mubr.bf16.gmra.mxu0 %v63
    %v3998 = vpop.f32.mrf.mxu0
    %v3999 = vadd.f32 %v691, %v3998
    %v4000 = vpop.f32.mrf.mxu0
    %v4001 = vadd.f32 %v695, %v4000
    %v4002 = vpop.f32.mrf.mxu0
    %v4003 = vpop.f32.mrf.mxu0
    %4004 = vdwg.mxu0
    %4005 = vmatprep.subr.bf16.mxu0 %v2923
    %4006 = vmatpush1.bf16.msra.mxu0 %v2922
    %4007 = vmatprep.subr.bf16.mxu0 %v2859
    %4008 = vmatpush1.bf16.msra.mxu0 %v2858
    %4009 = vmatprep.subr.bf16.mxu0 %v2795
    %4010 = vmatpush1.bf16.msra.mxu0 %v2794
    %4011 = vmatprep.subr.bf16.mxu0 %v2731
    %4012 = vmatpush1.bf16.msra.mxu0 %v2730
    %4013 = vmatprep.subr.bf16.mxu0 %v2667
    %4014 = vmatpush1.bf16.msra.mxu0 %v2666
    %4015 = vmatprep.subr.bf16.mxu0 %v2603
    %4016 = vmatpush1.bf16.msra.mxu0 %v2602
    %4017 = vmatprep.subr.bf16.mxu0 %v2539
    %4018 = vmatpush1.bf16.msra.mxu0 %v2538
    %4019 = vmatprep.subr.bf16.mxu0 %v2475
    %4020 = vmatpush1.bf16.msra.mxu0 %v2474
    %4021 = vmatprep.subr.bf16.mxu0 0
    %4022 = vmatpush2.bf16.msra.mxu0 0
    %4023 = vmatprep.subr.bf16.mxu0 0
    %4024 = vmatpush2.bf16.msra.mxu0 0
    %4025 = vmatprep.subr.bf16.mxu0 0
    %4026 = vmatpush2.bf16.msra.mxu0 0
    %4027 = vmatprep.subr.bf16.mxu0 0
    %4028 = vmatpush2.bf16.msra.mxu0 0
    %4029 = vmatprep.subr.bf16.mxu0 0
    %4030 = vmatpush2.bf16.msra.mxu0 0
    %4031 = vmatprep.subr.bf16.mxu0 0
    %4032 = vmatpush2.bf16.msra.mxu0 0
    %4033 = vmatprep.subr.bf16.mxu0 0
    %4034 = vmatpush2.bf16.msra.mxu0 0
    %4035 = vmatprep.subr.bf16.mxu0 0
    %4036 = vmatpush2.bf16.msra.mxu0 0
    %4037 = vmatprep.mubr.bf16.mxu0 0
    %4038 = vmatmul.mubr.bf16.gmra.mxu0 %v63
    %v4039 = vpop.f32.mrf.mxu0
    %v4040 = vadd.f32 %v699, %v4039
    %v4041 = vpop.f32.mrf.mxu0
    %v4042 = vadd.f32 %v703, %v4041
    %v4043 = vpop.f32.mrf.mxu0
    %v4044 = vpop.f32.mrf.mxu0
    %4045 = vdwg.mxu0
    %4046 = vmatprep.subr.bf16.mxu0 %v2925
    %4047 = vmatpush1.bf16.msra.mxu0 %v2924
    %4048 = vmatprep.subr.bf16.mxu0 %v2861
    %4049 = vmatpush1.bf16.msra.mxu0 %v2860
    %4050 = vmatprep.subr.bf16.mxu0 %v2797
    %4051 = vmatpush1.bf16.msra.mxu0 %v2796
    %4052 = vmatprep.subr.bf16.mxu0 %v2733
    %4053 = vmatpush1.bf16.msra.mxu0 %v2732
    %4054 = vmatprep.subr.bf16.mxu0 %v2669
    %4055 = vmatpush1.bf16.msra.mxu0 %v2668
    %4056 = vmatprep.subr.bf16.mxu0 %v2605
    %4057 = vmatpush1.bf16.msra.mxu0 %v2604
    %4058 = vmatprep.subr.bf16.mxu0 %v2541
    %4059 = vmatpush1.bf16.msra.mxu0 %v2540
    %4060 = vmatprep.subr.bf16.mxu0 %v2477
    %4061 = vmatpush1.bf16.msra.mxu0 %v2476
    %4062 = vmatprep.subr.bf16.mxu0 0
    %4063 = vmatpush2.bf16.msra.mxu0 0
    %4064 = vmatprep.subr.bf16.mxu0 0
    %4065 = vmatpush2.bf16.msra.mxu0 0
    %4066 = vmatprep.subr.bf16.mxu0 0
    %4067 = vmatpush2.bf16.msra.mxu0 0
    %4068 = vmatprep.subr.bf16.mxu0 0
    %4069 = vmatpush2.bf16.msra.mxu0 0
    %4070 = vmatprep.subr.bf16.mxu0 0
    %4071 = vmatpush2.bf16.msra.mxu0 0
    %4072 = vmatprep.subr.bf16.mxu0 0
    %4073 = vmatpush2.bf16.msra.mxu0 0
    %4074 = vmatprep.subr.bf16.mxu0 0
    %4075 = vmatpush2.bf16.msra.mxu0 0
    %4076 = vmatprep.subr.bf16.mxu0 0
    %4077 = vmatpush2.bf16.msra.mxu0 0
    %4078 = vmatprep.mubr.bf16.mxu0 0
    %4079 = vmatmul.mubr.bf16.gmra.mxu0 %v63
    %v4080 = vpop.f32.mrf.mxu0
    %v4081 = vadd.f32 %v707, %v4080
    %v4082 = vpop.f32.mrf.mxu0
    %v4083 = vadd.f32 %v711, %v4082
    %v4084 = vpop.f32.mrf.mxu0
    %v4085 = vpop.f32.mrf.mxu0
    %4086 = vdwg.mxu0
    %4087 = vmatprep.subr.bf16.mxu0 %v2927
    %4088 = vmatpush1.bf16.msra.mxu0 %v2926
    %4089 = vmatprep.subr.bf16.mxu0 %v2863
    %4090 = vmatpush1.bf16.msra.mxu0 %v2862
    %4091 = vmatprep.subr.bf16.mxu0 %v2799
    %4092 = vmatpush1.bf16.msra.mxu0 %v2798
    %4093 = vmatprep.subr.bf16.mxu0 %v2735
    %4094 = vmatpush1.bf16.msra.mxu0 %v2734
    %4095 = vmatprep.subr.bf16.mxu0 %v2671
    %4096 = vmatpush1.bf16.msra.mxu0 %v2670
    %4097 = vmatprep.subr.bf16.mxu0 %v2607
    %4098 = vmatpush1.bf16.msra.mxu0 %v2606
    %4099 = vmatprep.subr.bf16.mxu0 %v2543
    %4100 = vmatpush1.bf16.msra.mxu0 %v2542
    %4101 = vmatprep.subr.bf16.mxu0 %v2479
    %4102 = vmatpush1.bf16.msra.mxu0 %v2478
    %4103 = vmatprep.subr.bf16.mxu0 0
    %4104 = vmatpush2.bf16.msra.mxu0 0
    %4105 = vmatprep.subr.bf16.mxu0 0
    %4106 = vmatpush2.bf16.msra.mxu0 0
    %4107 = vmatprep.subr.bf16.mxu0 0
    %4108 = vmatpush2.bf16.msra.mxu0 0
    %4109 = vmatprep.subr.bf16.mxu0 0
    %4110 = vmatpush2.bf16.msra.mxu0 0
    %4111 = vmatprep.subr.bf16.mxu0 0
    %4112 = vmatpush2.bf16.msra.mxu0 0
    %4113 = vmatprep.subr.bf16.mxu0 0
    %4114 = vmatpush2.bf16.msra.mxu0 0
    %4115 = vmatprep.subr.bf16.mxu0 0
    %4116 = vmatpush2.bf16.msra.mxu0 0
    %4117 = vmatprep.subr.bf16.mxu0 0
    %4118 = vmatpush2.bf16.msra.mxu0 0
    %4119 = vmatprep.mubr.bf16.mxu0 0
    %4120 = vmatmul.mubr.bf16.gmra.mxu0 %v63
    %v4121 = vpop.f32.mrf.mxu0
    %v4122 = vadd.f32 %v715, %v4121
    %v4123 = vpop.f32.mrf.mxu0
    %v4124 = vadd.f32 %v719, %v4123
    %v4125 = vpop.f32.mrf.mxu0
    %v4126 = vpop.f32.mrf.mxu0
    %4127 = vdwg.mxu0
    %4128 = vmatprep.subr.bf16.mxu0 %v2929
    %4129 = vmatpush1.bf16.msra.mxu0 %v2928
    %4130 = vmatprep.subr.bf16.mxu0 %v2865
    %4131 = vmatpush1.bf16.msra.mxu0 %v2864
    %4132 = vmatprep.subr.bf16.mxu0 %v2801
    %4133 = vmatpush1.bf16.msra.mxu0 %v2800
    %4134 = vmatprep.subr.bf16.mxu0 %v2737
    %4135 = vmatpush1.bf16.msra.mxu0 %v2736
    %4136 = vmatprep.subr.bf16.mxu0 %v2673
    %4137 = vmatpush1.bf16.msra.mxu0 %v2672
    %4138 = vmatprep.subr.bf16.mxu0 %v2609
    %4139 = vmatpush1.bf16.msra.mxu0 %v2608
    %4140 = vmatprep.subr.bf16.mxu0 %v2545
    %4141 = vmatpush1.bf16.msra.mxu0 %v2544
    %4142 = vmatprep.subr.bf16.mxu0 %v2481
    %4143 = vmatpush1.bf16.msra.mxu0 %v2480
    %4144 = vmatprep.subr.bf16.mxu0 0
    %4145 = vmatpush2.bf16.msra.mxu0 0
    %4146 = vmatprep.subr.bf16.mxu0 0
    %4147 = vmatpush2.bf16.msra.mxu0 0
    %4148 = vmatprep.subr.bf16.mxu0 0
    %4149 = vmatpush2.bf16.msra.mxu0 0
    %4150 = vmatprep.subr.bf16.mxu0 0
    %4151 = vmatpush2.bf16.msra.mxu0 0
    %4152 = vmatprep.subr.bf16.mxu0 0
    %4153 = vmatpush2.bf16.msra.mxu0 0
    %4154 = vmatprep.subr.bf16.mxu0 0
    %4155 = vmatpush2.bf16.msra.mxu0 0
    %4156 = vmatprep.subr.bf16.mxu0 0
    %4157 = vmatpush2.bf16.msra.mxu0 0
    %4158 = vmatprep.subr.bf16.mxu0 0
    %4159 = vmatpush2.bf16.msra.mxu0 0
    %4160 = vmatprep.mubr.bf16.mxu0 0
    %4161 = vmatmul.mubr.bf16.gmra.mxu0 %v63
    %v4162 = vpop.f32.mrf.mxu0
    %v4163 = vadd.f32 %v723, %v4162
    %v4164 = vpop.f32.mrf.mxu0
    %v4165 = vadd.f32 %v727, %v4164
    %v4166 = vpop.f32.mrf.mxu0
    %v4167 = vpop.f32.mrf.mxu0
    %4168 = vdwg.mxu0
    %4169 = vmatprep.subr.bf16.mxu0 %v2931
    %4170 = vmatpush1.bf16.msra.mxu0 %v2930
    %4171 = vmatprep.subr.bf16.mxu0 %v2867
    %4172 = vmatpush1.bf16.msra.mxu0 %v2866
    %4173 = vmatprep.subr.bf16.mxu0 %v2803
    %4174 = vmatpush1.bf16.msra.mxu0 %v2802
    %4175 = vmatprep.subr.bf16.mxu0 %v2739
    %4176 = vmatpush1.bf16.msra.mxu0 %v2738
    %4177 = vmatprep.subr.bf16.mxu0 %v2675
    %4178 = vmatpush1.bf16.msra.mxu0 %v2674
    %4179 = vmatprep.subr.bf16.mxu0 %v2611
    %4180 = vmatpush1.bf16.msra.mxu0 %v2610
    %4181 = vmatprep.subr.bf16.mxu0 %v2547
    %4182 = vmatpush1.bf16.msra.mxu0 %v2546
    %4183 = vmatprep.subr.bf16.mxu0 %v2483
    %4184 = vmatpush1.bf16.msra.mxu0 %v2482
    %4185 = vmatprep.subr.bf16.mxu0 0
    %4186 = vmatpush2.bf16.msra.mxu0 0
    %4187 = vmatprep.subr.bf16.mxu0 0
    %4188 = vmatpush2.bf16.msra.mxu0 0
    %4189 = vmatprep.subr.bf16.mxu0 0
    %4190 = vmatpush2.bf16.msra.mxu0 0
    %4191 = vmatprep.subr.bf16.mxu0 0
    %4192 = vmatpush2.bf16.msra.mxu0 0
    %4193 = vmatprep.subr.bf16.mxu0 0
    %4194 = vmatpush2.bf16.msra.mxu0 0
    %4195 = vmatprep.subr.bf16.mxu0 0
    %4196 = vmatpush2.bf16.msra.mxu0 0
    %4197 = vmatprep.subr.bf16.mxu0 0
    %4198 = vmatpush2.bf16.msra.mxu0 0
    %4199 = vmatprep.subr.bf16.mxu0 0
    %4200 = vmatpush2.bf16.msra.mxu0 0
    %4201 = vmatprep.mubr.bf16.mxu0 0
    %4202 = vmatmul.mubr.bf16.gmra.mxu0 %v63
    %v4203 = vpop.f32.mrf.mxu0
    %v4204 = vadd.f32 %v731, %v4203
    %v4205 = vpop.f32.mrf.mxu0
    %v4206 = vadd.f32 %v735, %v4205
    %v4207 = vpop.f32.mrf.mxu0
    %v4208 = vpop.f32.mrf.mxu0
    %4209 = vdwg.mxu0
    %4210 = vmatprep.subr.bf16.mxu0 %v2933
    %4211 = vmatpush1.bf16.msra.mxu0 %v2932
    %4212 = vmatprep.subr.bf16.mxu0 %v2869
    %4213 = vmatpush1.bf16.msra.mxu0 %v2868
    %4214 = vmatprep.subr.bf16.mxu0 %v2805
    %4215 = vmatpush1.bf16.msra.mxu0 %v2804
    %4216 = vmatprep.subr.bf16.mxu0 %v2741
    %4217 = vmatpush1.bf16.msra.mxu0 %v2740
    %4218 = vmatprep.subr.bf16.mxu0 %v2677
    %4219 = vmatpush1.bf16.msra.mxu0 %v2676
    %4220 = vmatprep.subr.bf16.mxu0 %v2613
    %4221 = vmatpush1.bf16.msra.mxu0 %v2612
    %4222 = vmatprep.subr.bf16.mxu0 %v2549
    %4223 = vmatpush1.bf16.msra.mxu0 %v2548
    %4224 = vmatprep.subr.bf16.mxu0 %v2485
    %4225 = vmatpush1.bf16.msra.mxu0 %v2484
    %4226 = vmatprep.subr.bf16.mxu0 0
    %4227 = vmatpush2.bf16.msra.mxu0 0
    %4228 = vmatprep.subr.bf16.mxu0 0
    %4229 = vmatpush2.bf16.msra.mxu0 0
    %4230 = vmatprep.subr.bf16.mxu0 0
    %4231 = vmatpush2.bf16.msra.mxu0 0
    %4232 = vmatprep.subr.bf16.mxu0 0
    %4233 = vmatpush2.bf16.msra.mxu0 0
    %4234 = vmatprep.subr.bf16.mxu0 0
    %4235 = vmatpush2.bf16.msra.mxu0 0
    %4236 = vmatprep.subr.bf16.mxu0 0
    %4237 = vmatpush2.bf16.msra.mxu0 0
    %4238 = vmatprep.subr.bf16.mxu0 0
    %4239 = vmatpush2.bf16.msra.mxu0 0
    %4240 = vmatprep.subr.bf16.mxu0 0
    %4241 = vmatpush2.bf16.msra.mxu0 0
    %4242 = vmatprep.mubr.bf16.mxu0 0
    %4243 = vmatmul.mubr.bf16.gmra.mxu0 %v63
    %v4244 = vpop.f32.mrf.mxu0
    %v4245 = vadd.f32 %v739, %v4244
    %v4246 = vpop.f32.mrf.mxu0
    %v4247 = vadd.f32 %v743, %v4246
    %v4248 = vpop.f32.mrf.mxu0
    %v4249 = vpop.f32.mrf.mxu0
    %4250 = vdwg.mxu0
    %4251 = vmatprep.subr.bf16.mxu0 %v2935
    %4252 = vmatpush1.bf16.msra.mxu0 %v2934
    %4253 = vmatprep.subr.bf16.mxu0 %v2871
    %4254 = vmatpush1.bf16.msra.mxu0 %v2870
    %4255 = vmatprep.subr.bf16.mxu0 %v2807
    %4256 = vmatpush1.bf16.msra.mxu0 %v2806
    %4257 = vmatprep.subr.bf16.mxu0 %v2743
    %4258 = vmatpush1.bf16.msra.mxu0 %v2742
    %4259 = vmatprep.subr.bf16.mxu0 %v2679
    %4260 = vmatpush1.bf16.msra.mxu0 %v2678
    %4261 = vmatprep.subr.bf16.mxu0 %v2615
    %4262 = vmatpush1.bf16.msra.mxu0 %v2614
    %4263 = vmatprep.subr.bf16.mxu0 %v2551
    %4264 = vmatpush1.bf16.msra.mxu0 %v2550
    %4265 = vmatprep.subr.bf16.mxu0 %v2487
    %4266 = vmatpush1.bf16.msra.mxu0 %v2486
    %4267 = vmatprep.subr.bf16.mxu0 0
    %4268 = vmatpush2.bf16.msra.mxu0 0
    %4269 = vmatprep.subr.bf16.mxu0 0
    %4270 = vmatpush2.bf16.msra.mxu0 0
    %4271 = vmatprep.subr.bf16.mxu0 0
    %4272 = vmatpush2.bf16.msra.mxu0 0
    %4273 = vmatprep.subr.bf16.mxu0 0
    %4274 = vmatpush2.bf16.msra.mxu0 0
    %4275 = vmatprep.subr.bf16.mxu0 0
    %4276 = vmatpush2.bf16.msra.mxu0 0
    %4277 = vmatprep.subr.bf16.mxu0 0
    %4278 = vmatpush2.bf16.msra.mxu0 0
    %4279 = vmatprep.subr.bf16.mxu0 0
    %4280 = vmatpush2.bf16.msra.mxu0 0
    %4281 = vmatprep.subr.bf16.mxu0 0
    %4282 = vmatpush2.bf16.msra.mxu0 0
    %4283 = vmatprep.mubr.bf16.mxu0 0
    %4284 = vmatmul.mubr.bf16.gmra.mxu0 %v63
    %v4285 = vpop.f32.mrf.mxu0
    %v4286 = vadd.f32 %v747, %v4285
    %v4287 = vpop.f32.mrf.mxu0
    %v4288 = vadd.f32 %v751, %v4287
    %v4289 = vpop.f32.mrf.mxu0
    %v4290 = vpop.f32.mrf.mxu0
    %4291 = vdwg.mxu0
    %4292 = vmatprep.subr.bf16.mxu0 %v2937
    %4293 = vmatpush1.bf16.msra.mxu0 %v2936
    %4294 = vmatprep.subr.bf16.mxu0 %v2873
    %4295 = vmatpush1.bf16.msra.mxu0 %v2872
    %4296 = vmatprep.subr.bf16.mxu0 %v2809
    %4297 = vmatpush1.bf16.msra.mxu0 %v2808
    %4298 = vmatprep.subr.bf16.mxu0 %v2745
    %4299 = vmatpush1.bf16.msra.mxu0 %v2744
    %4300 = vmatprep.subr.bf16.mxu0 %v2681
    %4301 = vmatpush1.bf16.msra.mxu0 %v2680
    %4302 = vmatprep.subr.bf16.mxu0 %v2617
    %4303 = vmatpush1.bf16.msra.mxu0 %v2616
    %4304 = vmatprep.subr.bf16.mxu0 %v2553
    %4305 = vmatpush1.bf16.msra.mxu0 %v2552
    %4306 = vmatprep.subr.bf16.mxu0 %v2489
    %4307 = vmatpush1.bf16.msra.mxu0 %v2488
    %4308 = vmatprep.subr.bf16.mxu0 0
    %4309 = vmatpush2.bf16.msra.mxu0 0
    %4310 = vmatprep.subr.bf16.mxu0 0
    %4311 = vmatpush2.bf16.msra.mxu0 0
    %4312 = vmatprep.subr.bf16.mxu0 0
    %4313 = vmatpush2.bf16.msra.mxu0 0
    %4314 = vmatprep.subr.bf16.mxu0 0
    %4315 = vmatpush2.bf16.msra.mxu0 0
    %4316 = vmatprep.subr.bf16.mxu0 0
    %4317 = vmatpush2.bf16.msra.mxu0 0
    %4318 = vmatprep.subr.bf16.mxu0 0
    %4319 = vmatpush2.bf16.msra.mxu0 0
    %4320 = vmatprep.subr.bf16.mxu0 0
    %4321 = vmatpush2.bf16.msra.mxu0 0
    %4322 = vmatprep.subr.bf16.mxu0 0
    %4323 = vmatpush2.bf16.msra.mxu0 0
    %4324 = vmatprep.mubr.bf16.mxu0 0
    %4325 = vmatmul.mubr.bf16.gmra.mxu0 %v63
    %v4326 = vpop.f32.mrf.mxu0
    %v4327 = vadd.f32 %v755, %v4326
    %v4328 = vpop.f32.mrf.mxu0
    %v4329 = vadd.f32 %v759, %v4328
    %v4330 = vpop.f32.mrf.mxu0
    %v4331 = vpop.f32.mrf.mxu0
    %4332 = vdwg.mxu0
    %4333 = vmatprep.subr.bf16.mxu0 %v2939
    %4334 = vmatpush1.bf16.msra.mxu0 %v2938
    %4335 = vmatprep.subr.bf16.mxu0 %v2875
    %4336 = vmatpush1.bf16.msra.mxu0 %v2874
    %4337 = vmatprep.subr.bf16.mxu0 %v2811
    %4338 = vmatpush1.bf16.msra.mxu0 %v2810
    %4339 = vmatprep.subr.bf16.mxu0 %v2747
    %4340 = vmatpush1.bf16.msra.mxu0 %v2746
    %4341 = vmatprep.subr.bf16.mxu0 %v2683
    %4342 = vmatpush1.bf16.msra.mxu0 %v2682
    %4343 = vmatprep.subr.bf16.mxu0 %v2619
    %4344 = vmatpush1.bf16.msra.mxu0 %v2618
    %4345 = vmatprep.subr.bf16.mxu0 %v2555
    %4346 = vmatpush1.bf16.msra.mxu0 %v2554
    %4347 = vmatprep.subr.bf16.mxu0 %v2491
    %4348 = vmatpush1.bf16.msra.mxu0 %v2490
    %4349 = vmatprep.subr.bf16.mxu0 0
    %4350 = vmatpush2.bf16.msra.mxu0 0
    %4351 = vmatprep.subr.bf16.mxu0 0
    %4352 = vmatpush2.bf16.msra.mxu0 0
    %4353 = vmatprep.subr.bf16.mxu0 0
    %4354 = vmatpush2.bf16.msra.mxu0 0
    %4355 = vmatprep.subr.bf16.mxu0 0
    %4356 = vmatpush2.bf16.msra.mxu0 0
    %4357 = vmatprep.subr.bf16.mxu0 0
    %4358 = vmatpush2.bf16.msra.mxu0 0
    %4359 = vmatprep.subr.bf16.mxu0 0
    %4360 = vmatpush2.bf16.msra.mxu0 0
    %4361 = vmatprep.subr.bf16.mxu0 0
    %4362 = vmatpush2.bf16.msra.mxu0 0
    %4363 = vmatprep.subr.bf16.mxu0 0
    %4364 = vmatpush2.bf16.msra.mxu0 0
    %4365 = vmatprep.mubr.bf16.mxu0 0
    %4366 = vmatmul.mubr.bf16.gmra.mxu0 %v63
    %v4367 = vpop.f32.mrf.mxu0
    %v4368 = vadd.f32 %v763, %v4367
    %v4369 = vpop.f32.mrf.mxu0
    %v4370 = vadd.f32 %v767, %v4369
    %v4371 = vpop.f32.mrf.mxu0
    %v4372 = vpop.f32.mrf.mxu0
    %4373 = vdwg.mxu0
    %4374 = vmatprep.subr.bf16.mxu0 %v2941
    %4375 = vmatpush1.bf16.msra.mxu0 %v2940
    %4376 = vmatprep.subr.bf16.mxu0 %v2877
    %4377 = vmatpush1.bf16.msra.mxu0 %v2876
    %4378 = vmatprep.subr.bf16.mxu0 %v2813
    %4379 = vmatpush1.bf16.msra.mxu0 %v2812
    %4380 = vmatprep.subr.bf16.mxu0 %v2749
    %4381 = vmatpush1.bf16.msra.mxu0 %v2748
    %4382 = vmatprep.subr.bf16.mxu0 %v2685
    %4383 = vmatpush1.bf16.msra.mxu0 %v2684
    %4384 = vmatprep.subr.bf16.mxu0 %v2621
    %4385 = vmatpush1.bf16.msra.mxu0 %v2620
    %4386 = vmatprep.subr.bf16.mxu0 %v2557
    %4387 = vmatpush1.bf16.msra.mxu0 %v2556
    %4388 = vmatprep.subr.bf16.mxu0 %v2493
    %4389 = vmatpush1.bf16.msra.mxu0 %v2492
    %4390 = vmatprep.subr.bf16.mxu0 0
    %4391 = vmatpush2.bf16.msra.mxu0 0
    %4392 = vmatprep.subr.bf16.mxu0 0
    %4393 = vmatpush2.bf16.msra.mxu0 0
    %4394 = vmatprep.subr.bf16.mxu0 0
    %4395 = vmatpush2.bf16.msra.mxu0 0
    %4396 = vmatprep.subr.bf16.mxu0 0
    %4397 = vmatpush2.bf16.msra.mxu0 0
    %4398 = vmatprep.subr.bf16.mxu0 0
    %4399 = vmatpush2.bf16.msra.mxu0 0
    %4400 = vmatprep.subr.bf16.mxu0 0
    %4401 = vmatpush2.bf16.msra.mxu0 0
    %4402 = vmatprep.subr.bf16.mxu0 0
    %4403 = vmatpush2.bf16.msra.mxu0 0
    %4404 = vmatprep.subr.bf16.mxu0 0
    %4405 = vmatpush2.bf16.msra.mxu0 0
    %4406 = vmatprep.mubr.bf16.mxu0 0
    %4407 = vmatmul.mubr.bf16.gmra.mxu0 %v63
    %v4408 = vpop.f32.mrf.mxu0
    %v4409 = vadd.f32 %v771, %v4408
    %v4410 = vpop.f32.mrf.mxu0
    %v4411 = vadd.f32 %v775, %v4410
    %v4412 = vpop.f32.mrf.mxu0
    %v4413 = vpop.f32.mrf.mxu0
    %4414 = vdwg.mxu0
    %4415 = vmatprep.subr.bf16.mxu0 %v2943
    %4416 = vmatpush1.bf16.msra.mxu0 %v2942
    %4417 = vmatprep.subr.bf16.mxu0 %v2879
    %4418 = vmatpush1.bf16.msra.mxu0 %v2878
    %4419 = vmatprep.subr.bf16.mxu0 %v2815
    %4420 = vmatpush1.bf16.msra.mxu0 %v2814
    %4421 = vmatprep.subr.bf16.mxu0 %v2751
    %4422 = vmatpush1.bf16.msra.mxu0 %v2750
    %4423 = vmatprep.subr.bf16.mxu0 %v2687
    %4424 = vmatpush1.bf16.msra.mxu0 %v2686
    %4425 = vmatprep.subr.bf16.mxu0 %v2623
    %4426 = vmatpush1.bf16.msra.mxu0 %v2622
    %4427 = vmatprep.subr.bf16.mxu0 %v2559
    %4428 = vmatpush1.bf16.msra.mxu0 %v2558
    %4429 = vmatprep.subr.bf16.mxu0 %v2495
    %4430 = vmatpush1.bf16.msra.mxu0 %v2494
    %4431 = vmatprep.subr.bf16.mxu0 0
    %4432 = vmatpush2.bf16.msra.mxu0 0
    %4433 = vmatprep.subr.bf16.mxu0 0
    %4434 = vmatpush2.bf16.msra.mxu0 0
    %4435 = vmatprep.subr.bf16.mxu0 0
    %4436 = vmatpush2.bf16.msra.mxu0 0
    %4437 = vmatprep.subr.bf16.mxu0 0
    %4438 = vmatpush2.bf16.msra.mxu0 0
    %4439 = vmatprep.subr.bf16.mxu0 0
    %4440 = vmatpush2.bf16.msra.mxu0 0
    %4441 = vmatprep.subr.bf16.mxu0 0
    %4442 = vmatpush2.bf16.msra.mxu0 0
    %4443 = vmatprep.subr.bf16.mxu0 0
    %4444 = vmatpush2.bf16.msra.mxu0 0
    %4445 = vmatprep.subr.bf16.mxu0 0
    %4446 = vmatpush2.bf16.msra.mxu0 0
    %4447 = vmatprep.mubr.bf16.mxu0 0
    %4448 = vmatmul.mubr.bf16.gmra.mxu0 %v63
    %v4449 = vpop.f32.mrf.mxu0
    %v4450 = vadd.f32 %v779, %v4449
    %v4451 = vpop.f32.mrf.mxu0
    %v4452 = vadd.f32 %v783, %v4451
    %v4453 = vpop.f32.mrf.mxu0
    %v4454 = vpop.f32.mrf.mxu0
    %4455 = vdwg.mxu0
    %4456 = vmatprep.subr.bf16.mxu0 %v2945
    %4457 = vmatpush1.bf16.msra.mxu0 %v2944
    %4458 = vmatprep.subr.bf16.mxu0 %v2881
    %4459 = vmatpush1.bf16.msra.mxu0 %v2880
    %4460 = vmatprep.subr.bf16.mxu0 %v2817
    %4461 = vmatpush1.bf16.msra.mxu0 %v2816
    %4462 = vmatprep.subr.bf16.mxu0 %v2753
    %4463 = vmatpush1.bf16.msra.mxu0 %v2752
    %4464 = vmatprep.subr.bf16.mxu0 %v2689
    %4465 = vmatpush1.bf16.msra.mxu0 %v2688
    %4466 = vmatprep.subr.bf16.mxu0 %v2625
    %4467 = vmatpush1.bf16.msra.mxu0 %v2624
    %4468 = vmatprep.subr.bf16.mxu0 %v2561
    %4469 = vmatpush1.bf16.msra.mxu0 %v2560
    %4470 = vmatprep.subr.bf16.mxu0 %v2497
    %4471 = vmatpush1.bf16.msra.mxu0 %v2496
    %4472 = vmatprep.subr.bf16.mxu0 0
    %4473 = vmatpush2.bf16.msra.mxu0 0
    %4474 = vmatprep.subr.bf16.mxu0 0
    %4475 = vmatpush2.bf16.msra.mxu0 0
    %4476 = vmatprep.subr.bf16.mxu0 0
    %4477 = vmatpush2.bf16.msra.mxu0 0
    %4478 = vmatprep.subr.bf16.mxu0 0
    %4479 = vmatpush2.bf16.msra.mxu0 0
    %4480 = vmatprep.subr.bf16.mxu0 0
    %4481 = vmatpush2.bf16.msra.mxu0 0
    %4482 = vmatprep.subr.bf16.mxu0 0
    %4483 = vmatpush2.bf16.msra.mxu0 0
    %4484 = vmatprep.subr.bf16.mxu0 0
    %4485 = vmatpush2.bf16.msra.mxu0 0
    %4486 = vmatprep.subr.bf16.mxu0 0
    %4487 = vmatpush2.bf16.msra.mxu0 0
    %4488 = vmatprep.mubr.bf16.mxu0 0
    %4489 = vmatmul.mubr.bf16.gmra.mxu0 %v63
    %v4490 = vpop.f32.mrf.mxu0
    %v4491 = vadd.f32 %v787, %v4490
    %v4492 = vpop.f32.mrf.mxu0
    %v4493 = vadd.f32 %v791, %v4492
    %v4494 = vpop.f32.mrf.mxu0
    %v4495 = vpop.f32.mrf.mxu0
    %4496 = vdwg.mxu0
    %4497 = vmatprep.subr.bf16.mxu0 %v2947
    %4498 = vmatpush1.bf16.msra.mxu0 %v2946
    %4499 = vmatprep.subr.bf16.mxu0 %v2883
    %4500 = vmatpush1.bf16.msra.mxu0 %v2882
    %4501 = vmatprep.subr.bf16.mxu0 %v2819
    %4502 = vmatpush1.bf16.msra.mxu0 %v2818
    %4503 = vmatprep.subr.bf16.mxu0 %v2755
    %4504 = vmatpush1.bf16.msra.mxu0 %v2754
    %4505 = vmatprep.subr.bf16.mxu0 %v2691
    %4506 = vmatpush1.bf16.msra.mxu0 %v2690
    %4507 = vmatprep.subr.bf16.mxu0 %v2627
    %4508 = vmatpush1.bf16.msra.mxu0 %v2626
    %4509 = vmatprep.subr.bf16.mxu0 %v2563
    %4510 = vmatpush1.bf16.msra.mxu0 %v2562
    %4511 = vmatprep.subr.bf16.mxu0 %v2499
    %4512 = vmatpush1.bf16.msra.mxu0 %v2498
    %4513 = vmatprep.subr.bf16.mxu0 0
    %4514 = vmatpush2.bf16.msra.mxu0 0
    %4515 = vmatprep.subr.bf16.mxu0 0
    %4516 = vmatpush2.bf16.msra.mxu0 0
    %4517 = vmatprep.subr.bf16.mxu0 0
    %4518 = vmatpush2.bf16.msra.mxu0 0
    %4519 = vmatprep.subr.bf16.mxu0 0
    %4520 = vmatpush2.bf16.msra.mxu0 0
    %4521 = vmatprep.subr.bf16.mxu0 0
    %4522 = vmatpush2.bf16.msra.mxu0 0
    %4523 = vmatprep.subr.bf16.mxu0 0
    %4524 = vmatpush2.bf16.msra.mxu0 0
    %4525 = vmatprep.subr.bf16.mxu0 0
    %4526 = vmatpush2.bf16.msra.mxu0 0
    %4527 = vmatprep.subr.bf16.mxu0 0
    %4528 = vmatpush2.bf16.msra.mxu0 0
    %4529 = vmatprep.mubr.bf16.mxu0 0
    %4530 = vmatmul.mubr.bf16.gmra.mxu0 %v63
    %v4531 = vpop.f32.mrf.mxu0
    %v4532 = vadd.f32 %v795, %v4531
    %v4533 = vpop.f32.mrf.mxu0
    %v4534 = vadd.f32 %v799, %v4533
    %v4535 = vpop.f32.mrf.mxu0
    %v4536 = vpop.f32.mrf.mxu0
    %4537 = vdwg.mxu0
    %4538 = vmatprep.subr.bf16.mxu0 %v2949
    %4539 = vmatpush1.bf16.msra.mxu0 %v2948
    %4540 = vmatprep.subr.bf16.mxu0 %v2885
    %4541 = vmatpush1.bf16.msra.mxu0 %v2884
    %4542 = vmatprep.subr.bf16.mxu0 %v2821
    %4543 = vmatpush1.bf16.msra.mxu0 %v2820
    %4544 = vmatprep.subr.bf16.mxu0 %v2757
    %4545 = vmatpush1.bf16.msra.mxu0 %v2756
    %4546 = vmatprep.subr.bf16.mxu0 %v2693
    %4547 = vmatpush1.bf16.msra.mxu0 %v2692
    %4548 = vmatprep.subr.bf16.mxu0 %v2629
    %4549 = vmatpush1.bf16.msra.mxu0 %v2628
    %4550 = vmatprep.subr.bf16.mxu0 %v2565
    %4551 = vmatpush1.bf16.msra.mxu0 %v2564
    %4552 = vmatprep.subr.bf16.mxu0 %v2501
    %4553 = vmatpush1.bf16.msra.mxu0 %v2500
    %4554 = vmatprep.subr.bf16.mxu0 0
    %4555 = vmatpush2.bf16.msra.mxu0 0
    %4556 = vmatprep.subr.bf16.mxu0 0
    %4557 = vmatpush2.bf16.msra.mxu0 0
    %4558 = vmatprep.subr.bf16.mxu0 0
    %4559 = vmatpush2.bf16.msra.mxu0 0
    %4560 = vmatprep.subr.bf16.mxu0 0
    %4561 = vmatpush2.bf16.msra.mxu0 0
    %4562 = vmatprep.subr.bf16.mxu0 0
    %4563 = vmatpush2.bf16.msra.mxu0 0
    %4564 = vmatprep.subr.bf16.mxu0 0
    %4565 = vmatpush2.bf16.msra.mxu0 0
    %4566 = vmatprep.subr.bf16.mxu0 0
    %4567 = vmatpush2.bf16.msra.mxu0 0
    %4568 = vmatprep.subr.bf16.mxu0 0
    %4569 = vmatpush2.bf16.msra.mxu0 0
    %4570 = vmatprep.mubr.bf16.mxu0 0
    %4571 = vmatmul.mubr.bf16.gmra.mxu0 %v63
    %v4572 = vpop.f32.mrf.mxu0
    %v4573 = vadd.f32 %v803, %v4572
    %v4574 = vpop.f32.mrf.mxu0
    %v4575 = vadd.f32 %v807, %v4574
    %v4576 = vpop.f32.mrf.mxu0
    %v4577 = vpop.f32.mrf.mxu0
    %4578 = vdwg.mxu0
    %4579 = vmatprep.subr.bf16.mxu0 %v2951
    %4580 = vmatpush1.bf16.msra.mxu0 %v2950
    %4581 = vmatprep.subr.bf16.mxu0 %v2887
    %4582 = vmatpush1.bf16.msra.mxu0 %v2886
    %4583 = vmatprep.subr.bf16.mxu0 %v2823
    %4584 = vmatpush1.bf16.msra.mxu0 %v2822
    %4585 = vmatprep.subr.bf16.mxu0 %v2759
    %4586 = vmatpush1.bf16.msra.mxu0 %v2758
    %4587 = vmatprep.subr.bf16.mxu0 %v2695
    %4588 = vmatpush1.bf16.msra.mxu0 %v2694
    %4589 = vmatprep.subr.bf16.mxu0 %v2631
    %4590 = vmatpush1.bf16.msra.mxu0 %v2630
    %4591 = vmatprep.subr.bf16.mxu0 %v2567
    %4592 = vmatpush1.bf16.msra.mxu0 %v2566
    %4593 = vmatprep.subr.bf16.mxu0 %v2503
    %4594 = vmatpush1.bf16.msra.mxu0 %v2502
    %4595 = vmatprep.subr.bf16.mxu0 0
    %4596 = vmatpush2.bf16.msra.mxu0 0
    %4597 = vmatprep.subr.bf16.mxu0 0
    %4598 = vmatpush2.bf16.msra.mxu0 0
    %4599 = vmatprep.subr.bf16.mxu0 0
    %4600 = vmatpush2.bf16.msra.mxu0 0
    %4601 = vmatprep.subr.bf16.mxu0 0
    %4602 = vmatpush2.bf16.msra.mxu0 0
    %4603 = vmatprep.subr.bf16.mxu0 0
    %4604 = vmatpush2.bf16.msra.mxu0 0
    %4605 = vmatprep.subr.bf16.mxu0 0
    %4606 = vmatpush2.bf16.msra.mxu0 0
    %4607 = vmatprep.subr.bf16.mxu0 0
    %4608 = vmatpush2.bf16.msra.mxu0 0
    %4609 = vmatprep.subr.bf16.mxu0 0
    %4610 = vmatpush2.bf16.msra.mxu0 0
    %4611 = vmatprep.mubr.bf16.mxu0 0
    %4612 = vmatmul.mubr.bf16.gmra.mxu0 %v63
    %v4613 = vpop.f32.mrf.mxu0
    %v4614 = vadd.f32 %v811, %v4613
    %v4615 = vpop.f32.mrf.mxu0
    %v4616 = vadd.f32 %v815, %v4615
    %v4617 = vpop.f32.mrf.mxu0
    %v4618 = vpop.f32.mrf.mxu0
    %4619 = vdwg.mxu0
    %4620 = vmatprep.subr.bf16.mxu0 %v2953
    %4621 = vmatpush1.bf16.msra.mxu0 %v2952
    %4622 = vmatprep.subr.bf16.mxu0 %v2889
    %4623 = vmatpush1.bf16.msra.mxu0 %v2888
    %4624 = vmatprep.subr.bf16.mxu0 %v2825
    %4625 = vmatpush1.bf16.msra.mxu0 %v2824
    %4626 = vmatprep.subr.bf16.mxu0 %v2761
    %4627 = vmatpush1.bf16.msra.mxu0 %v2760
    %4628 = vmatprep.subr.bf16.mxu0 %v2697
    %4629 = vmatpush1.bf16.msra.mxu0 %v2696
    %4630 = vmatprep.subr.bf16.mxu0 %v2633
    %4631 = vmatpush1.bf16.msra.mxu0 %v2632
    %4632 = vmatprep.subr.bf16.mxu0 %v2569
    %4633 = vmatpush1.bf16.msra.mxu0 %v2568
    %4634 = vmatprep.subr.bf16.mxu0 %v2505
    %4635 = vmatpush1.bf16.msra.mxu0 %v2504
    %4636 = vmatprep.subr.bf16.mxu0 0
    %4637 = vmatpush2.bf16.msra.mxu0 0
    %4638 = vmatprep.subr.bf16.mxu0 0
    %4639 = vmatpush2.bf16.msra.mxu0 0
    %4640 = vmatprep.subr.bf16.mxu0 0
    %4641 = vmatpush2.bf16.msra.mxu0 0
    %4642 = vmatprep.subr.bf16.mxu0 0
    %4643 = vmatpush2.bf16.msra.mxu0 0
    %4644 = vmatprep.subr.bf16.mxu0 0
    %4645 = vmatpush2.bf16.msra.mxu0 0
    %4646 = vmatprep.subr.bf16.mxu0 0
    %4647 = vmatpush2.bf16.msra.mxu0 0
    %4648 = vmatprep.subr.bf16.mxu0 0
    %4649 = vmatpush2.bf16.msra.mxu0 0
    %4650 = vmatprep.subr.bf16.mxu0 0
    %4651 = vmatpush2.bf16.msra.mxu0 0
    %4652 = vmatprep.mubr.bf16.mxu0 0
    %4653 = vmatmul.mubr.bf16.gmra.mxu0 %v63
    %v4654 = vpop.f32.mrf.mxu0
    %v4655 = vadd.f32 %v819, %v4654
    %v4656 = vpop.f32.mrf.mxu0
    %v4657 = vadd.f32 %v823, %v4656
    %v4658 = vpop.f32.mrf.mxu0
    %v4659 = vpop.f32.mrf.mxu0
    %4660 = vdwg.mxu0
    %4661 = vmatprep.subr.bf16.mxu0 %v2955
    %4662 = vmatpush1.bf16.msra.mxu0 %v2954
    %4663 = vmatprep.subr.bf16.mxu0 %v2891
    %4664 = vmatpush1.bf16.msra.mxu0 %v2890
    %4665 = vmatprep.subr.bf16.mxu0 %v2827
    %4666 = vmatpush1.bf16.msra.mxu0 %v2826
    %4667 = vmatprep.subr.bf16.mxu0 %v2763
    %4668 = vmatpush1.bf16.msra.mxu0 %v2762
    %4669 = vmatprep.subr.bf16.mxu0 %v2699
    %4670 = vmatpush1.bf16.msra.mxu0 %v2698
    %4671 = vmatprep.subr.bf16.mxu0 %v2635
    %4672 = vmatpush1.bf16.msra.mxu0 %v2634
    %4673 = vmatprep.subr.bf16.mxu0 %v2571
    %4674 = vmatpush1.bf16.msra.mxu0 %v2570
    %4675 = vmatprep.subr.bf16.mxu0 %v2507
    %4676 = vmatpush1.bf16.msra.mxu0 %v2506
    %4677 = vmatprep.subr.bf16.mxu0 0
    %4678 = vmatpush2.bf16.msra.mxu0 0
    %4679 = vmatprep.subr.bf16.mxu0 0
    %4680 = vmatpush2.bf16.msra.mxu0 0
    %4681 = vmatprep.subr.bf16.mxu0 0
    %4682 = vmatpush2.bf16.msra.mxu0 0
    %4683 = vmatprep.subr.bf16.mxu0 0
    %4684 = vmatpush2.bf16.msra.mxu0 0
    %4685 = vmatprep.subr.bf16.mxu0 0
    %4686 = vmatpush2.bf16.msra.mxu0 0
    %4687 = vmatprep.subr.bf16.mxu0 0
    %4688 = vmatpush2.bf16.msra.mxu0 0
    %4689 = vmatprep.subr.bf16.mxu0 0
    %4690 = vmatpush2.bf16.msra.mxu0 0
    %4691 = vmatprep.subr.bf16.mxu0 0
    %4692 = vmatpush2.bf16.msra.mxu0 0
    %4693 = vmatprep.mubr.bf16.mxu0 0
    %4694 = vmatmul.mubr.bf16.gmra.mxu0 %v63
    %v4695 = vpop.f32.mrf.mxu0
    %v4696 = vadd.f32 %v827, %v4695
    %v4697 = vpop.f32.mrf.mxu0
    %v4698 = vadd.f32 %v831, %v4697
    %v4699 = vpop.f32.mrf.mxu0
    %v4700 = vpop.f32.mrf.mxu0
    %4701 = vdwg.mxu0
    %4702 = vmatprep.subr.bf16.mxu0 %v2957
    %4703 = vmatpush1.bf16.msra.mxu0 %v2956
    %4704 = vmatprep.subr.bf16.mxu0 %v2893
    %4705 = vmatpush1.bf16.msra.mxu0 %v2892
    %4706 = vmatprep.subr.bf16.mxu0 %v2829
    %4707 = vmatpush1.bf16.msra.mxu0 %v2828
    %4708 = vmatprep.subr.bf16.mxu0 %v2765
    %4709 = vmatpush1.bf16.msra.mxu0 %v2764
    %4710 = vmatprep.subr.bf16.mxu0 %v2701
    %4711 = vmatpush1.bf16.msra.mxu0 %v2700
    %4712 = vmatprep.subr.bf16.mxu0 %v2637
    %4713 = vmatpush1.bf16.msra.mxu0 %v2636
    %4714 = vmatprep.subr.bf16.mxu0 %v2573
    %4715 = vmatpush1.bf16.msra.mxu0 %v2572
    %4716 = vmatprep.subr.bf16.mxu0 %v2509
    %4717 = vmatpush1.bf16.msra.mxu0 %v2508
    %4718 = vmatprep.subr.bf16.mxu0 0
    %4719 = vmatpush2.bf16.msra.mxu0 0
    %4720 = vmatprep.subr.bf16.mxu0 0
    %4721 = vmatpush2.bf16.msra.mxu0 0
    %4722 = vmatprep.subr.bf16.mxu0 0
    %4723 = vmatpush2.bf16.msra.mxu0 0
    %4724 = vmatprep.subr.bf16.mxu0 0
    %4725 = vmatpush2.bf16.msra.mxu0 0
    %4726 = vmatprep.subr.bf16.mxu0 0
    %4727 = vmatpush2.bf16.msra.mxu0 0
    %4728 = vmatprep.subr.bf16.mxu0 0
    %4729 = vmatpush2.bf16.msra.mxu0 0
    %4730 = vmatprep.subr.bf16.mxu0 0
    %4731 = vmatpush2.bf16.msra.mxu0 0
    %4732 = vmatprep.subr.bf16.mxu0 0
    %4733 = vmatpush2.bf16.msra.mxu0 0
    %4734 = vmatprep.mubr.bf16.mxu0 0
    %4735 = vmatmul.mubr.bf16.gmra.mxu0 %v63
    %v4736 = vpop.f32.mrf.mxu0
    %v4737 = vadd.f32 %v835, %v4736
    %v4738 = vpop.f32.mrf.mxu0
    %v4739 = vadd.f32 %v839, %v4738
    %v4740 = vpop.f32.mrf.mxu0
    %v4741 = vpop.f32.mrf.mxu0
    %4742 = vdwg.mxu0
    %4743 = vmatprep.subr.bf16.mxu0 %v2959
    %4744 = vmatpush1.bf16.msra.mxu0 %v2958
    %4745 = vmatprep.subr.bf16.mxu0 %v2895
    %4746 = vmatpush1.bf16.msra.mxu0 %v2894
    %4747 = vmatprep.subr.bf16.mxu0 %v2831
    %4748 = vmatpush1.bf16.msra.mxu0 %v2830
    %4749 = vmatprep.subr.bf16.mxu0 %v2767
    %4750 = vmatpush1.bf16.msra.mxu0 %v2766
    %4751 = vmatprep.subr.bf16.mxu0 %v2703
    %4752 = vmatpush1.bf16.msra.mxu0 %v2702
    %4753 = vmatprep.subr.bf16.mxu0 %v2639
    %4754 = vmatpush1.bf16.msra.mxu0 %v2638
    %4755 = vmatprep.subr.bf16.mxu0 %v2575
    %4756 = vmatpush1.bf16.msra.mxu0 %v2574
    %4757 = vmatprep.subr.bf16.mxu0 %v2511
    %4758 = vmatpush1.bf16.msra.mxu0 %v2510
    %4759 = vmatprep.subr.bf16.mxu0 0
    %4760 = vmatpush2.bf16.msra.mxu0 0
    %4761 = vmatprep.subr.bf16.mxu0 0
    %4762 = vmatpush2.bf16.msra.mxu0 0
    %4763 = vmatprep.subr.bf16.mxu0 0
    %4764 = vmatpush2.bf16.msra.mxu0 0
    %4765 = vmatprep.subr.bf16.mxu0 0
    %4766 = vmatpush2.bf16.msra.mxu0 0
    %4767 = vmatprep.subr.bf16.mxu0 0
    %4768 = vmatpush2.bf16.msra.mxu0 0
    %4769 = vmatprep.subr.bf16.mxu0 0
    %4770 = vmatpush2.bf16.msra.mxu0 0
    %4771 = vmatprep.subr.bf16.mxu0 0
    %4772 = vmatpush2.bf16.msra.mxu0 0
    %4773 = vmatprep.subr.bf16.mxu0 0
    %4774 = vmatpush2.bf16.msra.mxu0 0
    %4775 = vmatprep.mubr.bf16.mxu0 0
    %4776 = vmatmul.mubr.bf16.gmra.mxu0 %v63
    %v4777 = vpop.f32.mrf.mxu0
    %v4778 = vadd.f32 %v843, %v4777
    %v4779 = vpop.f32.mrf.mxu0
    %v4780 = vadd.f32 %v847, %v4779
    %v4781 = vpop.f32.mrf.mxu0
    %v4782 = vpop.f32.mrf.mxu0
    %4783 = vdwg.mxu0
    %v4848 = vcombine.low %v3507, %v3509
    %v4849 = vcombine.low %v3548, %v3550
    %v4851 = vunpack.c.l.s4 1983009808
    %v4852 = vunpack.c.0.s8 %v4851
    %v4853 = vlaneseq
    %v4854 = vshrl.u32 %v4853, 7
    %v4855 = vsub.s32 %v4852, %v4854
    %v4856 = vrot.slane %v4848, %v4855
    %v4858 = vunpack.c.l.s4 1983009808
    %v4859 = vunpack.c.0.s8 %v4858
    %v4860 = vlaneseq
    %v4861 = vshrl.u32 %v4860, 7
    %v4862 = vsub.s32 %v4859, %v4861
    %v4863 = vrot.slane %v4849, %v4862
    %v4864 = vcombine.low %v4856, %v4863
    %v4865 = vcombine.low %v3589, %v3591
    %v4866 = vcombine.low %v3630, %v3632
    %v4868 = vunpack.c.l.s4 1983009808
    %v4869 = vunpack.c.0.s8 %v4868
    %v4870 = vlaneseq
    %v4871 = vshrl.u32 %v4870, 7
    %v4872 = vsub.s32 %v4869, %v4871
    %v4873 = vrot.slane %v4865, %v4872
    %v4875 = vunpack.c.l.s4 1983009808
    %v4876 = vunpack.c.0.s8 %v4875
    %v4877 = vlaneseq
    %v4878 = vshrl.u32 %v4877, 7
    %v4879 = vsub.s32 %v4876, %v4878
    %v4880 = vrot.slane %v4866, %v4879
    %v4881 = vcombine.low %v4873, %v4880
    %v4882 = vcombine.low %v3671, %v3673
    %v4883 = vcombine.low %v3712, %v3714
    %v4885 = vunpack.c.l.s4 1983009808
    %v4886 = vunpack.c.0.s8 %v4885
    %v4887 = vlaneseq
    %v4888 = vshrl.u32 %v4887, 7
    %v4889 = vsub.s32 %v4886, %v4888
    %v4890 = vrot.slane %v4882, %v4889
    %v4892 = vunpack.c.l.s4 1983009808
    %v4893 = vunpack.c.0.s8 %v4892
    %v4894 = vlaneseq
    %v4895 = vshrl.u32 %v4894, 7
    %v4896 = vsub.s32 %v4893, %v4895
    %v4897 = vrot.slane %v4883, %v4896
    %v4898 = vcombine.low %v4890, %v4897
    %v4899 = vcombine.low %v3753, %v3755
    %v4900 = vcombine.low %v3794, %v3796
    %v4902 = vunpack.c.l.s4 1983009808
    %v4903 = vunpack.c.0.s8 %v4902
    %v4904 = vlaneseq
    %v4905 = vshrl.u32 %v4904, 7
    %v4906 = vsub.s32 %v4903, %v4905
    %v4907 = vrot.slane %v4899, %v4906
    %v4909 = vunpack.c.l.s4 1983009808
    %v4910 = vunpack.c.0.s8 %v4909
    %v4911 = vlaneseq
    %v4912 = vshrl.u32 %v4911, 7
    %v4913 = vsub.s32 %v4910, %v4912
    %v4914 = vrot.slane %v4900, %v4913
    %v4915 = vcombine.low %v4907, %v4914
    %v4916 = vcombine.low %v3835, %v3837
    %v4917 = vcombine.low %v3876, %v3878
    %v4919 = vunpack.c.l.s4 1983009808
    %v4920 = vunpack.c.0.s8 %v4919
    %v4921 = vlaneseq
    %v4922 = vshrl.u32 %v4921, 7
    %v4923 = vsub.s32 %v4920, %v4922
    %v4924 = vrot.slane %v4916, %v4923
    %v4926 = vunpack.c.l.s4 1983009808
    %v4927 = vunpack.c.0.s8 %v4926
    %v4928 = vlaneseq
    %v4929 = vshrl.u32 %v4928, 7
    %v4930 = vsub.s32 %v4927, %v4929
    %v4931 = vrot.slane %v4917, %v4930
    %v4932 = vcombine.low %v4924, %v4931
    %v4933 = vcombine.low %v3917, %v3919
    %v4934 = vcombine.low %v3958, %v3960
    %v4936 = vunpack.c.l.s4 1983009808
    %v4937 = vunpack.c.0.s8 %v4936
    %v4938 = vlaneseq
    %v4939 = vshrl.u32 %v4938, 7
    %v4940 = vsub.s32 %v4937, %v4939
    %v4941 = vrot.slane %v4933, %v4940
    %v4943 = vunpack.c.l.s4 1983009808
    %v4944 = vunpack.c.0.s8 %v4943
    %v4945 = vlaneseq
    %v4946 = vshrl.u32 %v4945, 7
    %v4947 = vsub.s32 %v4944, %v4946
    %v4948 = vrot.slane %v4934, %v4947
    %v4949 = vcombine.low %v4941, %v4948
    %v4950 = vcombine.low %v3999, %v4001
    %v4951 = vcombine.low %v4040, %v4042
    %v4953 = vunpack.c.l.s4 1983009808
    %v4954 = vunpack.c.0.s8 %v4953
    %v4955 = vlaneseq
    %v4956 = vshrl.u32 %v4955, 7
    %v4957 = vsub.s32 %v4954, %v4956
    %v4958 = vrot.slane %v4950, %v4957
    %v4960 = vunpack.c.l.s4 1983009808
    %v4961 = vunpack.c.0.s8 %v4960
    %v4962 = vlaneseq
    %v4963 = vshrl.u32 %v4962, 7
    %v4964 = vsub.s32 %v4961, %v4963
    %v4965 = vrot.slane %v4951, %v4964
    %v4966 = vcombine.low %v4958, %v4965
    %v4967 = vcombine.low %v4081, %v4083
    %v4968 = vcombine.low %v4122, %v4124
    %v4970 = vunpack.c.l.s4 1983009808
    %v4971 = vunpack.c.0.s8 %v4970
    %v4972 = vlaneseq
    %v4973 = vshrl.u32 %v4972, 7
    %v4974 = vsub.s32 %v4971, %v4973
    %v4975 = vrot.slane %v4967, %v4974
    %v4977 = vunpack.c.l.s4 1983009808
    %v4978 = vunpack.c.0.s8 %v4977
    %v4979 = vlaneseq
    %v4980 = vshrl.u32 %v4979, 7
    %v4981 = vsub.s32 %v4978, %v4980
    %v4982 = vrot.slane %v4968, %v4981
    %v4983 = vcombine.low %v4975, %v4982
    %v4984 = vcombine.low %v4163, %v4165
    %v4985 = vcombine.low %v4204, %v4206
    %v4987 = vunpack.c.l.s4 1983009808
    %v4988 = vunpack.c.0.s8 %v4987
    %v4989 = vlaneseq
    %v4990 = vshrl.u32 %v4989, 7
    %v4991 = vsub.s32 %v4988, %v4990
    %v4992 = vrot.slane %v4984, %v4991
    %v4994 = vunpack.c.l.s4 1983009808
    %v4995 = vunpack.c.0.s8 %v4994
    %v4996 = vlaneseq
    %v4997 = vshrl.u32 %v4996, 7
    %v4998 = vsub.s32 %v4995, %v4997
    %v4999 = vrot.slane %v4985, %v4998
    %v5000 = vcombine.low %v4992, %v4999
    %v5001 = vcombine.low %v4245, %v4247
    %v5002 = vcombine.low %v4286, %v4288
    %v5004 = vunpack.c.l.s4 1983009808
    %v5005 = vunpack.c.0.s8 %v5004
    %v5006 = vlaneseq
    %v5007 = vshrl.u32 %v5006, 7
    %v5008 = vsub.s32 %v5005, %v5007
    %v5009 = vrot.slane %v5001, %v5008
    %v5011 = vunpack.c.l.s4 1983009808
    %v5012 = vunpack.c.0.s8 %v5011
    %v5013 = vlaneseq
    %v5014 = vshrl.u32 %v5013, 7
    %v5015 = vsub.s32 %v5012, %v5014
    %v5016 = vrot.slane %v5002, %v5015
    %v5017 = vcombine.low %v5009, %v5016
    %v5018 = vcombine.low %v4327, %v4329
    %v5019 = vcombine.low %v4368, %v4370
    %v5021 = vunpack.c.l.s4 1983009808
    %v5022 = vunpack.c.0.s8 %v5021
    %v5023 = vlaneseq
    %v5024 = vshrl.u32 %v5023, 7
    %v5025 = vsub.s32 %v5022, %v5024
    %v5026 = vrot.slane %v5018, %v5025
    %v5028 = vunpack.c.l.s4 1983009808
    %v5029 = vunpack.c.0.s8 %v5028
    %v5030 = vlaneseq
    %v5031 = vshrl.u32 %v5030, 7
    %v5032 = vsub.s32 %v5029, %v5031
    %v5033 = vrot.slane %v5019, %v5032
    %v5034 = vcombine.low %v5026, %v5033
    %v5035 = vcombine.low %v4409, %v4411
    %v5036 = vcombine.low %v4450, %v4452
    %v5038 = vunpack.c.l.s4 1983009808
    %v5039 = vunpack.c.0.s8 %v5038
    %v5040 = vlaneseq
    %v5041 = vshrl.u32 %v5040, 7
    %v5042 = vsub.s32 %v5039, %v5041
    %v5043 = vrot.slane %v5035, %v5042
    %v5045 = vunpack.c.l.s4 1983009808
    %v5046 = vunpack.c.0.s8 %v5045
    %v5047 = vlaneseq
    %v5048 = vshrl.u32 %v5047, 7
    %v5049 = vsub.s32 %v5046, %v5048
    %v5050 = vrot.slane %v5036, %v5049
    %v5051 = vcombine.low %v5043, %v5050
    %v5052 = vcombine.low %v4491, %v4493
    %v5053 = vcombine.low %v4532, %v4534
    %v5055 = vunpack.c.l.s4 1983009808
    %v5056 = vunpack.c.0.s8 %v5055
    %v5057 = vlaneseq
    %v5058 = vshrl.u32 %v5057, 7
    %v5059 = vsub.s32 %v5056, %v5058
    %v5060 = vrot.slane %v5052, %v5059
    %v5062 = vunpack.c.l.s4 1983009808
    %v5063 = vunpack.c.0.s8 %v5062
    %v5064 = vlaneseq
    %v5065 = vshrl.u32 %v5064, 7
    %v5066 = vsub.s32 %v5063, %v5065
    %v5067 = vrot.slane %v5053, %v5066
    %v5068 = vcombine.low %v5060, %v5067
    %v5069 = vcombine.low %v4573, %v4575
    %v5070 = vcombine.low %v4614, %v4616
    %v5072 = vunpack.c.l.s4 1983009808
    %v5073 = vunpack.c.0.s8 %v5072
    %v5074 = vlaneseq
    %v5075 = vshrl.u32 %v5074, 7
    %v5076 = vsub.s32 %v5073, %v5075
    %v5077 = vrot.slane %v5069, %v5076
    %v5079 = vunpack.c.l.s4 1983009808
    %v5080 = vunpack.c.0.s8 %v5079
    %v5081 = vlaneseq
    %v5082 = vshrl.u32 %v5081, 7
    %v5083 = vsub.s32 %v5080, %v5082
    %v5084 = vrot.slane %v5070, %v5083
    %v5085 = vcombine.low %v5077, %v5084
    %v5086 = vcombine.low %v4655, %v4657
    %v5087 = vcombine.low %v4696, %v4698
    %v5089 = vunpack.c.l.s4 1983009808
    %v5090 = vunpack.c.0.s8 %v5089
    %v5091 = vlaneseq
    %v5092 = vshrl.u32 %v5091, 7
    %v5093 = vsub.s32 %v5090, %v5092
    %v5094 = vrot.slane %v5086, %v5093
    %v5096 = vunpack.c.l.s4 1983009808
    %v5097 = vunpack.c.0.s8 %v5096
    %v5098 = vlaneseq
    %v5099 = vshrl.u32 %v5098, 7
    %v5100 = vsub.s32 %v5097, %v5099
    %v5101 = vrot.slane %v5087, %v5100
    %v5102 = vcombine.low %v5094, %v5101
    %v5103 = vcombine.low %v4737, %v4739
    %v5104 = vcombine.low %v4778, %v4780
    %v5106 = vunpack.c.l.s4 1983009808
    %v5107 = vunpack.c.0.s8 %v5106
    %v5108 = vlaneseq
    %v5109 = vshrl.u32 %v5108, 7
    %v5110 = vsub.s32 %v5107, %v5109
    %v5111 = vrot.slane %v5103, %v5110
    %v5113 = vunpack.c.l.s4 1983009808
    %v5114 = vunpack.c.0.s8 %v5113
    %v5115 = vlaneseq
    %v5116 = vshrl.u32 %v5115, 7
    %v5117 = vsub.s32 %v5114, %v5116
    %v5118 = vrot.slane %v5104, %v5117
    %v5119 = vcombine.low %v5111, %v5118
    %5136 = vst [vmem:[%s3] sm:$0xff] %v4864
    %5137 = vst [vmem:[%s3 + $0x8] sm:$0xff] %v4881
    %5138 = vst [vmem:[%s3 + $0x10] sm:$0xff] %v4898
    %5139 = vst [vmem:[%s3 + $0x18] sm:$0xff] %v4915
    %5140 = vst [vmem:[%s3 + $0x20] sm:$0xff] %v4932
    %5141 = vst [vmem:[%s3 + $0x28] sm:$0xff] %v4949
    %5142 = vst [vmem:[%s3 + $0x30] sm:$0xff] %v4966
    %5143 = vst [vmem:[%s3 + $0x38] sm:$0xff] %v4983
    %5144 = vst [vmem:[%s3 + $0x40] sm:$0xff] %v5000
    %5145 = vst [vmem:[%s3 + $0x48] sm:$0xff] %v5017
    %5146 = vst [vmem:[%s3 + $0x50] sm:$0xff] %v5034
    %5147 = vst [vmem:[%s3 + $0x58] sm:$0xff] %v5051
    %5148 = vst [vmem:[%s3 + $0x60] sm:$0xff] %v5068
    %5149 = vst [vmem:[%s3 + $0x68] sm:$0xff] %v5085
    %5150 = vst [vmem:[%s3 + $0x70] sm:$0xff] %v5102
    %5151 = vst [vmem:[%s3 + $0x78] sm:$0xff] %v5119
    // Predicated region
    $region26: #{decoder_forward.2} parent=1 // pred_check
      _
    $region27: #{decoder_forward.2} parent=1 // pred_check_branch
      %5153 = sbr.rel (0) target = $region29
    $region28: #{decoder_forward.2} parent=1 // pred_region
      _
    $region29: #{decoder_forward.2} parent=1 // pred_fallthru
      _
    // Predicated region
    $region30: #{decoder_forward.2} parent=1 // pred_check
      _
    $region31: #{decoder_forward.2} parent=1 // pred_check_branch
      %5155 = sbr.rel (0) target = $region33
    $region32: #{decoder_forward.2} parent=1 // pred_region
      _
    $region33: #{decoder_forward.2} parent=1 // pred_fallthru
      _
    %5156 = vsyncpa [#allocation3], 1
    %5157 = vsyncpa [#allocation5], 1

</llo_original>
